<compile_context>
chip_gen: v7x
topology: tpu7x:2x2x1
jax: 0.10.0
libtpu: 0.0.40
codegen_flags: <defaults>
</compile_context>

<pallas_src>
import functools
import math

import jax
import jax.numpy as jnp
from jax.experimental import pallas as pl
from jax.experimental.pallas import tpu as pltpu


def group_latent_kernel(theta_ref, x_ref, alg0_ref, algw_ref, out_ref, *,
                        num_generators, num_features, padded_width, order,
                        compute_dtype, precision):
    G, F, GFp = num_generators, num_features, padded_width
    GF = G * F

    x = x_ref[...].astype(jnp.float32)            # (TB, F)
    theta = theta_ref[...].astype(jnp.float32)    # (TB, G) compact
    alg0 = alg0_ref[...]                          # (F,   GFp) [A_0 | ... | A_{G-1} | 0]
    algw = algw_ref[...]                          # (GFp, GFp) block-row stack of alg0
    TB = x.shape[0]

    # Build the lane-dense theta weights ONCE (hoisted out of the order loop).
    # Column j*F + k holds theta[b, j]; pad lanes are zero.
    parts = [jnp.broadcast_to(theta[:, j:j + 1], (TB, F)) for j in range(G)]
    if GFp > GF:
        parts.append(jnp.zeros((TB, GFp - GF), jnp.float32))
    theta_w = jnp.concatenate(parts, axis=1)      # (TB, GFp)

    # Order 1: lift x into the wide generator domain.
    acts = jnp.dot(x.astype(compute_dtype), alg0,
                   preferred_element_type=jnp.float32,
                   precision=precision)           # (TB, GFp) f32
    w = theta_w * acts                            # 1/i == 1 for i=1
    r_wide = w

    # Orders 2..order: recursion stays in the wide domain (no per-order block reduce).
    for i in range(2, order + 1):
        acts = jnp.dot(w.astype(compute_dtype), algw,
                       preferred_element_type=jnp.float32,
                       precision=precision)       # (TB, GFp) f32
        w = theta_w * acts * (1.0 / float(i))     # two vmuls per order
        r_wide = r_wide + w

    # Single generator-block lane reduction after the loop.
    z = r_wide[:, 0:F]
    for j in range(1, G):
        z = z + r_wide[:, j * F:(j + 1) * F]
    out_ref[...] = (x + z).astype(out_ref.dtype)


def group_latent_forward(theta, x, algebras, order=10,
                         compute_dtype=jnp.bfloat16, block_rows=1024):
    """Pallas equivalent of GroupLatent.forward(theta, x, order).

    theta:    (G, B)     per-generator, per-example coefficients
    x:        (B, F)     latent feature vectors
    algebras: (G, F, F)  stacked generator matrices; action(t) = t @ algebras[j]
    """
    G, B = theta.shape
    Bx, F = x.shape
    assert Bx == B and algebras.shape == (G, F, F)
    assert order >= 1 and G >= 1
    assert block_rows % 8 == 0
    GF = G * F
    GFp = pl.cdiv(GF, 128) * 128                  # pad generator axis to 128-lane multiple

    x = x.astype(jnp.float32)
    theta_c = jnp.transpose(theta).astype(jnp.float32)          # (B, G) compact, no broadcast

    # alg0: generators concatenated along the lane axis, zero-padded to GFp columns.
    alg_cat = jnp.transpose(algebras.astype(jnp.float32), (1, 0, 2)).reshape(F, GF)
    alg0 = jnp.zeros((F, GFp), jnp.float32).at[:, :GF].set(alg_cat)
    # alg_big: block-row stack of alg_cat (rows j*F:(j+1)*F == alg_cat), zero pad rows/cols.
    algw = jnp.zeros((GFp, GFp), jnp.float32).at[:GF, :GF].set(jnp.tile(alg_cat, (G, 1)))
    alg0 = alg0.astype(compute_dtype)
    algw = algw.astype(compute_dtype)

    precision = (jax.lax.Precision.HIGHEST if compute_dtype == jnp.float32
                 else jax.lax.Precision.DEFAULT)

    # Batch tiling: single block for tiny B; otherwise tile with TB a multiple of 8,
    # capped at ~half the padded batch so v7x gets >= 2 parallel grid steps.
    if B <= 8:
        TB, B_pad = B, B
    else:
        B8 = pl.cdiv(B, 8) * 8
        half = max(8, (B8 // 2) // 8 * 8)
        TB = min(block_rows, half)
        B_pad = pl.cdiv(B8, TB) * TB
    if B_pad != B:
        pad = B_pad - B
        x = jnp.pad(x, ((0, pad), (0, 0)))
        theta_c = jnp.pad(theta_c, ((0, pad), (0, 0)))

    kernel = functools.partial(
        group_latent_kernel,
        num_generators=G, num_features=F, padded_width=GFp, order=order,
        compute_dtype=compute_dtype, precision=precision)

    out = pl.pallas_call(
        kernel,
        out_shape=jax.ShapeDtypeStruct((B_pad, F), jnp.float32),
        grid_spec=pltpu.PrefetchScalarGridSpec(
            num_scalar_prefetch=0,
            grid=(B_pad // TB,),
            in_specs=[
                pl.BlockSpec((TB, G),    lambda b: (b, 0)),   # theta (compact, batch-tiled)
                pl.BlockSpec((TB, F),    lambda b: (b, 0)),   # x     (batch-tiled)
                pl.BlockSpec((F, GFp),   lambda b: (0, 0)),   # alg0  (resident)
                pl.BlockSpec((GFp, GFp), lambda b: (0, 0)),   # alg_big (resident)
            ],
            out_specs=pl.BlockSpec((TB, F), lambda b: (b, 0)),
        ),
        compiler_params=pltpu.CompilerParams(
            dimension_semantics=("parallel",)),               # megacore-shards the batch
    )(theta_c, x, alg0, algw)
    return out[:B]


def init_algebras(key, num_generators, num_features):
    # kaiming_uniform_(a=sqrt(5)) on an (F, F) matrix:
    # bound = sqrt(6 / ((1 + a^2) * fan_in)) = 1 / sqrt(fan_in) = 1 / sqrt(F)
    bound = 1.0 / math.sqrt(num_features)
    return jax.random.uniform(
        key, (num_generators, num_features, num_features),
        dtype=jnp.float32, minval=-bound, maxval=bound)


def reference_forward(theta, x, algebras, order=10):
    # Pure-JAX mirror of the PyTorch forward for correctness checking.
    t = x
    result = x
    for i in range(1, order + 1):
        z = jnp.zeros_like(x)
        for j in range(theta.shape[0]):
            z = z + theta[j][:, None] / i * (t @ algebras[j])
        result = result + z
        t = z
    return result


if __name__ == "__main__":
    B = 8            # batch
    F = 32           # num_features
    G = 3            # num_generators
    ORDER = 10

    key = jax.random.PRNGKey(0)
    k_alg, k_x, k_theta = jax.random.split(key, 3)

    algebras = init_algebras(k_alg, G, F)                                # (G, F, F)
    x = jax.random.normal(k_x, (B, F), dtype=jnp.float32)                # (B, F)
    theta = 0.1 * jax.random.normal(k_theta, (G, B), dtype=jnp.float32)  # (G, B)

    ref = reference_forward(theta, x, algebras, order=ORDER)

    # Exact-semantics path: f32 MXU operands at HIGHEST precision.
    out_f32 = jax.block_until_ready(
        group_latent_forward(theta, x, algebras, order=ORDER, compute_dtype=jnp.float32))
    assert out_f32.shape == (B, F)
    err_f32 = float(jnp.max(jnp.abs(out_f32 - ref)))
    assert jnp.allclose(out_f32, ref, atol=1e-4, rtol=1e-4), err_f32

    # Fast path (default): bf16 MXU operands, f32 accumulation / elementwise state.
    # (For much larger ||theta.A|| keep the first 2-3 orders' dot operands in f32.)
    out_bf16 = jax.block_until_ready(
        group_latent_forward(theta, x, algebras, order=ORDER, compute_dtype=jnp.bfloat16))
    err_bf16 = float(jnp.max(jnp.abs(out_bf16 - ref)))
    assert jnp.allclose(out_bf16, ref, atol=1e-2, rtol=1e-2), err_bf16

    print("KERNEL_OK")
</pallas_src>

<mosaic_0001>
module attributes {stable_mosaic.version = 11 : i64} {
  func.func @group_latent_kernel(%arg0: i32, %arg1: memref<8x3xf32, #tpu.memory_space<vmem>>, %arg2: memref<8x32xf32, #tpu.memory_space<vmem>>, %arg3: memref<32x128xf32, #tpu.memory_space<vmem>>, %arg4: memref<128x128xf32, #tpu.memory_space<vmem>>, %arg5: memref<8x32xf32, #tpu.memory_space<vmem>>) attributes {dimension_semantics = [#tpu.dimension_semantics<parallel>], iteration_bounds = array<i64: 1>, scalar_prefetch = 0 : i64, scratch_operands = 0 : i64, tpu.core_type = #tpu.core_type<tc>, window_params = [{transform_indices = @transform_0, window_bounds = array<i64: 8, 3>}, {transform_indices = @transform_1, window_bounds = array<i64: 8, 32>}, {pipeline_mode = #tpu.pipeline_mode<synchronous>, transform_indices = @transform_2, window_bounds = array<i64: 32, 128>}, {pipeline_mode = #tpu.pipeline_mode<synchronous>, transform_indices = @transform_3, window_bounds = array<i64: 128, 128>}, {transform_indices = @transform_4, window_bounds = array<i64: 8, 32>}]} {
    %c0 = arith.constant 0 : index
    %c0_0 = arith.constant 0 : index
    %0 = vector.load %arg2[%c0, %c0_0] : memref<8x32xf32, #tpu.memory_space<vmem>>, vector<8x32xf32>
    %c0_1 = arith.constant 0 : index
    %c0_2 = arith.constant 0 : index
    %1 = vector.load %arg1[%c0_1, %c0_2] : memref<8x3xf32, #tpu.memory_space<vmem>>, vector<8x3xf32>
    %c0_3 = arith.constant 0 : index
    %c0_4 = arith.constant 0 : index
    %2 = vector.load %arg3[%c0_3, %c0_4] : memref<32x128xf32, #tpu.memory_space<vmem>>, vector<32x128xf32>
    %c0_5 = arith.constant 0 : index
    %c0_6 = arith.constant 0 : index
    %3 = vector.load %arg4[%c0_5, %c0_6] : memref<128x128xf32, #tpu.memory_space<vmem>>, vector<128x128xf32>
    %4 = vector.extract_strided_slice %1 {offsets = [0, 0], sizes = [8, 1], strides = [1, 1]} : vector<8x3xf32> to vector<8x1xf32>
    %5 = vector.shape_cast %4 : vector<8x1xf32> to vector<8x1xf32>
    %6 = vector.broadcast %5 : vector<8x1xf32> to vector<8x32xf32>
    %7 = vector.extract_strided_slice %1 {offsets = [0, 1], sizes = [8, 1], strides = [1, 1]} : vector<8x3xf32> to vector<8x1xf32>
    %8 = vector.shape_cast %7 : vector<8x1xf32> to vector<8x1xf32>
    %9 = vector.broadcast %8 : vector<8x1xf32> to vector<8x32xf32>
    %10 = vector.extract_strided_slice %1 {offsets = [0, 2], sizes = [8, 1], strides = [1, 1]} : vector<8x3xf32> to vector<8x1xf32>
    %11 = vector.shape_cast %10 : vector<8x1xf32> to vector<8x1xf32>
    %12 = vector.broadcast %11 : vector<8x1xf32> to vector<8x32xf32>
    %cst = arith.constant 0.000000e+00 : f32
    %13 = vector.broadcast %cst : f32 to vector<8x32xf32>
    %14 = tpu.concatenate %6, %9, %12, %13 in 1 : vector<8x32xf32>, vector<8x32xf32>, vector<8x32xf32>, vector<8x32xf32> -> vector<8x128xf32>
    %cst_7 = arith.constant dense<0.000000e+00> : vector<8x128xf32>
    %15 = tpu.matmul %0, %2, %cst_7 {dimension_numbers = #tpu.dot_dimension_numbers<[1], [0], [0], [1], [0, 0, 1, 1], [], []>, precision = #tpu.contract_precision<fp32>} : vector<8x32xf32>, vector<32x128xf32>, vector<8x128xf32> -> vector<8x128xf32>
    %16 = arith.mulf %14, %15 : vector<8x128xf32>
    %cst_8 = arith.constant dense<0.000000e+00> : vector<8x128xf32>
    %17 = tpu.matmul %16, %3, %cst_8 {dimension_numbers = #tpu.dot_dimension_numbers<[1], [0], [0], [1], [0, 0, 1, 1], [], []>, precision = #tpu.contract_precision<fp32>} : vector<8x128xf32>, vector<128x128xf32>, vector<8x128xf32> -> vector<8x128xf32>
    %18 = arith.mulf %14, %17 : vector<8x128xf32>
    %cst_9 = arith.constant 5.000000e-01 : f32
    %19 = vector.broadcast %cst_9 : f32 to vector<8x128xf32>
    %20 = arith.mulf %18, %19 : vector<8x128xf32>
    %21 = arith.addf %16, %20 : vector<8x128xf32>
    %cst_10 = arith.constant dense<0.000000e+00> : vector<8x128xf32>
    %22 = tpu.matmul %20, %3, %cst_10 {dimension_numbers = #tpu.dot_dimension_numbers<[1], [0], [0], [1], [0, 0, 1, 1], [], []>, precision = #tpu.contract_precision<fp32>} : vector<8x128xf32>, vector<128x128xf32>, vector<8x128xf32> -> vector<8x128xf32>
    %23 = arith.mulf %14, %22 : vector<8x128xf32>
    %cst_11 = arith.constant 0.333333343 : f32
    %24 = vector.broadcast %cst_11 : f32 to vector<8x128xf32>
    %25 = arith.mulf %23, %24 : vector<8x128xf32>
    %26 = arith.addf %21, %25 : vector<8x128xf32>
    %cst_12 = arith.constant dense<0.000000e+00> : vector<8x128xf32>
    %27 = tpu.matmul %25, %3, %cst_12 {dimension_numbers = #tpu.dot_dimension_numbers<[1], [0], [0], [1], [0, 0, 1, 1], [], []>, precision = #tpu.contract_precision<fp32>} : vector<8x128xf32>, vector<128x128xf32>, vector<8x128xf32> -> vector<8x128xf32>
    %28 = arith.mulf %14, %27 : vector<8x128xf32>
    %cst_13 = arith.constant 2.500000e-01 : f32
    %29 = vector.broadcast %cst_13 : f32 to vector<8x128xf32>
    %30 = arith.mulf %28, %29 : vector<8x128xf32>
    %31 = arith.addf %26, %30 : vector<8x128xf32>
    %cst_14 = arith.constant dense<0.000000e+00> : vector<8x128xf32>
    %32 = tpu.matmul %30, %3, %cst_14 {dimension_numbers = #tpu.dot_dimension_numbers<[1], [0], [0], [1], [0, 0, 1, 1], [], []>, precision = #tpu.contract_precision<fp32>} : vector<8x128xf32>, vector<128x128xf32>, vector<8x128xf32> -> vector<8x128xf32>
    %33 = arith.mulf %14, %32 : vector<8x128xf32>
    %cst_15 = arith.constant 2.000000e-01 : f32
    %34 = vector.broadcast %cst_15 : f32 to vector<8x128xf32>
    %35 = arith.mulf %33, %34 : vector<8x128xf32>
    %36 = arith.addf %31, %35 : vector<8x128xf32>
    %cst_16 = arith.constant dense<0.000000e+00> : vector<8x128xf32>
    %37 = tpu.matmul %35, %3, %cst_16 {dimension_numbers = #tpu.dot_dimension_numbers<[1], [0], [0], [1], [0, 0, 1, 1], [], []>, precision = #tpu.contract_precision<fp32>} : vector<8x128xf32>, vector<128x128xf32>, vector<8x128xf32> -> vector<8x128xf32>
    %38 = arith.mulf %14, %37 : vector<8x128xf32>
    %cst_17 = arith.constant 0.166666672 : f32
    %39 = vector.broadcast %cst_17 : f32 to vector<8x128xf32>
    %40 = arith.mulf %38, %39 : vector<8x128xf32>
    %41 = arith.addf %36, %40 : vector<8x128xf32>
    %cst_18 = arith.constant dense<0.000000e+00> : vector<8x128xf32>
    %42 = tpu.matmul %40, %3, %cst_18 {dimension_numbers = #tpu.dot_dimension_numbers<[1], [0], [0], [1], [0, 0, 1, 1], [], []>, precision = #tpu.contract_precision<fp32>} : vector<8x128xf32>, vector<128x128xf32>, vector<8x128xf32> -> vector<8x128xf32>
    %43 = arith.mulf %14, %42 : vector<8x128xf32>
    %cst_19 = arith.constant 0.142857149 : f32
    %44 = vector.broadcast %cst_19 : f32 to vector<8x128xf32>
    %45 = arith.mulf %43, %44 : vector<8x128xf32>
    %46 = arith.addf %41, %45 : vector<8x128xf32>
    %cst_20 = arith.constant dense<0.000000e+00> : vector<8x128xf32>
    %47 = tpu.matmul %45, %3, %cst_20 {dimension_numbers = #tpu.dot_dimension_numbers<[1], [0], [0], [1], [0, 0, 1, 1], [], []>, precision = #tpu.contract_precision<fp32>} : vector<8x128xf32>, vector<128x128xf32>, vector<8x128xf32> -> vector<8x128xf32>
    %48 = arith.mulf %14, %47 : vector<8x128xf32>
    %cst_21 = arith.constant 1.250000e-01 : f32
    %49 = vector.broadcast %cst_21 : f32 to vector<8x128xf32>
    %50 = arith.mulf %48, %49 : vector<8x128xf32>
    %51 = arith.addf %46, %50 : vector<8x128xf32>
    %cst_22 = arith.constant dense<0.000000e+00> : vector<8x128xf32>
    %52 = tpu.matmul %50, %3, %cst_22 {dimension_numbers = #tpu.dot_dimension_numbers<[1], [0], [0], [1], [0, 0, 1, 1], [], []>, precision = #tpu.contract_precision<fp32>} : vector<8x128xf32>, vector<128x128xf32>, vector<8x128xf32> -> vector<8x128xf32>
    %53 = arith.mulf %14, %52 : vector<8x128xf32>
    %cst_23 = arith.constant 0.111111112 : f32
    %54 = vector.broadcast %cst_23 : f32 to vector<8x128xf32>
    %55 = arith.mulf %53, %54 : vector<8x128xf32>
    %56 = arith.addf %51, %55 : vector<8x128xf32>
    %cst_24 = arith.constant dense<0.000000e+00> : vector<8x128xf32>
    %57 = tpu.matmul %55, %3, %cst_24 {dimension_numbers = #tpu.dot_dimension_numbers<[1], [0], [0], [1], [0, 0, 1, 1], [], []>, precision = #tpu.contract_precision<fp32>} : vector<8x128xf32>, vector<128x128xf32>, vector<8x128xf32> -> vector<8x128xf32>
    %58 = arith.mulf %14, %57 : vector<8x128xf32>
    %cst_25 = arith.constant 1.000000e-01 : f32
    %59 = vector.broadcast %cst_25 : f32 to vector<8x128xf32>
    %60 = arith.mulf %58, %59 : vector<8x128xf32>
    %61 = arith.addf %56, %60 : vector<8x128xf32>
    %62 = vector.extract_strided_slice %61 {offsets = [0, 0], sizes = [8, 32], strides = [1, 1]} : vector<8x128xf32> to vector<8x32xf32>
    %63 = vector.extract_strided_slice %61 {offsets = [0, 32], sizes = [8, 32], strides = [1, 1]} : vector<8x128xf32> to vector<8x32xf32>
    %64 = arith.addf %62, %63 : vector<8x32xf32>
    %65 = vector.extract_strided_slice %61 {offsets = [0, 64], sizes = [8, 32], strides = [1, 1]} : vector<8x128xf32> to vector<8x32xf32>
    %66 = arith.addf %64, %65 : vector<8x32xf32>
    %67 = arith.addf %0, %66 : vector<8x32xf32>
    %c0_26 = arith.constant 0 : index
    %c0_27 = arith.constant 0 : index
    %68 = vector.load %arg5[%c0_26, %c0_27] : memref<8x32xf32, #tpu.memory_space<vmem>>, vector<8x32xf32>
    tpu.vector_store %arg5[%c0_26, %c0_27], %67 {strides = array<i32>} : memref<8x32xf32, #tpu.memory_space<vmem>>, vector<8x32xf32>,
    return
  }
  func.func @transform_0(%arg0: i32) -> (i32, i32) {
    %c0_i32 = arith.constant 0 : i32
    %c0_i32_0 = arith.constant 0 : i32
    return %arg0, %c0_i32 : i32, i32
  }
  func.func @transform_1(%arg0: i32) -> (i32, i32) {
    %c0_i32 = arith.constant 0 : i32
    %c0_i32_0 = arith.constant 0 : i32
    return %arg0, %c0_i32 : i32, i32
  }
  func.func @transform_2(%arg0: i32) -> (i32, i32) {
    %c0_i32 = arith.constant 0 : i32
    %c0_i32_0 = arith.constant 0 : i32
    %c0_i32_1 = arith.constant 0 : i32
    return %c0_i32, %c0_i32_0 : i32, i32
  }
  func.func @transform_3(%arg0: i32) -> (i32, i32) {
    %c0_i32 = arith.constant 0 : i32
    %c0_i32_0 = arith.constant 0 : i32
    %c0_i32_1 = arith.constant 0 : i32
    return %c0_i32, %c0_i32_0 : i32, i32
  }
  func.func @transform_4(%arg0: i32) -> (i32, i32) {
    %c0_i32 = arith.constant 0 : i32
    %c0_i32_0 = arith.constant 0 : i32
    return %arg0, %c0_i32 : i32, i32
  }
}

</mosaic_0001>

<llo_original>
// kernel: tpu_custom_call.1
$region0: #{tpu_custom_call.1}
  #allocation0 [shape = 'u32[]', space=smem, size = 0x4, offset = 0x4, fixed_abs, tag = 'smem constant byte address 0x4 - core index']
  #allocation1 [shape = 'u32[144,128]{1,0:T(1,128)}', space=vmem, size = 0x12000, scoped, tag = 'internal scratch']
  %s0 = inlined_call_operand.vmem [shape: f32[8,3], index: 0, kind: input, shape index: {}]
  %s1 = inlined_call_operand.vmem [shape: f32[8,32], index: 1, kind: input, shape index: {}]
  %s2 = inlined_call_operand.hbm [shape: f32[32,128], index: 2, kind: input, shape index: {}]
  %s3 = inlined_call_operand.hbm [shape: f32[128,128], index: 3, kind: input, shape index: {}]
  %s4 = inlined_call_operand.hbm [shape: f32[8,32], index: 4, kind: output, shape index: {}]
  %s5 = sld [smem:[#allocation0]]
  $region34: #{tpu_custom_call.1} parent=0
    _
  %s7 = ssub.s32 1, %s5
  %s8 = scalar_select 0, %s7, %s5
  $region1: #{tpu_custom_call.1} parent=0
    #allocation2 [shape = 'u8[16384]{0}', space=vmem, size = 0x4000, scoped, tag = 'input window, operand 2, single buffered']
    #allocation3 [shape = 's32[1]{0}', space=sflag, size = 0x4, scoped, tag = 'scoped memory for tpu_custom_call.1']
    #allocation4 [shape = 's32[1]{0}', space=sflag, size = 0x4, scoped, tag = 'scoped memory for tpu_custom_call.1']
    #allocation5 [shape = 'u8[65536]{0}', space=vmem, size = 0x10000, scoped, tag = 'input window, operand 3, single buffered']
    #allocation6 [shape = 's32[1]{0}', space=sflag, size = 0x4, scoped, tag = 'scoped memory for tpu_custom_call.1']
    #allocation7 [shape = 'u8[4096]{0}', space=vmem, size = 0x1000, scoped, tag = 'output window, operand 0, single buffered']
    %9 = vsyncpa [#allocation3], 0
    %10 = vsyncpa [#allocation6], 0
    %11 = vsyncpa [#allocation4], 0
    // Predicated region
    $region2: #{tpu_custom_call.1} parent=1 // pred_check
      _
    $region3: #{tpu_custom_call.1} parent=1 // pred_check_branch
      %13 = sbr.rel (0) target = $region5
    $region4: #{tpu_custom_call.1} parent=1 // pred_region
      _
    $region5: #{tpu_custom_call.1} parent=1 // pred_fallthru
      _
    // Predicated region
    $region6: #{tpu_custom_call.1} parent=1 // pred_check
      _
    $region7: #{tpu_custom_call.1} parent=1 // pred_check_branch
      %15 = sbr.rel (0) target = $region9
    $region8: #{tpu_custom_call.1} parent=1 // pred_region
      _
    $region9: #{tpu_custom_call.1} parent=1 // pred_fallthru
      _
    // Predicated region
    $region10: #{tpu_custom_call.1} parent=1 // pred_check
      _
    $region11: #{tpu_custom_call.1} parent=1 // pred_check_branch
      %17 = sbr.rel (0) target = $region13
    $region12: #{tpu_custom_call.1} parent=1 // pred_region
      %s19 = ssub.s32 512, 512
      %20 = vsyncadd [#allocation3], %s19
      %s21 = sshll.u32 [#allocation2], 4
      %s22 = int_to_ptr.vmem [resolvable:$true] %s21
      %27 = dma.hbm_to_vmem [thread:$0]  %s2, 512, %s22, [#allocation3], 128, 128, 8
    $region13: #{tpu_custom_call.1} parent=1 // pred_fallthru
      _
    // Predicated region
    $region14: #{tpu_custom_call.1} parent=1 // pred_check
      _
    $region15: #{tpu_custom_call.1} parent=1 // pred_check_branch
      %29 = sbr.rel (0) target = $region17
    $region16: #{tpu_custom_call.1} parent=1 // pred_region
      %s31 = ssub.s32 2048, 2048
      %32 = vsyncadd [#allocation6], %s31
      %s33 = sshll.u32 [#allocation5], 4
      %s34 = int_to_ptr.vmem [resolvable:$true] %s33
      %39 = dma.hbm_to_vmem [thread:$0]  %s3, 2048, %s34, [#allocation6], 128, 128, 8
    $region17: #{tpu_custom_call.1} parent=1 // pred_fallthru
      _
    // Predicated region
    $region18: #{tpu_custom_call.1} parent=1 // pred_check
      _
    $region19: #{tpu_custom_call.1} parent=1 // pred_check_branch
      %41 = sbr.rel (0) target = $region21
    $region20: #{tpu_custom_call.1} parent=1 // pred_region
      %42 = dma.done [#allocation3], 512
    $region21: #{tpu_custom_call.1} parent=1 // pred_fallthru
      _
    // Predicated region
    $region22: #{tpu_custom_call.1} parent=1 // pred_check
      _
    $region23: #{tpu_custom_call.1} parent=1 // pred_check_branch
      %44 = sbr.rel (0) target = $region25
    $region24: #{tpu_custom_call.1} parent=1 // pred_region
      %45 = dma.done [#allocation6], 2048
    $region25: #{tpu_custom_call.1} parent=1 // pred_fallthru
      _
    %v46 = vld [vmem:[%s1] sm:$0xff]
    %v47 = vld [vmem:[%s0] sm:$0xff]
    %v48 = vld [vmem:[#allocation2] sm:$0xff]
    %v49 = vld [vmem:[#allocation2 + $0x8] sm:$0xff]
    %v50 = vld [vmem:[#allocation2 + $0x10] sm:$0xff]
    %v51 = vld [vmem:[#allocation2 + $0x18] sm:$0xff]
    %v52 = vld [vmem:[#allocation5] sm:$0xff]
    %v53 = vld [vmem:[#allocation5 + $0x8] sm:$0xff]
    %v54 = vld [vmem:[#allocation5 + $0x10] sm:$0xff]
    %v55 = vld [vmem:[#allocation5 + $0x18] sm:$0xff]
    %v56 = vld [vmem:[#allocation5 + $0x20] sm:$0xff]
    %v57 = vld [vmem:[#allocation5 + $0x28] sm:$0xff]
    %v58 = vld [vmem:[#allocation5 + $0x30] sm:$0xff]
    %v59 = vld [vmem:[#allocation5 + $0x38] sm:$0xff]
    %v60 = vld [vmem:[#allocation5 + $0x40] sm:$0xff]
    %v61 = vld [vmem:[#allocation5 + $0x48] sm:$0xff]
    %v62 = vld [vmem:[#allocation5 + $0x50] sm:$0xff]
    %v63 = vld [vmem:[#allocation5 + $0x58] sm:$0xff]
    %v64 = vld [vmem:[#allocation5 + $0x60] sm:$0xff]
    %v65 = vld [vmem:[#allocation5 + $0x68] sm:$0xff]
    %v66 = vld [vmem:[#allocation5 + $0x70] sm:$0xff]
    %v67 = vld [vmem:[#allocation5 + $0x78] sm:$0xff]
    %69 = vset.pattern.permute.xlu0 0
    %70 = vperm.xlu0 %69, %v47
    %v71 = vpop.permute.xlu0 %70
    %73 = vset.pattern.permute.xlu0 1
    %74 = vperm.xlu0 %73, %v47
    %v75 = vpop.permute.xlu0 %74
    %77 = vset.pattern.permute.xlu0 2
    %78 = vperm.xlu0 %77, %v47
    %v79 = vpop.permute.xlu0 %78
    %vm81 = vcmask 261120
    %v82 = vsel %vm81, %v71, %v75
    %vm83 = vcmask 523264
    %v84 = vsel %vm83, %v82, %v79
    %vm85 = vcmask 785408
    %v86 = vsel %vm85, %v84, 0.0
    %v88 = vsel %vm81, %v46, 0
    %90 = vmatprep.subr.mxu0 0.0
    %v91 = vand.u32 %v48, 4294901760
    %92 = vmatpush1.msra.mxu0 %v91
    %93 = vmatprep.subr.mxu0 0.0
    %v94 = vand.u32 %v49, 4294901760
    %95 = vmatpush1.msra.mxu0 %v94
    %96 = vmatprep.subr.mxu0 0.0
    %v97 = vand.u32 %v50, 4294901760
    %98 = vmatpush1.msra.mxu0 %v97
    %99 = vmatprep.subr.mxu0 0.0
    %v100 = vand.u32 %v51, 4294901760
    %101 = vmatpush1.msra.mxu0 %v100
    %102 = vmatprep.subr.mxu0 0.0
    %103 = vmatpush1.msra.mxu0 0.0
    %104 = vmatprep.subr.mxu0 0.0
    %105 = vmatpush1.msra.mxu0 0.0
    %106 = vmatprep.subr.mxu0 0.0
    %107 = vmatpush1.msra.mxu0 0.0
    %108 = vmatprep.subr.mxu0 0.0
    %109 = vmatpush1.msra.mxu0 0.0
    %110 = vmatprep.subr.mxu0 0.0
    %111 = vmatpush1.msra.mxu0 0.0
    %112 = vmatprep.subr.mxu0 0.0
    %113 = vmatpush1.msra.mxu0 0.0
    %114 = vmatprep.subr.mxu0 0.0
    %115 = vmatpush1.msra.mxu0 0.0
    %116 = vmatprep.subr.mxu0 0.0
    %117 = vmatpush1.msra.mxu0 0.0
    %118 = vmatprep.subr.mxu0 0.0
    %119 = vmatpush1.msra.mxu0 0.0
    %120 = vmatprep.subr.mxu0 0.0
    %121 = vmatpush1.msra.mxu0 0.0
    %122 = vmatprep.subr.mxu0 0.0
    %123 = vmatpush1.msra.mxu0 0.0
    %124 = vmatprep.subr.mxu0 0.0
    %125 = vmatpush1.msra.mxu0 0.0
    %126 = vmatprep.subr.mxu0 0.0
    %127 = vmatpush1.msra.mxu0 0.0
    %128 = vmatprep.subr.mxu0 0.0
    %129 = vmatpush1.msra.mxu0 0.0
    %130 = vmatprep.subr.mxu0 0.0
    %131 = vmatpush1.msra.mxu0 0.0
    %132 = vmatprep.subr.mxu0 0.0
    %133 = vmatpush1.msra.mxu0 0.0
    %134 = vmatprep.subr.mxu0 0.0
    %135 = vmatpush1.msra.mxu0 0.0
    %136 = vmatprep.subr.mxu0 0.0
    %137 = vmatpush1.msra.mxu0 0.0
    %138 = vmatprep.subr.mxu0 0.0
    %139 = vmatpush1.msra.mxu0 0.0
    %140 = vmatprep.subr.mxu0 0.0
    %141 = vmatpush1.msra.mxu0 0.0
    %142 = vmatprep.subr.mxu0 0.0
    %143 = vmatpush1.msra.mxu0 0.0
    %144 = vmatprep.subr.mxu0 0.0
    %145 = vmatpush1.msra.mxu0 0.0
    %146 = vmatprep.subr.mxu0 0.0
    %147 = vmatpush1.msra.mxu0 0.0
    %148 = vmatprep.subr.mxu0 0.0
    %149 = vmatpush1.msra.mxu0 0.0
    %150 = vmatprep.subr.mxu0 0.0
    %151 = vmatpush1.msra.mxu0 0.0
    %152 = vmatprep.subr.mxu0 0.0
    %153 = vmatpush1.msra.mxu0 0.0
    %154 = vmatprep.subr.mxu0 0.0
    %155 = vmatpush1.msra.mxu0 0.0
    %156 = vmatprep.subr.mxu0 0.0
    %157 = vmatpush1.msra.mxu0 0.0
    %158 = vmatprep.mubr.f32.mxu0 0.0
    %v159 = vand.u32 %v88, 4294901760
    %v160 = vsub.f32 %v88, %v159
    %v161 = vand.u32 %v160, 4294901760
    %v162 = vsub.f32 %v160, %v161
    %v163 = vand.u32 %v162, 4294901760
    %164 = vmatmul.mubr.f32.gmra.mrb[0].mxu0 %v163
    %v165 = vpop.f32.mrb[0].mxu0
    %v166 = vadd.f32 0.0, %v165
    %v167 = vpop.f32.mrb[0].mxu0
    %168 = vdwg.mxu0
    %169 = vmatprep.subr.mxu0 0.0
    %v170 = vand.u32 %v48, 4294901760
    %v171 = vsub.f32 %v48, %v170
    %v172 = vand.u32 %v171, 4294901760
    %v173 = vsub.f32 %v171, %v172
    %v174 = vand.u32 %v173, 4294901760
    %175 = vmatpush1.msra.mxu0 %v174
    %176 = vmatprep.subr.mxu0 0.0
    %v177 = vand.u32 %v49, 4294901760
    %v178 = vsub.f32 %v49, %v177
    %v179 = vand.u32 %v178, 4294901760
    %v180 = vsub.f32 %v178, %v179
    %v181 = vand.u32 %v180, 4294901760
    %182 = vmatpush1.msra.mxu0 %v181
    %183 = vmatprep.subr.mxu0 0.0
    %v184 = vand.u32 %v50, 4294901760
    %v185 = vsub.f32 %v50, %v184
    %v186 = vand.u32 %v185, 4294901760
    %v187 = vsub.f32 %v185, %v186
    %v188 = vand.u32 %v187, 4294901760
    %189 = vmatpush1.msra.mxu0 %v188
    %190 = vmatprep.subr.mxu0 0.0
    %v191 = vand.u32 %v51, 4294901760
    %v192 = vsub.f32 %v51, %v191
    %v193 = vand.u32 %v192, 4294901760
    %v194 = vsub.f32 %v192, %v193
    %v195 = vand.u32 %v194, 4294901760
    %196 = vmatpush1.msra.mxu0 %v195
    %197 = vmatprep.subr.mxu0 0.0
    %198 = vmatpush1.msra.mxu0 0.0
    %199 = vmatprep.subr.mxu0 0.0
    %200 = vmatpush1.msra.mxu0 0.0
    %201 = vmatprep.subr.mxu0 0.0
    %202 = vmatpush1.msra.mxu0 0.0
    %203 = vmatprep.subr.mxu0 0.0
    %204 = vmatpush1.msra.mxu0 0.0
    %205 = vmatprep.subr.mxu0 0.0
    %206 = vmatpush1.msra.mxu0 0.0
    %207 = vmatprep.subr.mxu0 0.0
    %208 = vmatpush1.msra.mxu0 0.0
    %209 = vmatprep.subr.mxu0 0.0
    %210 = vmatpush1.msra.mxu0 0.0
    %211 = vmatprep.subr.mxu0 0.0
    %212 = vmatpush1.msra.mxu0 0.0
    %213 = vmatprep.subr.mxu0 0.0
    %214 = vmatpush1.msra.mxu0 0.0
    %215 = vmatprep.subr.mxu0 0.0
    %216 = vmatpush1.msra.mxu0 0.0
    %217 = vmatprep.subr.mxu0 0.0
    %218 = vmatpush1.msra.mxu0 0.0
    %219 = vmatprep.subr.mxu0 0.0
    %220 = vmatpush1.msra.mxu0 0.0
    %221 = vmatprep.subr.mxu0 0.0
    %222 = vmatpush1.msra.mxu0 0.0
    %223 = vmatprep.subr.mxu0 0.0
    %224 = vmatpush1.msra.mxu0 0.0
    %225 = vmatprep.subr.mxu0 0.0
    %226 = vmatpush1.msra.mxu0 0.0
    %227 = vmatprep.subr.mxu0 0.0
    %228 = vmatpush1.msra.mxu0 0.0
    %229 = vmatprep.subr.mxu0 0.0
    %230 = vmatpush1.msra.mxu0 0.0
    %231 = vmatprep.subr.mxu0 0.0
    %232 = vmatpush1.msra.mxu0 0.0
    %233 = vmatprep.subr.mxu0 0.0
    %234 = vmatpush1.msra.mxu0 0.0
    %235 = vmatprep.subr.mxu0 0.0
    %236 = vmatpush1.msra.mxu0 0.0
    %237 = vmatprep.subr.mxu0 0.0
    %238 = vmatpush1.msra.mxu0 0.0
    %239 = vmatprep.subr.mxu0 0.0
    %240 = vmatpush1.msra.mxu0 0.0
    %241 = vmatprep.subr.mxu0 0.0
    %242 = vmatpush1.msra.mxu0 0.0
    %243 = vmatprep.subr.mxu0 0.0
    %244 = vmatpush1.msra.mxu0 0.0
    %245 = vmatprep.subr.mxu0 0.0
    %246 = vmatpush1.msra.mxu0 0.0
    %247 = vmatprep.subr.mxu0 0.0
    %248 = vmatpush1.msra.mxu0 0.0
    %249 = vmatprep.subr.mxu0 0.0
    %250 = vmatpush1.msra.mxu0 0.0
    %251 = vmatprep.subr.mxu0 0.0
    %252 = vmatpush1.msra.mxu0 0.0
    %253 = vmatprep.mubr.f32.mxu0 0.0
    %v254 = vand.u32 %v88, 4294901760
    %255 = vmatmul.mubr.f32.gmra.mrb[0].mxu0 %v254
    %v256 = vpop.f32.mrb[0].mxu0
    %v257 = vadd.f32 %v166, %v256
    %v258 = vpop.f32.mrb[0].mxu0
    %259 = vdwg.mxu0
    %260 = vmatprep.subr.mxu0 0.0
    %v261 = vand.u32 %v48, 4294901760
    %v262 = vsub.f32 %v48, %v261
    %263 = vmatpush1.msra.mxu0 %v262
    %264 = vmatprep.subr.mxu0 0.0
    %v265 = vand.u32 %v49, 4294901760
    %v266 = vsub.f32 %v49, %v265
    %267 = vmatpush1.msra.mxu0 %v266
    %268 = vmatprep.subr.mxu0 0.0
    %v269 = vand.u32 %v50, 4294901760
    %v270 = vsub.f32 %v50, %v269
    %271 = vmatpush1.msra.mxu0 %v270
    %272 = vmatprep.subr.mxu0 0.0
    %v273 = vand.u32 %v51, 4294901760
    %v274 = vsub.f32 %v51, %v273
    %275 = vmatpush1.msra.mxu0 %v274
    %276 = vmatprep.subr.mxu0 0.0
    %277 = vmatpush1.msra.mxu0 0.0
    %278 = vmatprep.subr.mxu0 0.0
    %279 = vmatpush1.msra.mxu0 0.0
    %280 = vmatprep.subr.mxu0 0.0
    %281 = vmatpush1.msra.mxu0 0.0
    %282 = vmatprep.subr.mxu0 0.0
    %283 = vmatpush1.msra.mxu0 0.0
    %284 = vmatprep.subr.mxu0 0.0
    %285 = vmatpush1.msra.mxu0 0.0
    %286 = vmatprep.subr.mxu0 0.0
    %287 = vmatpush1.msra.mxu0 0.0
    %288 = vmatprep.subr.mxu0 0.0
    %289 = vmatpush1.msra.mxu0 0.0
    %290 = vmatprep.subr.mxu0 0.0
    %291 = vmatpush1.msra.mxu0 0.0
    %292 = vmatprep.subr.mxu0 0.0
    %293 = vmatpush1.msra.mxu0 0.0
    %294 = vmatprep.subr.mxu0 0.0
    %295 = vmatpush1.msra.mxu0 0.0
    %296 = vmatprep.subr.mxu0 0.0
    %297 = vmatpush1.msra.mxu0 0.0
    %298 = vmatprep.subr.mxu0 0.0
    %299 = vmatpush1.msra.mxu0 0.0
    %300 = vmatprep.subr.mxu0 0.0
    %301 = vmatpush1.msra.mxu0 0.0
    %302 = vmatprep.subr.mxu0 0.0
    %303 = vmatpush1.msra.mxu0 0.0
    %304 = vmatprep.subr.mxu0 0.0
    %305 = vmatpush1.msra.mxu0 0.0
    %306 = vmatprep.subr.mxu0 0.0
    %307 = vmatpush1.msra.mxu0 0.0
    %308 = vmatprep.subr.mxu0 0.0
    %309 = vmatpush1.msra.mxu0 0.0
    %310 = vmatprep.subr.mxu0 0.0
    %311 = vmatpush1.msra.mxu0 0.0
    %312 = vmatprep.subr.mxu0 0.0
    %313 = vmatpush1.msra.mxu0 0.0
    %314 = vmatprep.subr.mxu0 0.0
    %315 = vmatpush1.msra.mxu0 0.0
    %316 = vmatprep.subr.mxu0 0.0
    %317 = vmatpush1.msra.mxu0 0.0
    %318 = vmatprep.subr.mxu0 0.0
    %319 = vmatpush1.msra.mxu0 0.0
    %320 = vmatprep.subr.mxu0 0.0
    %321 = vmatpush1.msra.mxu0 0.0
    %322 = vmatprep.subr.mxu0 0.0
    %323 = vmatpush1.msra.mxu0 0.0
    %324 = vmatprep.subr.mxu0 0.0
    %325 = vmatpush1.msra.mxu0 0.0
    %326 = vmatprep.subr.mxu0 0.0
    %327 = vmatpush1.msra.mxu0 0.0
    %328 = vmatprep.subr.mxu0 0.0
    %329 = vmatpush1.msra.mxu0 0.0
    %330 = vmatprep.subr.mxu0 0.0
    %331 = vmatpush1.msra.mxu0 0.0
    %332 = vmatprep.mubr.f32.mxu0 0.0
    %v333 = vand.u32 %v88, 4294901760
    %v334 = vsub.f32 %v88, %v333
    %335 = vmatmul.mubr.f32.gmra.mrb[0].mxu0 %v334
    %v336 = vpop.f32.mrb[0].mxu0
    %v337 = vadd.f32 %v257, %v336
    %v338 = vpop.f32.mrb[0].mxu0
    %339 = vdwg.mxu0
    %340 = vmatprep.subr.mxu0 0.0
    %v341 = vand.u32 %v48, 4294901760
    %342 = vmatpush1.msra.mxu0 %v341
    %343 = vmatprep.subr.mxu0 0.0
    %v344 = vand.u32 %v49, 4294901760
    %345 = vmatpush1.msra.mxu0 %v344
    %346 = vmatprep.subr.mxu0 0.0
    %v347 = vand.u32 %v50, 4294901760
    %348 = vmatpush1.msra.mxu0 %v347
    %349 = vmatprep.subr.mxu0 0.0
    %v350 = vand.u32 %v51, 4294901760
    %351 = vmatpush1.msra.mxu0 %v350
    %352 = vmatprep.subr.mxu0 0.0
    %353 = vmatpush1.msra.mxu0 0.0
    %354 = vmatprep.subr.mxu0 0.0
    %355 = vmatpush1.msra.mxu0 0.0
    %356 = vmatprep.subr.mxu0 0.0
    %357 = vmatpush1.msra.mxu0 0.0
    %358 = vmatprep.subr.mxu0 0.0
    %359 = vmatpush1.msra.mxu0 0.0
    %360 = vmatprep.subr.mxu0 0.0
    %361 = vmatpush1.msra.mxu0 0.0
    %362 = vmatprep.subr.mxu0 0.0
    %363 = vmatpush1.msra.mxu0 0.0
    %364 = vmatprep.subr.mxu0 0.0
    %365 = vmatpush1.msra.mxu0 0.0
    %366 = vmatprep.subr.mxu0 0.0
    %367 = vmatpush1.msra.mxu0 0.0
    %368 = vmatprep.subr.mxu0 0.0
    %369 = vmatpush1.msra.mxu0 0.0
    %370 = vmatprep.subr.mxu0 0.0
    %371 = vmatpush1.msra.mxu0 0.0
    %372 = vmatprep.subr.mxu0 0.0
    %373 = vmatpush1.msra.mxu0 0.0
    %374 = vmatprep.subr.mxu0 0.0
    %375 = vmatpush1.msra.mxu0 0.0
    %376 = vmatprep.subr.mxu0 0.0
    %377 = vmatpush1.msra.mxu0 0.0
    %378 = vmatprep.subr.mxu0 0.0
    %379 = vmatpush1.msra.mxu0 0.0
    %380 = vmatprep.subr.mxu0 0.0
    %381 = vmatpush1.msra.mxu0 0.0
    %382 = vmatprep.subr.mxu0 0.0
    %383 = vmatpush1.msra.mxu0 0.0
    %384 = vmatprep.subr.mxu0 0.0
    %385 = vmatpush1.msra.mxu0 0.0
    %386 = vmatprep.subr.mxu0 0.0
    %387 = vmatpush1.msra.mxu0 0.0
    %388 = vmatprep.subr.mxu0 0.0
    %389 = vmatpush1.msra.mxu0 0.0
    %390 = vmatprep.subr.mxu0 0.0
    %391 = vmatpush1.msra.mxu0 0.0
    %392 = vmatprep.subr.mxu0 0.0
    %393 = vmatpush1.msra.mxu0 0.0
    %394 = vmatprep.subr.mxu0 0.0
    %395 = vmatpush1.msra.mxu0 0.0
    %396 = vmatprep.subr.mxu0 0.0
    %397 = vmatpush1.msra.mxu0 0.0
    %398 = vmatprep.subr.mxu0 0.0
    %399 = vmatpush1.msra.mxu0 0.0
    %400 = vmatprep.subr.mxu0 0.0
    %401 = vmatpush1.msra.mxu0 0.0
    %402 = vmatprep.subr.mxu0 0.0
    %403 = vmatpush1.msra.mxu0 0.0
    %404 = vmatprep.subr.mxu0 0.0
    %405 = vmatpush1.msra.mxu0 0.0
    %406 = vmatprep.subr.mxu0 0.0
    %407 = vmatpush1.msra.mxu0 0.0
    %408 = vmatprep.mubr.f32.mxu0 0.0
    %v409 = vand.u32 %v88, 4294901760
    %v410 = vsub.f32 %v88, %v409
    %v411 = vand.u32 %v410, 4294901760
    %412 = vmatmul.mubr.f32.gmra.mrb[0].mxu0 %v411
    %v413 = vpop.f32.mrb[0].mxu0
    %v414 = vadd.f32 %v337, %v413
    %v415 = vpop.f32.mrb[0].mxu0
    %416 = vdwg.mxu0
    %417 = vmatprep.subr.mxu0 0.0
    %v418 = vand.u32 %v48, 4294901760
    %v419 = vsub.f32 %v48, %v418
    %v420 = vand.u32 %v419, 4294901760
    %421 = vmatpush1.msra.mxu0 %v420
    %422 = vmatprep.subr.mxu0 0.0
    %v423 = vand.u32 %v49, 4294901760
    %v424 = vsub.f32 %v49, %v423
    %v425 = vand.u32 %v424, 4294901760
    %426 = vmatpush1.msra.mxu0 %v425
    %427 = vmatprep.subr.mxu0 0.0
    %v428 = vand.u32 %v50, 4294901760
    %v429 = vsub.f32 %v50, %v428
    %v430 = vand.u32 %v429, 4294901760
    %431 = vmatpush1.msra.mxu0 %v430
    %432 = vmatprep.subr.mxu0 0.0
    %v433 = vand.u32 %v51, 4294901760
    %v434 = vsub.f32 %v51, %v433
    %v435 = vand.u32 %v434, 4294901760
    %436 = vmatpush1.msra.mxu0 %v435
    %437 = vmatprep.subr.mxu0 0.0
    %438 = vmatpush1.msra.mxu0 0.0
    %439 = vmatprep.subr.mxu0 0.0
    %440 = vmatpush1.msra.mxu0 0.0
    %441 = vmatprep.subr.mxu0 0.0
    %442 = vmatpush1.msra.mxu0 0.0
    %443 = vmatprep.subr.mxu0 0.0
    %444 = vmatpush1.msra.mxu0 0.0
    %445 = vmatprep.subr.mxu0 0.0
    %446 = vmatpush1.msra.mxu0 0.0
    %447 = vmatprep.subr.mxu0 0.0
    %448 = vmatpush1.msra.mxu0 0.0
    %449 = vmatprep.subr.mxu0 0.0
    %450 = vmatpush1.msra.mxu0 0.0
    %451 = vmatprep.subr.mxu0 0.0
    %452 = vmatpush1.msra.mxu0 0.0
    %453 = vmatprep.subr.mxu0 0.0
    %454 = vmatpush1.msra.mxu0 0.0
    %455 = vmatprep.subr.mxu0 0.0
    %456 = vmatpush1.msra.mxu0 0.0
    %457 = vmatprep.subr.mxu0 0.0
    %458 = vmatpush1.msra.mxu0 0.0
    %459 = vmatprep.subr.mxu0 0.0
    %460 = vmatpush1.msra.mxu0 0.0
    %461 = vmatprep.subr.mxu0 0.0
    %462 = vmatpush1.msra.mxu0 0.0
    %463 = vmatprep.subr.mxu0 0.0
    %464 = vmatpush1.msra.mxu0 0.0
    %465 = vmatprep.subr.mxu0 0.0
    %466 = vmatpush1.msra.mxu0 0.0
    %467 = vmatprep.subr.mxu0 0.0
    %468 = vmatpush1.msra.mxu0 0.0
    %469 = vmatprep.subr.mxu0 0.0
    %470 = vmatpush1.msra.mxu0 0.0
    %471 = vmatprep.subr.mxu0 0.0
    %472 = vmatpush1.msra.mxu0 0.0
    %473 = vmatprep.subr.mxu0 0.0
    %474 = vmatpush1.msra.mxu0 0.0
    %475 = vmatprep.subr.mxu0 0.0
    %476 = vmatpush1.msra.mxu0 0.0
    %477 = vmatprep.subr.mxu0 0.0
    %478 = vmatpush1.msra.mxu0 0.0
    %479 = vmatprep.subr.mxu0 0.0
    %480 = vmatpush1.msra.mxu0 0.0
    %481 = vmatprep.subr.mxu0 0.0
    %482 = vmatpush1.msra.mxu0 0.0
    %483 = vmatprep.subr.mxu0 0.0
    %484 = vmatpush1.msra.mxu0 0.0
    %485 = vmatprep.subr.mxu0 0.0
    %486 = vmatpush1.msra.mxu0 0.0
    %487 = vmatprep.subr.mxu0 0.0
    %488 = vmatpush1.msra.mxu0 0.0
    %489 = vmatprep.subr.mxu0 0.0
    %490 = vmatpush1.msra.mxu0 0.0
    %491 = vmatprep.subr.mxu0 0.0
    %492 = vmatpush1.msra.mxu0 0.0
    %493 = vmatprep.mubr.f32.mxu0 0.0
    %v494 = vand.u32 %v88, 4294901760
    %495 = vmatmul.mubr.f32.gmra.mrb[0].mxu0 %v494
    %v496 = vpop.f32.mrb[0].mxu0
    %v497 = vadd.f32 %v414, %v496
    %v498 = vpop.f32.mrb[0].mxu0
    %499 = vdwg.mxu0
    %500 = vmatprep.subr.mxu0 0.0
    %v501 = vand.u32 %v48, 4294901760
    %502 = vmatpush1.msra.mxu0 %v501
    %503 = vmatprep.subr.mxu0 0.0
    %v504 = vand.u32 %v49, 4294901760
    %505 = vmatpush1.msra.mxu0 %v504
    %506 = vmatprep.subr.mxu0 0.0
    %v507 = vand.u32 %v50, 4294901760
    %508 = vmatpush1.msra.mxu0 %v507
    %509 = vmatprep.subr.mxu0 0.0
    %v510 = vand.u32 %v51, 4294901760
    %511 = vmatpush1.msra.mxu0 %v510
    %512 = vmatprep.subr.mxu0 0.0
    %513 = vmatpush1.msra.mxu0 0.0
    %514 = vmatprep.subr.mxu0 0.0
    %515 = vmatpush1.msra.mxu0 0.0
    %516 = vmatprep.subr.mxu0 0.0
    %517 = vmatpush1.msra.mxu0 0.0
    %518 = vmatprep.subr.mxu0 0.0
    %519 = vmatpush1.msra.mxu0 0.0
    %520 = vmatprep.subr.mxu0 0.0
    %521 = vmatpush1.msra.mxu0 0.0
    %522 = vmatprep.subr.mxu0 0.0
    %523 = vmatpush1.msra.mxu0 0.0
    %524 = vmatprep.subr.mxu0 0.0
    %525 = vmatpush1.msra.mxu0 0.0
    %526 = vmatprep.subr.mxu0 0.0
    %527 = vmatpush1.msra.mxu0 0.0
    %528 = vmatprep.subr.mxu0 0.0
    %529 = vmatpush1.msra.mxu0 0.0
    %530 = vmatprep.subr.mxu0 0.0
    %531 = vmatpush1.msra.mxu0 0.0
    %532 = vmatprep.subr.mxu0 0.0
    %533 = vmatpush1.msra.mxu0 0.0
    %534 = vmatprep.subr.mxu0 0.0
    %535 = vmatpush1.msra.mxu0 0.0
    %536 = vmatprep.subr.mxu0 0.0
    %537 = vmatpush1.msra.mxu0 0.0
    %538 = vmatprep.subr.mxu0 0.0
    %539 = vmatpush1.msra.mxu0 0.0
    %540 = vmatprep.subr.mxu0 0.0
    %541 = vmatpush1.msra.mxu0 0.0
    %542 = vmatprep.subr.mxu0 0.0
    %543 = vmatpush1.msra.mxu0 0.0
    %544 = vmatprep.subr.mxu0 0.0
    %545 = vmatpush1.msra.mxu0 0.0
    %546 = vmatprep.subr.mxu0 0.0
    %547 = vmatpush1.msra.mxu0 0.0
    %548 = vmatprep.subr.mxu0 0.0
    %549 = vmatpush1.msra.mxu0 0.0
    %550 = vmatprep.subr.mxu0 0.0
    %551 = vmatpush1.msra.mxu0 0.0
    %552 = vmatprep.subr.mxu0 0.0
    %553 = vmatpush1.msra.mxu0 0.0
    %554 = vmatprep.subr.mxu0 0.0
    %555 = vmatpush1.msra.mxu0 0.0
    %556 = vmatprep.subr.mxu0 0.0
    %557 = vmatpush1.msra.mxu0 0.0
    %558 = vmatprep.subr.mxu0 0.0
    %559 = vmatpush1.msra.mxu0 0.0
    %560 = vmatprep.subr.mxu0 0.0
    %561 = vmatpush1.msra.mxu0 0.0
    %562 = vmatprep.subr.mxu0 0.0
    %563 = vmatpush1.msra.mxu0 0.0
    %564 = vmatprep.subr.mxu0 0.0
    %565 = vmatpush1.msra.mxu0 0.0
    %566 = vmatprep.subr.mxu0 0.0
    %567 = vmatpush1.msra.mxu0 0.0
    %568 = vmatprep.mubr.f32.mxu0 0.0
    %v569 = vand.u32 %v88, 4294901760
    %570 = vmatmul.mubr.f32.gmra.mrb[0].mxu0 %v569
    %v571 = vpop.f32.mrb[0].mxu0
    %v572 = vadd.f32 %v497, %v571
    %v573 = vpop.f32.mrb[0].mxu0
    %574 = vdwg.mxu0
    %v575 = vmul.f32 %v86, %v572
    %576 = vmatprep.subr.mxu0 0.0
    %v577 = vand.u32 %v52, 4294901760
    %578 = vmatpush1.msra.mxu0 %v577
    %579 = vmatprep.subr.mxu0 0.0
    %v580 = vand.u32 %v53, 4294901760
    %581 = vmatpush1.msra.mxu0 %v580
    %582 = vmatprep.subr.mxu0 0.0
    %v583 = vand.u32 %v54, 4294901760
    %584 = vmatpush1.msra.mxu0 %v583
    %585 = vmatprep.subr.mxu0 0.0
    %v586 = vand.u32 %v55, 4294901760
    %587 = vmatpush1.msra.mxu0 %v586
    %588 = vmatprep.subr.mxu0 0.0
    %v589 = vand.u32 %v56, 4294901760
    %590 = vmatpush1.msra.mxu0 %v589
    %591 = vmatprep.subr.mxu0 0.0
    %v592 = vand.u32 %v57, 4294901760
    %593 = vmatpush1.msra.mxu0 %v592
    %594 = vmatprep.subr.mxu0 0.0
    %v595 = vand.u32 %v58, 4294901760
    %596 = vmatpush1.msra.mxu0 %v595
    %597 = vmatprep.subr.mxu0 0.0
    %v598 = vand.u32 %v59, 4294901760
    %599 = vmatpush1.msra.mxu0 %v598
    %600 = vmatprep.subr.mxu0 0.0
    %v601 = vand.u32 %v60, 4294901760
    %602 = vmatpush1.msra.mxu0 %v601
    %603 = vmatprep.subr.mxu0 0.0
    %v604 = vand.u32 %v61, 4294901760
    %605 = vmatpush1.msra.mxu0 %v604
    %606 = vmatprep.subr.mxu0 0.0
    %v607 = vand.u32 %v62, 4294901760
    %608 = vmatpush1.msra.mxu0 %v607
    %609 = vmatprep.subr.mxu0 0.0
    %v610 = vand.u32 %v63, 4294901760
    %611 = vmatpush1.msra.mxu0 %v610
    %612 = vmatprep.subr.mxu0 0.0
    %v613 = vand.u32 %v64, 4294901760
    %614 = vmatpush1.msra.mxu0 %v613
    %615 = vmatprep.subr.mxu0 0.0
    %v616 = vand.u32 %v65, 4294901760
    %617 = vmatpush1.msra.mxu0 %v616
    %618 = vmatprep.subr.mxu0 0.0
    %v619 = vand.u32 %v66, 4294901760
    %620 = vmatpush1.msra.mxu0 %v619
    %621 = vmatprep.subr.mxu0 0.0
    %v622 = vand.u32 %v67, 4294901760
    %623 = vmatpush1.msra.mxu0 %v622
    %624 = vmatprep.subr.mxu0 0.0
    %625 = vmatpush1.msra.mxu0 0.0
    %626 = vmatprep.subr.mxu0 0.0
    %627 = vmatpush1.msra.mxu0 0.0
    %628 = vmatprep.subr.mxu0 0.0
    %629 = vmatpush1.msra.mxu0 0.0
    %630 = vmatprep.subr.mxu0 0.0
    %631 = vmatpush1.msra.mxu0 0.0
    %632 = vmatprep.subr.mxu0 0.0
    %633 = vmatpush1.msra.mxu0 0.0
    %634 = vmatprep.subr.mxu0 0.0
    %635 = vmatpush1.msra.mxu0 0.0
    %636 = vmatprep.subr.mxu0 0.0
    %637 = vmatpush1.msra.mxu0 0.0
    %638 = vmatprep.subr.mxu0 0.0
    %639 = vmatpush1.msra.mxu0 0.0
    %640 = vmatprep.subr.mxu0 0.0
    %641 = vmatpush1.msra.mxu0 0.0
    %642 = vmatprep.subr.mxu0 0.0
    %643 = vmatpush1.msra.mxu0 0.0
    %644 = vmatprep.subr.mxu0 0.0
    %645 = vmatpush1.msra.mxu0 0.0
    %646 = vmatprep.subr.mxu0 0.0
    %647 = vmatpush1.msra.mxu0 0.0
    %648 = vmatprep.subr.mxu0 0.0
    %649 = vmatpush1.msra.mxu0 0.0
    %650 = vmatprep.subr.mxu0 0.0
    %651 = vmatpush1.msra.mxu0 0.0
    %652 = vmatprep.subr.mxu0 0.0
    %653 = vmatpush1.msra.mxu0 0.0
    %654 = vmatprep.subr.mxu0 0.0
    %655 = vmatpush1.msra.mxu0 0.0
    %656 = vmatprep.mubr.f32.mxu0 0.0
    %v657 = vand.u32 %v575, 4294901760
    %v658 = vsub.f32 %v575, %v657
    %v659 = vand.u32 %v658, 4294901760
    %v660 = vsub.f32 %v658, %v659
    %v661 = vand.u32 %v660, 4294901760
    %662 = vmatmul.mubr.f32.gmra.mrb[0].mxu0 %v661
    %v663 = vpop.f32.mrb[0].mxu0
    %v664 = vadd.f32 0.0, %v663
    %v665 = vpop.f32.mrb[0].mxu0
    %666 = vdwg.mxu0
    %667 = vmatprep.subr.mxu0 0.0
    %v668 = vand.u32 %v52, 4294901760
    %v669 = vsub.f32 %v52, %v668
    %v670 = vand.u32 %v669, 4294901760
    %v671 = vsub.f32 %v669, %v670
    %v672 = vand.u32 %v671, 4294901760
    %673 = vmatpush1.msra.mxu0 %v672
    %674 = vmatprep.subr.mxu0 0.0
    %v675 = vand.u32 %v53, 4294901760
    %v676 = vsub.f32 %v53, %v675
    %v677 = vand.u32 %v676, 4294901760
    %v678 = vsub.f32 %v676, %v677
    %v679 = vand.u32 %v678, 4294901760
    %680 = vmatpush1.msra.mxu0 %v679
    %681 = vmatprep.subr.mxu0 0.0
    %v682 = vand.u32 %v54, 4294901760
    %v683 = vsub.f32 %v54, %v682
    %v684 = vand.u32 %v683, 4294901760
    %v685 = vsub.f32 %v683, %v684
    %v686 = vand.u32 %v685, 4294901760
    %687 = vmatpush1.msra.mxu0 %v686
    %688 = vmatprep.subr.mxu0 0.0
    %v689 = vand.u32 %v55, 4294901760
    %v690 = vsub.f32 %v55, %v689
    %v691 = vand.u32 %v690, 4294901760
    %v692 = vsub.f32 %v690, %v691
    %v693 = vand.u32 %v692, 4294901760
    %694 = vmatpush1.msra.mxu0 %v693
    %695 = vmatprep.subr.mxu0 0.0
    %v696 = vand.u32 %v56, 4294901760
    %v697 = vsub.f32 %v56, %v696
    %v698 = vand.u32 %v697, 4294901760
    %v699 = vsub.f32 %v697, %v698
    %v700 = vand.u32 %v699, 4294901760
    %701 = vmatpush1.msra.mxu0 %v700
    %702 = vmatprep.subr.mxu0 0.0
    %v703 = vand.u32 %v57, 4294901760
    %v704 = vsub.f32 %v57, %v703
    %v705 = vand.u32 %v704, 4294901760
    %v706 = vsub.f32 %v704, %v705
    %v707 = vand.u32 %v706, 4294901760
    %708 = vmatpush1.msra.mxu0 %v707
    %709 = vmatprep.subr.mxu0 0.0
    %v710 = vand.u32 %v58, 4294901760
    %v711 = vsub.f32 %v58, %v710
    %v712 = vand.u32 %v711, 4294901760
    %v713 = vsub.f32 %v711, %v712
    %v714 = vand.u32 %v713, 4294901760
    %715 = vmatpush1.msra.mxu0 %v714
    %716 = vmatprep.subr.mxu0 0.0
    %v717 = vand.u32 %v59, 4294901760
    %v718 = vsub.f32 %v59, %v717
    %v719 = vand.u32 %v718, 4294901760
    %v720 = vsub.f32 %v718, %v719
    %v721 = vand.u32 %v720, 4294901760
    %722 = vmatpush1.msra.mxu0 %v721
    %723 = vmatprep.subr.mxu0 0.0
    %v724 = vand.u32 %v60, 4294901760
    %v725 = vsub.f32 %v60, %v724
    %v726 = vand.u32 %v725, 4294901760
    %v727 = vsub.f32 %v725, %v726
    %v728 = vand.u32 %v727, 4294901760
    %729 = vmatpush1.msra.mxu0 %v728
    %730 = vmatprep.subr.mxu0 0.0
    %v731 = vand.u32 %v61, 4294901760
    %v732 = vsub.f32 %v61, %v731
    %v733 = vand.u32 %v732, 4294901760
    %v734 = vsub.f32 %v732, %v733
    %v735 = vand.u32 %v734, 4294901760
    %736 = vmatpush1.msra.mxu0 %v735
    %737 = vmatprep.subr.mxu0 0.0
    %v738 = vand.u32 %v62, 4294901760
    %v739 = vsub.f32 %v62, %v738
    %v740 = vand.u32 %v739, 4294901760
    %v741 = vsub.f32 %v739, %v740
    %v742 = vand.u32 %v741, 4294901760
    %743 = vmatpush1.msra.mxu0 %v742
    %744 = vmatprep.subr.mxu0 0.0
    %v745 = vand.u32 %v63, 4294901760
    %v746 = vsub.f32 %v63, %v745
    %v747 = vand.u32 %v746, 4294901760
    %v748 = vsub.f32 %v746, %v747
    %v749 = vand.u32 %v748, 4294901760
    %750 = vmatpush1.msra.mxu0 %v749
    %751 = vmatprep.subr.mxu0 0.0
    %v752 = vand.u32 %v64, 4294901760
    %v753 = vsub.f32 %v64, %v752
    %v754 = vand.u32 %v753, 4294901760
    %v755 = vsub.f32 %v753, %v754
    %v756 = vand.u32 %v755, 4294901760
    %757 = vmatpush1.msra.mxu0 %v756
    %758 = vmatprep.subr.mxu0 0.0
    %v759 = vand.u32 %v65, 4294901760
    %v760 = vsub.f32 %v65, %v759
    %v761 = vand.u32 %v760, 4294901760
    %v762 = vsub.f32 %v760, %v761
    %v763 = vand.u32 %v762, 4294901760
    %764 = vmatpush1.msra.mxu0 %v763
    %765 = vmatprep.subr.mxu0 0.0
    %v766 = vand.u32 %v66, 4294901760
    %v767 = vsub.f32 %v66, %v766
    %v768 = vand.u32 %v767, 4294901760
    %v769 = vsub.f32 %v767, %v768
    %v770 = vand.u32 %v769, 4294901760
    %771 = vmatpush1.msra.mxu0 %v770
    %772 = vmatprep.subr.mxu0 0.0
    %v773 = vand.u32 %v67, 4294901760
    %v774 = vsub.f32 %v67, %v773
    %v775 = vand.u32 %v774, 4294901760
    %v776 = vsub.f32 %v774, %v775
    %v777 = vand.u32 %v776, 4294901760
    %778 = vmatpush1.msra.mxu0 %v777
    %779 = vmatprep.subr.mxu0 0.0
    %780 = vmatpush1.msra.mxu0 0.0
    %781 = vmatprep.subr.mxu0 0.0
    %782 = vmatpush1.msra.mxu0 0.0
    %783 = vmatprep.subr.mxu0 0.0
    %784 = vmatpush1.msra.mxu0 0.0
    %785 = vmatprep.subr.mxu0 0.0
    %786 = vmatpush1.msra.mxu0 0.0
    %787 = vmatprep.subr.mxu0 0.0
    %788 = vmatpush1.msra.mxu0 0.0
    %789 = vmatprep.subr.mxu0 0.0
    %790 = vmatpush1.msra.mxu0 0.0
    %791 = vmatprep.subr.mxu0 0.0
    %792 = vmatpush1.msra.mxu0 0.0
    %793 = vmatprep.subr.mxu0 0.0
    %794 = vmatpush1.msra.mxu0 0.0
    %795 = vmatprep.subr.mxu0 0.0
    %796 = vmatpush1.msra.mxu0 0.0
    %797 = vmatprep.subr.mxu0 0.0
    %798 = vmatpush1.msra.mxu0 0.0
    %799 = vmatprep.subr.mxu0 0.0
    %800 = vmatpush1.msra.mxu0 0.0
    %801 = vmatprep.subr.mxu0 0.0
    %802 = vmatpush1.msra.mxu0 0.0
    %803 = vmatprep.subr.mxu0 0.0
    %804 = vmatpush1.msra.mxu0 0.0
    %805 = vmatprep.subr.mxu0 0.0
    %806 = vmatpush1.msra.mxu0 0.0
    %807 = vmatprep.subr.mxu0 0.0
    %808 = vmatpush1.msra.mxu0 0.0
    %809 = vmatprep.subr.mxu0 0.0
    %810 = vmatpush1.msra.mxu0 0.0
    %811 = vmatprep.mubr.f32.mxu0 0.0
    %v812 = vand.u32 %v575, 4294901760
    %813 = vmatmul.mubr.f32.gmra.mrb[0].mxu0 %v812
    %v814 = vpop.f32.mrb[0].mxu0
    %v815 = vadd.f32 %v664, %v814
    %v816 = vpop.f32.mrb[0].mxu0
    %817 = vdwg.mxu0
    %818 = vmatprep.subr.mxu0 0.0
    %v819 = vand.u32 %v52, 4294901760
    %v820 = vsub.f32 %v52, %v819
    %821 = vmatpush1.msra.mxu0 %v820
    %822 = vmatprep.subr.mxu0 0.0
    %v823 = vand.u32 %v53, 4294901760
    %v824 = vsub.f32 %v53, %v823
    %825 = vmatpush1.msra.mxu0 %v824
    %826 = vmatprep.subr.mxu0 0.0
    %v827 = vand.u32 %v54, 4294901760
    %v828 = vsub.f32 %v54, %v827
    %829 = vmatpush1.msra.mxu0 %v828
    %830 = vmatprep.subr.mxu0 0.0
    %v831 = vand.u32 %v55, 4294901760
    %v832 = vsub.f32 %v55, %v831
    %833 = vmatpush1.msra.mxu0 %v832
    %834 = vmatprep.subr.mxu0 0.0
    %v835 = vand.u32 %v56, 4294901760
    %v836 = vsub.f32 %v56, %v835
    %837 = vmatpush1.msra.mxu0 %v836
    %838 = vmatprep.subr.mxu0 0.0
    %v839 = vand.u32 %v57, 4294901760
    %v840 = vsub.f32 %v57, %v839
    %841 = vmatpush1.msra.mxu0 %v840
    %842 = vmatprep.subr.mxu0 0.0
    %v843 = vand.u32 %v58, 4294901760
    %v844 = vsub.f32 %v58, %v843
    %845 = vmatpush1.msra.mxu0 %v844
    %846 = vmatprep.subr.mxu0 0.0
    %v847 = vand.u32 %v59, 4294901760
    %v848 = vsub.f32 %v59, %v847
    %849 = vmatpush1.msra.mxu0 %v848
    %850 = vmatprep.subr.mxu0 0.0
    %v851 = vand.u32 %v60, 4294901760
    %v852 = vsub.f32 %v60, %v851
    %853 = vmatpush1.msra.mxu0 %v852
    %854 = vmatprep.subr.mxu0 0.0
    %v855 = vand.u32 %v61, 4294901760
    %v856 = vsub.f32 %v61, %v855
    %857 = vmatpush1.msra.mxu0 %v856
    %858 = vmatprep.subr.mxu0 0.0
    %v859 = vand.u32 %v62, 4294901760
    %v860 = vsub.f32 %v62, %v859
    %861 = vmatpush1.msra.mxu0 %v860
    %862 = vmatprep.subr.mxu0 0.0
    %v863 = vand.u32 %v63, 4294901760
    %v864 = vsub.f32 %v63, %v863
    %865 = vmatpush1.msra.mxu0 %v864
    %866 = vmatprep.subr.mxu0 0.0
    %v867 = vand.u32 %v64, 4294901760
    %v868 = vsub.f32 %v64, %v867
    %869 = vmatpush1.msra.mxu0 %v868
    %870 = vmatprep.subr.mxu0 0.0
    %v871 = vand.u32 %v65, 4294901760
    %v872 = vsub.f32 %v65, %v871
    %873 = vmatpush1.msra.mxu0 %v872
    %874 = vmatprep.subr.mxu0 0.0
    %v875 = vand.u32 %v66, 4294901760
    %v876 = vsub.f32 %v66, %v875
    %877 = vmatpush1.msra.mxu0 %v876
    %878 = vmatprep.subr.mxu0 0.0
    %v879 = vand.u32 %v67, 4294901760
    %v880 = vsub.f32 %v67, %v879
    %881 = vmatpush1.msra.mxu0 %v880
    %882 = vmatprep.subr.mxu0 0.0
    %883 = vmatpush1.msra.mxu0 0.0
    %884 = vmatprep.subr.mxu0 0.0
    %885 = vmatpush1.msra.mxu0 0.0
    %886 = vmatprep.subr.mxu0 0.0
    %887 = vmatpush1.msra.mxu0 0.0
    %888 = vmatprep.subr.mxu0 0.0
    %889 = vmatpush1.msra.mxu0 0.0
    %890 = vmatprep.subr.mxu0 0.0
    %891 = vmatpush1.msra.mxu0 0.0
    %892 = vmatprep.subr.mxu0 0.0
    %893 = vmatpush1.msra.mxu0 0.0
    %894 = vmatprep.subr.mxu0 0.0
    %895 = vmatpush1.msra.mxu0 0.0
    %896 = vmatprep.subr.mxu0 0.0
    %897 = vmatpush1.msra.mxu0 0.0
    %898 = vmatprep.subr.mxu0 0.0
    %899 = vmatpush1.msra.mxu0 0.0
    %900 = vmatprep.subr.mxu0 0.0
    %901 = vmatpush1.msra.mxu0 0.0
    %902 = vmatprep.subr.mxu0 0.0
    %903 = vmatpush1.msra.mxu0 0.0
    %904 = vmatprep.subr.mxu0 0.0
    %905 = vmatpush1.msra.mxu0 0.0
    %906 = vmatprep.subr.mxu0 0.0
    %907 = vmatpush1.msra.mxu0 0.0
    %908 = vmatprep.subr.mxu0 0.0
    %909 = vmatpush1.msra.mxu0 0.0
    %910 = vmatprep.subr.mxu0 0.0
    %911 = vmatpush1.msra.mxu0 0.0
    %912 = vmatprep.subr.mxu0 0.0
    %913 = vmatpush1.msra.mxu0 0.0
    %914 = vmatprep.mubr.f32.mxu0 0.0
    %v915 = vand.u32 %v575, 4294901760
    %v916 = vsub.f32 %v575, %v915
    %917 = vmatmul.mubr.f32.gmra.mrb[0].mxu0 %v916
    %v918 = vpop.f32.mrb[0].mxu0
    %v919 = vadd.f32 %v815, %v918
    %v920 = vpop.f32.mrb[0].mxu0
    %921 = vdwg.mxu0
    %922 = vmatprep.subr.mxu0 0.0
    %v923 = vand.u32 %v52, 4294901760
    %924 = vmatpush1.msra.mxu0 %v923
    %925 = vmatprep.subr.mxu0 0.0
    %v926 = vand.u32 %v53, 4294901760
    %927 = vmatpush1.msra.mxu0 %v926
    %928 = vmatprep.subr.mxu0 0.0
    %v929 = vand.u32 %v54, 4294901760
    %930 = vmatpush1.msra.mxu0 %v929
    %931 = vmatprep.subr.mxu0 0.0
    %v932 = vand.u32 %v55, 4294901760
    %933 = vmatpush1.msra.mxu0 %v932
    %934 = vmatprep.subr.mxu0 0.0
    %v935 = vand.u32 %v56, 4294901760
    %936 = vmatpush1.msra.mxu0 %v935
    %937 = vmatprep.subr.mxu0 0.0
    %v938 = vand.u32 %v57, 4294901760
    %939 = vmatpush1.msra.mxu0 %v938
    %940 = vmatprep.subr.mxu0 0.0
    %v941 = vand.u32 %v58, 4294901760
    %942 = vmatpush1.msra.mxu0 %v941
    %943 = vmatprep.subr.mxu0 0.0
    %v944 = vand.u32 %v59, 4294901760
    %945 = vmatpush1.msra.mxu0 %v944
    %946 = vmatprep.subr.mxu0 0.0
    %v947 = vand.u32 %v60, 4294901760
    %948 = vmatpush1.msra.mxu0 %v947
    %949 = vmatprep.subr.mxu0 0.0
    %v950 = vand.u32 %v61, 4294901760
    %951 = vmatpush1.msra.mxu0 %v950
    %952 = vmatprep.subr.mxu0 0.0
    %v953 = vand.u32 %v62, 4294901760
    %954 = vmatpush1.msra.mxu0 %v953
    %955 = vmatprep.subr.mxu0 0.0
    %v956 = vand.u32 %v63, 4294901760
    %957 = vmatpush1.msra.mxu0 %v956
    %958 = vmatprep.subr.mxu0 0.0
    %v959 = vand.u32 %v64, 4294901760
    %960 = vmatpush1.msra.mxu0 %v959
    %961 = vmatprep.subr.mxu0 0.0
    %v962 = vand.u32 %v65, 4294901760
    %963 = vmatpush1.msra.mxu0 %v962
    %964 = vmatprep.subr.mxu0 0.0
    %v965 = vand.u32 %v66, 4294901760
    %966 = vmatpush1.msra.mxu0 %v965
    %967 = vmatprep.subr.mxu0 0.0
    %v968 = vand.u32 %v67, 4294901760
    %969 = vmatpush1.msra.mxu0 %v968
    %970 = vmatprep.subr.mxu0 0.0
    %971 = vmatpush1.msra.mxu0 0.0
    %972 = vmatprep.subr.mxu0 0.0
    %973 = vmatpush1.msra.mxu0 0.0
    %974 = vmatprep.subr.mxu0 0.0
    %975 = vmatpush1.msra.mxu0 0.0
    %976 = vmatprep.subr.mxu0 0.0
    %977 = vmatpush1.msra.mxu0 0.0
    %978 = vmatprep.subr.mxu0 0.0
    %979 = vmatpush1.msra.mxu0 0.0
    %980 = vmatprep.subr.mxu0 0.0
    %981 = vmatpush1.msra.mxu0 0.0
    %982 = vmatprep.subr.mxu0 0.0
    %983 = vmatpush1.msra.mxu0 0.0
    %984 = vmatprep.subr.mxu0 0.0
    %985 = vmatpush1.msra.mxu0 0.0
    %986 = vmatprep.subr.mxu0 0.0
    %987 = vmatpush1.msra.mxu0 0.0
    %988 = vmatprep.subr.mxu0 0.0
    %989 = vmatpush1.msra.mxu0 0.0
    %990 = vmatprep.subr.mxu0 0.0
    %991 = vmatpush1.msra.mxu0 0.0
    %992 = vmatprep.subr.mxu0 0.0
    %993 = vmatpush1.msra.mxu0 0.0
    %994 = vmatprep.subr.mxu0 0.0
    %995 = vmatpush1.msra.mxu0 0.0
    %996 = vmatprep.subr.mxu0 0.0
    %997 = vmatpush1.msra.mxu0 0.0
    %998 = vmatprep.subr.mxu0 0.0
    %999 = vmatpush1.msra.mxu0 0.0
    %1000 = vmatprep.subr.mxu0 0.0
    %1001 = vmatpush1.msra.mxu0 0.0
    %1002 = vmatprep.mubr.f32.mxu0 0.0
    %v1003 = vand.u32 %v575, 4294901760
    %v1004 = vsub.f32 %v575, %v1003
    %v1005 = vand.u32 %v1004, 4294901760
    %1006 = vmatmul.mubr.f32.gmra.mrb[0].mxu0 %v1005
    %v1007 = vpop.f32.mrb[0].mxu0
    %v1008 = vadd.f32 %v919, %v1007
    %v1009 = vpop.f32.mrb[0].mxu0
    %1010 = vdwg.mxu0
    %1011 = vmatprep.subr.mxu0 0.0
    %v1012 = vand.u32 %v52, 4294901760
    %v1013 = vsub.f32 %v52, %v1012
    %v1014 = vand.u32 %v1013, 4294901760
    %1015 = vmatpush1.msra.mxu0 %v1014
    %1016 = vmatprep.subr.mxu0 0.0
    %v1017 = vand.u32 %v53, 4294901760
    %v1018 = vsub.f32 %v53, %v1017
    %v1019 = vand.u32 %v1018, 4294901760
    %1020 = vmatpush1.msra.mxu0 %v1019
    %1021 = vmatprep.subr.mxu0 0.0
    %v1022 = vand.u32 %v54, 4294901760
    %v1023 = vsub.f32 %v54, %v1022
    %v1024 = vand.u32 %v1023, 4294901760
    %1025 = vmatpush1.msra.mxu0 %v1024
    %1026 = vmatprep.subr.mxu0 0.0
    %v1027 = vand.u32 %v55, 4294901760
    %v1028 = vsub.f32 %v55, %v1027
    %v1029 = vand.u32 %v1028, 4294901760
    %1030 = vmatpush1.msra.mxu0 %v1029
    %1031 = vmatprep.subr.mxu0 0.0
    %v1032 = vand.u32 %v56, 4294901760
    %v1033 = vsub.f32 %v56, %v1032
    %v1034 = vand.u32 %v1033, 4294901760
    %1035 = vmatpush1.msra.mxu0 %v1034
    %1036 = vmatprep.subr.mxu0 0.0
    %v1037 = vand.u32 %v57, 4294901760
    %v1038 = vsub.f32 %v57, %v1037
    %v1039 = vand.u32 %v1038, 4294901760
    %1040 = vmatpush1.msra.mxu0 %v1039
    %1041 = vmatprep.subr.mxu0 0.0
    %v1042 = vand.u32 %v58, 4294901760
    %v1043 = vsub.f32 %v58, %v1042
    %v1044 = vand.u32 %v1043, 4294901760
    %1045 = vmatpush1.msra.mxu0 %v1044
    %1046 = vmatprep.subr.mxu0 0.0
    %v1047 = vand.u32 %v59, 4294901760
    %v1048 = vsub.f32 %v59, %v1047
    %v1049 = vand.u32 %v1048, 4294901760
    %1050 = vmatpush1.msra.mxu0 %v1049
    %1051 = vmatprep.subr.mxu0 0.0
    %v1052 = vand.u32 %v60, 4294901760
    %v1053 = vsub.f32 %v60, %v1052
    %v1054 = vand.u32 %v1053, 4294901760
    %1055 = vmatpush1.msra.mxu0 %v1054
    %1056 = vmatprep.subr.mxu0 0.0
    %v1057 = vand.u32 %v61, 4294901760
    %v1058 = vsub.f32 %v61, %v1057
    %v1059 = vand.u32 %v1058, 4294901760
    %1060 = vmatpush1.msra.mxu0 %v1059
    %1061 = vmatprep.subr.mxu0 0.0
    %v1062 = vand.u32 %v62, 4294901760
    %v1063 = vsub.f32 %v62, %v1062
    %v1064 = vand.u32 %v1063, 4294901760
    %1065 = vmatpush1.msra.mxu0 %v1064
    %1066 = vmatprep.subr.mxu0 0.0
    %v1067 = vand.u32 %v63, 4294901760
    %v1068 = vsub.f32 %v63, %v1067
    %v1069 = vand.u32 %v1068, 4294901760
    %1070 = vmatpush1.msra.mxu0 %v1069
    %1071 = vmatprep.subr.mxu0 0.0
    %v1072 = vand.u32 %v64, 4294901760
    %v1073 = vsub.f32 %v64, %v1072
    %v1074 = vand.u32 %v1073, 4294901760
    %1075 = vmatpush1.msra.mxu0 %v1074
    %1076 = vmatprep.subr.mxu0 0.0
    %v1077 = vand.u32 %v65, 4294901760
    %v1078 = vsub.f32 %v65, %v1077
    %v1079 = vand.u32 %v1078, 4294901760
    %1080 = vmatpush1.msra.mxu0 %v1079
    %1081 = vmatprep.subr.mxu0 0.0
    %v1082 = vand.u32 %v66, 4294901760
    %v1083 = vsub.f32 %v66, %v1082
    %v1084 = vand.u32 %v1083, 4294901760
    %1085 = vmatpush1.msra.mxu0 %v1084
    %1086 = vmatprep.subr.mxu0 0.0
    %v1087 = vand.u32 %v67, 4294901760
    %v1088 = vsub.f32 %v67, %v1087
    %v1089 = vand.u32 %v1088, 4294901760
    %1090 = vmatpush1.msra.mxu0 %v1089
    %1091 = vmatprep.subr.mxu0 0.0
    %1092 = vmatpush1.msra.mxu0 0.0
    %1093 = vmatprep.subr.mxu0 0.0
    %1094 = vmatpush1.msra.mxu0 0.0
    %1095 = vmatprep.subr.mxu0 0.0
    %1096 = vmatpush1.msra.mxu0 0.0
    %1097 = vmatprep.subr.mxu0 0.0
    %1098 = vmatpush1.msra.mxu0 0.0
    %1099 = vmatprep.subr.mxu0 0.0
    %1100 = vmatpush1.msra.mxu0 0.0
    %1101 = vmatprep.subr.mxu0 0.0
    %1102 = vmatpush1.msra.mxu0 0.0
    %1103 = vmatprep.subr.mxu0 0.0
    %1104 = vmatpush1.msra.mxu0 0.0
    %1105 = vmatprep.subr.mxu0 0.0
    %1106 = vmatpush1.msra.mxu0 0.0
    %1107 = vmatprep.subr.mxu0 0.0
    %1108 = vmatpush1.msra.mxu0 0.0
    %1109 = vmatprep.subr.mxu0 0.0
    %1110 = vmatpush1.msra.mxu0 0.0
    %1111 = vmatprep.subr.mxu0 0.0
    %1112 = vmatpush1.msra.mxu0 0.0
    %1113 = vmatprep.subr.mxu0 0.0
    %1114 = vmatpush1.msra.mxu0 0.0
    %1115 = vmatprep.subr.mxu0 0.0
    %1116 = vmatpush1.msra.mxu0 0.0
    %1117 = vmatprep.subr.mxu0 0.0
    %1118 = vmatpush1.msra.mxu0 0.0
    %1119 = vmatprep.subr.mxu0 0.0
    %1120 = vmatpush1.msra.mxu0 0.0
    %1121 = vmatprep.subr.mxu0 0.0
    %1122 = vmatpush1.msra.mxu0 0.0
    %1123 = vmatprep.mubr.f32.mxu0 0.0
    %v1124 = vand.u32 %v575, 4294901760
    %1125 = vmatmul.mubr.f32.gmra.mrb[0].mxu0 %v1124
    %v1126 = vpop.f32.mrb[0].mxu0
    %v1127 = vadd.f32 %v1008, %v1126
    %v1128 = vpop.f32.mrb[0].mxu0
    %1129 = vdwg.mxu0
    %1130 = vmatprep.subr.mxu0 0.0
    %v1131 = vand.u32 %v52, 4294901760
    %1132 = vmatpush1.msra.mxu0 %v1131
    %1133 = vmatprep.subr.mxu0 0.0
    %v1134 = vand.u32 %v53, 4294901760
    %1135 = vmatpush1.msra.mxu0 %v1134
    %1136 = vmatprep.subr.mxu0 0.0
    %v1137 = vand.u32 %v54, 4294901760
    %1138 = vmatpush1.msra.mxu0 %v1137
    %1139 = vmatprep.subr.mxu0 0.0
    %v1140 = vand.u32 %v55, 4294901760
    %1141 = vmatpush1.msra.mxu0 %v1140
    %1142 = vmatprep.subr.mxu0 0.0
    %v1143 = vand.u32 %v56, 4294901760
    %1144 = vmatpush1.msra.mxu0 %v1143
    %1145 = vmatprep.subr.mxu0 0.0
    %v1146 = vand.u32 %v57, 4294901760
    %1147 = vmatpush1.msra.mxu0 %v1146
    %1148 = vmatprep.subr.mxu0 0.0
    %v1149 = vand.u32 %v58, 4294901760
    %1150 = vmatpush1.msra.mxu0 %v1149
    %1151 = vmatprep.subr.mxu0 0.0
    %v1152 = vand.u32 %v59, 4294901760
    %1153 = vmatpush1.msra.mxu0 %v1152
    %1154 = vmatprep.subr.mxu0 0.0
    %v1155 = vand.u32 %v60, 4294901760
    %1156 = vmatpush1.msra.mxu0 %v1155
    %1157 = vmatprep.subr.mxu0 0.0
    %v1158 = vand.u32 %v61, 4294901760
    %1159 = vmatpush1.msra.mxu0 %v1158
    %1160 = vmatprep.subr.mxu0 0.0
    %v1161 = vand.u32 %v62, 4294901760
    %1162 = vmatpush1.msra.mxu0 %v1161
    %1163 = vmatprep.subr.mxu0 0.0
    %v1164 = vand.u32 %v63, 4294901760
    %1165 = vmatpush1.msra.mxu0 %v1164
    %1166 = vmatprep.subr.mxu0 0.0
    %v1167 = vand.u32 %v64, 4294901760
    %1168 = vmatpush1.msra.mxu0 %v1167
    %1169 = vmatprep.subr.mxu0 0.0
    %v1170 = vand.u32 %v65, 4294901760
    %1171 = vmatpush1.msra.mxu0 %v1170
    %1172 = vmatprep.subr.mxu0 0.0
    %v1173 = vand.u32 %v66, 4294901760
    %1174 = vmatpush1.msra.mxu0 %v1173
    %1175 = vmatprep.subr.mxu0 0.0
    %v1176 = vand.u32 %v67, 4294901760
    %1177 = vmatpush1.msra.mxu0 %v1176
    %1178 = vmatprep.subr.mxu0 0.0
    %1179 = vmatpush1.msra.mxu0 0.0
    %1180 = vmatprep.subr.mxu0 0.0
    %1181 = vmatpush1.msra.mxu0 0.0
    %1182 = vmatprep.subr.mxu0 0.0
    %1183 = vmatpush1.msra.mxu0 0.0
    %1184 = vmatprep.subr.mxu0 0.0
    %1185 = vmatpush1.msra.mxu0 0.0
    %1186 = vmatprep.subr.mxu0 0.0
    %1187 = vmatpush1.msra.mxu0 0.0
    %1188 = vmatprep.subr.mxu0 0.0
    %1189 = vmatpush1.msra.mxu0 0.0
    %1190 = vmatprep.subr.mxu0 0.0
    %1191 = vmatpush1.msra.mxu0 0.0
    %1192 = vmatprep.subr.mxu0 0.0
    %1193 = vmatpush1.msra.mxu0 0.0
    %1194 = vmatprep.subr.mxu0 0.0
    %1195 = vmatpush1.msra.mxu0 0.0
    %1196 = vmatprep.subr.mxu0 0.0
    %1197 = vmatpush1.msra.mxu0 0.0
    %1198 = vmatprep.subr.mxu0 0.0
    %1199 = vmatpush1.msra.mxu0 0.0
    %1200 = vmatprep.subr.mxu0 0.0
    %1201 = vmatpush1.msra.mxu0 0.0
    %1202 = vmatprep.subr.mxu0 0.0
    %1203 = vmatpush1.msra.mxu0 0.0
    %1204 = vmatprep.subr.mxu0 0.0
    %1205 = vmatpush1.msra.mxu0 0.0
    %1206 = vmatprep.subr.mxu0 0.0
    %1207 = vmatpush1.msra.mxu0 0.0
    %1208 = vmatprep.subr.mxu0 0.0
    %1209 = vmatpush1.msra.mxu0 0.0
    %1210 = vmatprep.mubr.f32.mxu0 0.0
    %v1211 = vand.u32 %v575, 4294901760
    %1212 = vmatmul.mubr.f32.gmra.mrb[0].mxu0 %v1211
    %v1213 = vpop.f32.mrb[0].mxu0
    %v1214 = vadd.f32 %v1127, %v1213
    %v1215 = vpop.f32.mrb[0].mxu0
    %1216 = vdwg.mxu0
    %v1217 = vmul.f32 %v86, %v1214
    %v1218 = vmul.f32 %v1217, 0.5
    %v1219 = vadd.f32 %v575, %v1218
    %1220 = vmatprep.subr.mxu0 0.0
    %v1221 = vand.u32 %v52, 4294901760
    %1222 = vmatpush1.msra.mxu0 %v1221
    %1223 = vmatprep.subr.mxu0 0.0
    %v1224 = vand.u32 %v53, 4294901760
    %1225 = vmatpush1.msra.mxu0 %v1224
    %1226 = vmatprep.subr.mxu0 0.0
    %v1227 = vand.u32 %v54, 4294901760
    %1228 = vmatpush1.msra.mxu0 %v1227
    %1229 = vmatprep.subr.mxu0 0.0
    %v1230 = vand.u32 %v55, 4294901760
    %1231 = vmatpush1.msra.mxu0 %v1230
    %1232 = vmatprep.subr.mxu0 0.0
    %v1233 = vand.u32 %v56, 4294901760
    %1234 = vmatpush1.msra.mxu0 %v1233
    %1235 = vmatprep.subr.mxu0 0.0
    %v1236 = vand.u32 %v57, 4294901760
    %1237 = vmatpush1.msra.mxu0 %v1236
    %1238 = vmatprep.subr.mxu0 0.0
    %v1239 = vand.u32 %v58, 4294901760
    %1240 = vmatpush1.msra.mxu0 %v1239
    %1241 = vmatprep.subr.mxu0 0.0
    %v1242 = vand.u32 %v59, 4294901760
    %1243 = vmatpush1.msra.mxu0 %v1242
    %1244 = vmatprep.subr.mxu0 0.0
    %v1245 = vand.u32 %v60, 4294901760
    %1246 = vmatpush1.msra.mxu0 %v1245
    %1247 = vmatprep.subr.mxu0 0.0
    %v1248 = vand.u32 %v61, 4294901760
    %1249 = vmatpush1.msra.mxu0 %v1248
    %1250 = vmatprep.subr.mxu0 0.0
    %v1251 = vand.u32 %v62, 4294901760
    %1252 = vmatpush1.msra.mxu0 %v1251
    %1253 = vmatprep.subr.mxu0 0.0
    %v1254 = vand.u32 %v63, 4294901760
    %1255 = vmatpush1.msra.mxu0 %v1254
    %1256 = vmatprep.subr.mxu0 0.0
    %v1257 = vand.u32 %v64, 4294901760
    %1258 = vmatpush1.msra.mxu0 %v1257
    %1259 = vmatprep.subr.mxu0 0.0
    %v1260 = vand.u32 %v65, 4294901760
    %1261 = vmatpush1.msra.mxu0 %v1260
    %1262 = vmatprep.subr.mxu0 0.0
    %v1263 = vand.u32 %v66, 4294901760
    %1264 = vmatpush1.msra.mxu0 %v1263
    %1265 = vmatprep.subr.mxu0 0.0
    %v1266 = vand.u32 %v67, 4294901760
    %1267 = vmatpush1.msra.mxu0 %v1266
    %1268 = vmatprep.subr.mxu0 0.0
    %1269 = vmatpush1.msra.mxu0 0.0
    %1270 = vmatprep.subr.mxu0 0.0
    %1271 = vmatpush1.msra.mxu0 0.0
    %1272 = vmatprep.subr.mxu0 0.0
    %1273 = vmatpush1.msra.mxu0 0.0
    %1274 = vmatprep.subr.mxu0 0.0
    %1275 = vmatpush1.msra.mxu0 0.0
    %1276 = vmatprep.subr.mxu0 0.0
    %1277 = vmatpush1.msra.mxu0 0.0
    %1278 = vmatprep.subr.mxu0 0.0
    %1279 = vmatpush1.msra.mxu0 0.0
    %1280 = vmatprep.subr.mxu0 0.0
    %1281 = vmatpush1.msra.mxu0 0.0
    %1282 = vmatprep.subr.mxu0 0.0
    %1283 = vmatpush1.msra.mxu0 0.0
    %1284 = vmatprep.subr.mxu0 0.0
    %1285 = vmatpush1.msra.mxu0 0.0
    %1286 = vmatprep.subr.mxu0 0.0
    %1287 = vmatpush1.msra.mxu0 0.0
    %1288 = vmatprep.subr.mxu0 0.0
    %1289 = vmatpush1.msra.mxu0 0.0
    %1290 = vmatprep.subr.mxu0 0.0
    %1291 = vmatpush1.msra.mxu0 0.0
    %1292 = vmatprep.subr.mxu0 0.0
    %1293 = vmatpush1.msra.mxu0 0.0
    %1294 = vmatprep.subr.mxu0 0.0
    %1295 = vmatpush1.msra.mxu0 0.0
    %1296 = vmatprep.subr.mxu0 0.0
    %1297 = vmatpush1.msra.mxu0 0.0
    %1298 = vmatprep.subr.mxu0 0.0
    %1299 = vmatpush1.msra.mxu0 0.0
    %1300 = vmatprep.mubr.f32.mxu0 0.0
    %v1301 = vand.u32 %v1218, 4294901760
    %v1302 = vsub.f32 %v1218, %v1301
    %v1303 = vand.u32 %v1302, 4294901760
    %v1304 = vsub.f32 %v1302, %v1303
    %v1305 = vand.u32 %v1304, 4294901760
    %1306 = vmatmul.mubr.f32.gmra.mrb[0].mxu0 %v1305
    %v1307 = vpop.f32.mrb[0].mxu0
    %v1308 = vadd.f32 0.0, %v1307
    %v1309 = vpop.f32.mrb[0].mxu0
    %1310 = vdwg.mxu0
    %1311 = vmatprep.subr.mxu0 0.0
    %v1312 = vand.u32 %v52, 4294901760
    %v1313 = vsub.f32 %v52, %v1312
    %v1314 = vand.u32 %v1313, 4294901760
    %v1315 = vsub.f32 %v1313, %v1314
    %v1316 = vand.u32 %v1315, 4294901760
    %1317 = vmatpush1.msra.mxu0 %v1316
    %1318 = vmatprep.subr.mxu0 0.0
    %v1319 = vand.u32 %v53, 4294901760
    %v1320 = vsub.f32 %v53, %v1319
    %v1321 = vand.u32 %v1320, 4294901760
    %v1322 = vsub.f32 %v1320, %v1321
    %v1323 = vand.u32 %v1322, 4294901760
    %1324 = vmatpush1.msra.mxu0 %v1323
    %1325 = vmatprep.subr.mxu0 0.0
    %v1326 = vand.u32 %v54, 4294901760
    %v1327 = vsub.f32 %v54, %v1326
    %v1328 = vand.u32 %v1327, 4294901760
    %v1329 = vsub.f32 %v1327, %v1328
    %v1330 = vand.u32 %v1329, 4294901760
    %1331 = vmatpush1.msra.mxu0 %v1330
    %1332 = vmatprep.subr.mxu0 0.0
    %v1333 = vand.u32 %v55, 4294901760
    %v1334 = vsub.f32 %v55, %v1333
    %v1335 = vand.u32 %v1334, 4294901760
    %v1336 = vsub.f32 %v1334, %v1335
    %v1337 = vand.u32 %v1336, 4294901760
    %1338 = vmatpush1.msra.mxu0 %v1337
    %1339 = vmatprep.subr.mxu0 0.0
    %v1340 = vand.u32 %v56, 4294901760
    %v1341 = vsub.f32 %v56, %v1340
    %v1342 = vand.u32 %v1341, 4294901760
    %v1343 = vsub.f32 %v1341, %v1342
    %v1344 = vand.u32 %v1343, 4294901760
    %1345 = vmatpush1.msra.mxu0 %v1344
    %1346 = vmatprep.subr.mxu0 0.0
    %v1347 = vand.u32 %v57, 4294901760
    %v1348 = vsub.f32 %v57, %v1347
    %v1349 = vand.u32 %v1348, 4294901760
    %v1350 = vsub.f32 %v1348, %v1349
    %v1351 = vand.u32 %v1350, 4294901760
    %1352 = vmatpush1.msra.mxu0 %v1351
    %1353 = vmatprep.subr.mxu0 0.0
    %v1354 = vand.u32 %v58, 4294901760
    %v1355 = vsub.f32 %v58, %v1354
    %v1356 = vand.u32 %v1355, 4294901760
    %v1357 = vsub.f32 %v1355, %v1356
    %v1358 = vand.u32 %v1357, 4294901760
    %1359 = vmatpush1.msra.mxu0 %v1358
    %1360 = vmatprep.subr.mxu0 0.0
    %v1361 = vand.u32 %v59, 4294901760
    %v1362 = vsub.f32 %v59, %v1361
    %v1363 = vand.u32 %v1362, 4294901760
    %v1364 = vsub.f32 %v1362, %v1363
    %v1365 = vand.u32 %v1364, 4294901760
    %1366 = vmatpush1.msra.mxu0 %v1365
    %1367 = vmatprep.subr.mxu0 0.0
    %v1368 = vand.u32 %v60, 4294901760
    %v1369 = vsub.f32 %v60, %v1368
    %v1370 = vand.u32 %v1369, 4294901760
    %v1371 = vsub.f32 %v1369, %v1370
    %v1372 = vand.u32 %v1371, 4294901760
    %1373 = vmatpush1.msra.mxu0 %v1372
    %1374 = vmatprep.subr.mxu0 0.0
    %v1375 = vand.u32 %v61, 4294901760
    %v1376 = vsub.f32 %v61, %v1375
    %v1377 = vand.u32 %v1376, 4294901760
    %v1378 = vsub.f32 %v1376, %v1377
    %v1379 = vand.u32 %v1378, 4294901760
    %1380 = vmatpush1.msra.mxu0 %v1379
    %1381 = vmatprep.subr.mxu0 0.0
    %v1382 = vand.u32 %v62, 4294901760
    %v1383 = vsub.f32 %v62, %v1382
    %v1384 = vand.u32 %v1383, 4294901760
    %v1385 = vsub.f32 %v1383, %v1384
    %v1386 = vand.u32 %v1385, 4294901760
    %1387 = vmatpush1.msra.mxu0 %v1386
    %1388 = vmatprep.subr.mxu0 0.0
    %v1389 = vand.u32 %v63, 4294901760
    %v1390 = vsub.f32 %v63, %v1389
    %v1391 = vand.u32 %v1390, 4294901760
    %v1392 = vsub.f32 %v1390, %v1391
    %v1393 = vand.u32 %v1392, 4294901760
    %1394 = vmatpush1.msra.mxu0 %v1393
    %1395 = vmatprep.subr.mxu0 0.0
    %v1396 = vand.u32 %v64, 4294901760
    %v1397 = vsub.f32 %v64, %v1396
    %v1398 = vand.u32 %v1397, 4294901760
    %v1399 = vsub.f32 %v1397, %v1398
    %v1400 = vand.u32 %v1399, 4294901760
    %1401 = vmatpush1.msra.mxu0 %v1400
    %1402 = vmatprep.subr.mxu0 0.0
    %v1403 = vand.u32 %v65, 4294901760
    %v1404 = vsub.f32 %v65, %v1403
    %v1405 = vand.u32 %v1404, 4294901760
    %v1406 = vsub.f32 %v1404, %v1405
    %v1407 = vand.u32 %v1406, 4294901760
    %1408 = vmatpush1.msra.mxu0 %v1407
    %1409 = vmatprep.subr.mxu0 0.0
    %v1410 = vand.u32 %v66, 4294901760
    %v1411 = vsub.f32 %v66, %v1410
    %v1412 = vand.u32 %v1411, 4294901760
    %v1413 = vsub.f32 %v1411, %v1412
    %v1414 = vand.u32 %v1413, 4294901760
    %1415 = vmatpush1.msra.mxu0 %v1414
    %1416 = vmatprep.subr.mxu0 0.0
    %v1417 = vand.u32 %v67, 4294901760
    %v1418 = vsub.f32 %v67, %v1417
    %v1419 = vand.u32 %v1418, 4294901760
    %v1420 = vsub.f32 %v1418, %v1419
    %v1421 = vand.u32 %v1420, 4294901760
    %1422 = vmatpush1.msra.mxu0 %v1421
    %1423 = vmatprep.subr.mxu0 0.0
    %1424 = vmatpush1.msra.mxu0 0.0
    %1425 = vmatprep.subr.mxu0 0.0
    %1426 = vmatpush1.msra.mxu0 0.0
    %1427 = vmatprep.subr.mxu0 0.0
    %1428 = vmatpush1.msra.mxu0 0.0
    %1429 = vmatprep.subr.mxu0 0.0
    %1430 = vmatpush1.msra.mxu0 0.0
    %1431 = vmatprep.subr.mxu0 0.0
    %1432 = vmatpush1.msra.mxu0 0.0
    %1433 = vmatprep.subr.mxu0 0.0
    %1434 = vmatpush1.msra.mxu0 0.0
    %1435 = vmatprep.subr.mxu0 0.0
    %1436 = vmatpush1.msra.mxu0 0.0
    %1437 = vmatprep.subr.mxu0 0.0
    %1438 = vmatpush1.msra.mxu0 0.0
    %1439 = vmatprep.subr.mxu0 0.0
    %1440 = vmatpush1.msra.mxu0 0.0
    %1441 = vmatprep.subr.mxu0 0.0
    %1442 = vmatpush1.msra.mxu0 0.0
    %1443 = vmatprep.subr.mxu0 0.0
    %1444 = vmatpush1.msra.mxu0 0.0
    %1445 = vmatprep.subr.mxu0 0.0
    %1446 = vmatpush1.msra.mxu0 0.0
    %1447 = vmatprep.subr.mxu0 0.0
    %1448 = vmatpush1.msra.mxu0 0.0
    %1449 = vmatprep.subr.mxu0 0.0
    %1450 = vmatpush1.msra.mxu0 0.0
    %1451 = vmatprep.subr.mxu0 0.0
    %1452 = vmatpush1.msra.mxu0 0.0
    %1453 = vmatprep.subr.mxu0 0.0
    %1454 = vmatpush1.msra.mxu0 0.0
    %1455 = vmatprep.mubr.f32.mxu0 0.0
    %v1456 = vand.u32 %v1218, 4294901760
    %1457 = vmatmul.mubr.f32.gmra.mrb[0].mxu0 %v1456
    %v1458 = vpop.f32.mrb[0].mxu0
    %v1459 = vadd.f32 %v1308, %v1458
    %v1460 = vpop.f32.mrb[0].mxu0
    %1461 = vdwg.mxu0
    %1462 = vmatprep.subr.mxu0 0.0
    %v1463 = vand.u32 %v52, 4294901760
    %v1464 = vsub.f32 %v52, %v1463
    %1465 = vmatpush1.msra.mxu0 %v1464
    %1466 = vmatprep.subr.mxu0 0.0
    %v1467 = vand.u32 %v53, 4294901760
    %v1468 = vsub.f32 %v53, %v1467
    %1469 = vmatpush1.msra.mxu0 %v1468
    %1470 = vmatprep.subr.mxu0 0.0
    %v1471 = vand.u32 %v54, 4294901760
    %v1472 = vsub.f32 %v54, %v1471
    %1473 = vmatpush1.msra.mxu0 %v1472
    %1474 = vmatprep.subr.mxu0 0.0
    %v1475 = vand.u32 %v55, 4294901760
    %v1476 = vsub.f32 %v55, %v1475
    %1477 = vmatpush1.msra.mxu0 %v1476
    %1478 = vmatprep.subr.mxu0 0.0
    %v1479 = vand.u32 %v56, 4294901760
    %v1480 = vsub.f32 %v56, %v1479
    %1481 = vmatpush1.msra.mxu0 %v1480
    %1482 = vmatprep.subr.mxu0 0.0
    %v1483 = vand.u32 %v57, 4294901760
    %v1484 = vsub.f32 %v57, %v1483
    %1485 = vmatpush1.msra.mxu0 %v1484
    %1486 = vmatprep.subr.mxu0 0.0
    %v1487 = vand.u32 %v58, 4294901760
    %v1488 = vsub.f32 %v58, %v1487
    %1489 = vmatpush1.msra.mxu0 %v1488
    %1490 = vmatprep.subr.mxu0 0.0
    %v1491 = vand.u32 %v59, 4294901760
    %v1492 = vsub.f32 %v59, %v1491
    %1493 = vmatpush1.msra.mxu0 %v1492
    %1494 = vmatprep.subr.mxu0 0.0
    %v1495 = vand.u32 %v60, 4294901760
    %v1496 = vsub.f32 %v60, %v1495
    %1497 = vmatpush1.msra.mxu0 %v1496
    %1498 = vmatprep.subr.mxu0 0.0
    %v1499 = vand.u32 %v61, 4294901760
    %v1500 = vsub.f32 %v61, %v1499
    %1501 = vmatpush1.msra.mxu0 %v1500
    %1502 = vmatprep.subr.mxu0 0.0
    %v1503 = vand.u32 %v62, 4294901760
    %v1504 = vsub.f32 %v62, %v1503
    %1505 = vmatpush1.msra.mxu0 %v1504
    %1506 = vmatprep.subr.mxu0 0.0
    %v1507 = vand.u32 %v63, 4294901760
    %v1508 = vsub.f32 %v63, %v1507
    %1509 = vmatpush1.msra.mxu0 %v1508
    %1510 = vmatprep.subr.mxu0 0.0
    %v1511 = vand.u32 %v64, 4294901760
    %v1512 = vsub.f32 %v64, %v1511
    %1513 = vmatpush1.msra.mxu0 %v1512
    %1514 = vmatprep.subr.mxu0 0.0
    %v1515 = vand.u32 %v65, 4294901760
    %v1516 = vsub.f32 %v65, %v1515
    %1517 = vmatpush1.msra.mxu0 %v1516
    %1518 = vmatprep.subr.mxu0 0.0
    %v1519 = vand.u32 %v66, 4294901760
    %v1520 = vsub.f32 %v66, %v1519
    %1521 = vmatpush1.msra.mxu0 %v1520
    %1522 = vmatprep.subr.mxu0 0.0
    %v1523 = vand.u32 %v67, 4294901760
    %v1524 = vsub.f32 %v67, %v1523
    %1525 = vmatpush1.msra.mxu0 %v1524
    %1526 = vmatprep.subr.mxu0 0.0
    %1527 = vmatpush1.msra.mxu0 0.0
    %1528 = vmatprep.subr.mxu0 0.0
    %1529 = vmatpush1.msra.mxu0 0.0
    %1530 = vmatprep.subr.mxu0 0.0
    %1531 = vmatpush1.msra.mxu0 0.0
    %1532 = vmatprep.subr.mxu0 0.0
    %1533 = vmatpush1.msra.mxu0 0.0
    %1534 = vmatprep.subr.mxu0 0.0
    %1535 = vmatpush1.msra.mxu0 0.0
    %1536 = vmatprep.subr.mxu0 0.0
    %1537 = vmatpush1.msra.mxu0 0.0
    %1538 = vmatprep.subr.mxu0 0.0
    %1539 = vmatpush1.msra.mxu0 0.0
    %1540 = vmatprep.subr.mxu0 0.0
    %1541 = vmatpush1.msra.mxu0 0.0
    %1542 = vmatprep.subr.mxu0 0.0
    %1543 = vmatpush1.msra.mxu0 0.0
    %1544 = vmatprep.subr.mxu0 0.0
    %1545 = vmatpush1.msra.mxu0 0.0
    %1546 = vmatprep.subr.mxu0 0.0
    %1547 = vmatpush1.msra.mxu0 0.0
    %1548 = vmatprep.subr.mxu0 0.0
    %1549 = vmatpush1.msra.mxu0 0.0
    %1550 = vmatprep.subr.mxu0 0.0
    %1551 = vmatpush1.msra.mxu0 0.0
    %1552 = vmatprep.subr.mxu0 0.0
    %1553 = vmatpush1.msra.mxu0 0.0
    %1554 = vmatprep.subr.mxu0 0.0
    %1555 = vmatpush1.msra.mxu0 0.0
    %1556 = vmatprep.subr.mxu0 0.0
    %1557 = vmatpush1.msra.mxu0 0.0
    %1558 = vmatprep.mubr.f32.mxu0 0.0
    %v1559 = vand.u32 %v1218, 4294901760
    %v1560 = vsub.f32 %v1218, %v1559
    %1561 = vmatmul.mubr.f32.gmra.mrb[0].mxu0 %v1560
    %v1562 = vpop.f32.mrb[0].mxu0
    %v1563 = vadd.f32 %v1459, %v1562
    %v1564 = vpop.f32.mrb[0].mxu0
    %1565 = vdwg.mxu0
    %1566 = vmatprep.subr.mxu0 0.0
    %v1567 = vand.u32 %v52, 4294901760
    %1568 = vmatpush1.msra.mxu0 %v1567
    %1569 = vmatprep.subr.mxu0 0.0
    %v1570 = vand.u32 %v53, 4294901760
    %1571 = vmatpush1.msra.mxu0 %v1570
    %1572 = vmatprep.subr.mxu0 0.0
    %v1573 = vand.u32 %v54, 4294901760
    %1574 = vmatpush1.msra.mxu0 %v1573
    %1575 = vmatprep.subr.mxu0 0.0
    %v1576 = vand.u32 %v55, 4294901760
    %1577 = vmatpush1.msra.mxu0 %v1576
    %1578 = vmatprep.subr.mxu0 0.0
    %v1579 = vand.u32 %v56, 4294901760
    %1580 = vmatpush1.msra.mxu0 %v1579
    %1581 = vmatprep.subr.mxu0 0.0
    %v1582 = vand.u32 %v57, 4294901760
    %1583 = vmatpush1.msra.mxu0 %v1582
    %1584 = vmatprep.subr.mxu0 0.0
    %v1585 = vand.u32 %v58, 4294901760
    %1586 = vmatpush1.msra.mxu0 %v1585
    %1587 = vmatprep.subr.mxu0 0.0
    %v1588 = vand.u32 %v59, 4294901760
    %1589 = vmatpush1.msra.mxu0 %v1588
    %1590 = vmatprep.subr.mxu0 0.0
    %v1591 = vand.u32 %v60, 4294901760
    %1592 = vmatpush1.msra.mxu0 %v1591
    %1593 = vmatprep.subr.mxu0 0.0
    %v1594 = vand.u32 %v61, 4294901760
    %1595 = vmatpush1.msra.mxu0 %v1594
    %1596 = vmatprep.subr.mxu0 0.0
    %v1597 = vand.u32 %v62, 4294901760
    %1598 = vmatpush1.msra.mxu0 %v1597
    %1599 = vmatprep.subr.mxu0 0.0
    %v1600 = vand.u32 %v63, 4294901760
    %1601 = vmatpush1.msra.mxu0 %v1600
    %1602 = vmatprep.subr.mxu0 0.0
    %v1603 = vand.u32 %v64, 4294901760
    %1604 = vmatpush1.msra.mxu0 %v1603
    %1605 = vmatprep.subr.mxu0 0.0
    %v1606 = vand.u32 %v65, 4294901760
    %1607 = vmatpush1.msra.mxu0 %v1606
    %1608 = vmatprep.subr.mxu0 0.0
    %v1609 = vand.u32 %v66, 4294901760
    %1610 = vmatpush1.msra.mxu0 %v1609
    %1611 = vmatprep.subr.mxu0 0.0
    %v1612 = vand.u32 %v67, 4294901760
    %1613 = vmatpush1.msra.mxu0 %v1612
    %1614 = vmatprep.subr.mxu0 0.0
    %1615 = vmatpush1.msra.mxu0 0.0
    %1616 = vmatprep.subr.mxu0 0.0
    %1617 = vmatpush1.msra.mxu0 0.0
    %1618 = vmatprep.subr.mxu0 0.0
    %1619 = vmatpush1.msra.mxu0 0.0
    %1620 = vmatprep.subr.mxu0 0.0
    %1621 = vmatpush1.msra.mxu0 0.0
    %1622 = vmatprep.subr.mxu0 0.0
    %1623 = vmatpush1.msra.mxu0 0.0
    %1624 = vmatprep.subr.mxu0 0.0
    %1625 = vmatpush1.msra.mxu0 0.0
    %1626 = vmatprep.subr.mxu0 0.0
    %1627 = vmatpush1.msra.mxu0 0.0
    %1628 = vmatprep.subr.mxu0 0.0
    %1629 = vmatpush1.msra.mxu0 0.0
    %1630 = vmatprep.subr.mxu0 0.0
    %1631 = vmatpush1.msra.mxu0 0.0
    %1632 = vmatprep.subr.mxu0 0.0
    %1633 = vmatpush1.msra.mxu0 0.0
    %1634 = vmatprep.subr.mxu0 0.0
    %1635 = vmatpush1.msra.mxu0 0.0
    %1636 = vmatprep.subr.mxu0 0.0
    %1637 = vmatpush1.msra.mxu0 0.0
    %1638 = vmatprep.subr.mxu0 0.0
    %1639 = vmatpush1.msra.mxu0 0.0
    %1640 = vmatprep.subr.mxu0 0.0
    %1641 = vmatpush1.msra.mxu0 0.0
    %1642 = vmatprep.subr.mxu0 0.0
    %1643 = vmatpush1.msra.mxu0 0.0
    %1644 = vmatprep.subr.mxu0 0.0
    %1645 = vmatpush1.msra.mxu0 0.0
    %1646 = vmatprep.mubr.f32.mxu0 0.0
    %v1647 = vand.u32 %v1218, 4294901760
    %v1648 = vsub.f32 %v1218, %v1647
    %v1649 = vand.u32 %v1648, 4294901760
    %1650 = vmatmul.mubr.f32.gmra.mrb[0].mxu0 %v1649
    %v1651 = vpop.f32.mrb[0].mxu0
    %v1652 = vadd.f32 %v1563, %v1651
    %v1653 = vpop.f32.mrb[0].mxu0
    %1654 = vdwg.mxu0
    %1655 = vmatprep.subr.mxu0 0.0
    %v1656 = vand.u32 %v52, 4294901760
    %v1657 = vsub.f32 %v52, %v1656
    %v1658 = vand.u32 %v1657, 4294901760
    %1659 = vmatpush1.msra.mxu0 %v1658
    %1660 = vmatprep.subr.mxu0 0.0
    %v1661 = vand.u32 %v53, 4294901760
    %v1662 = vsub.f32 %v53, %v1661
    %v1663 = vand.u32 %v1662, 4294901760
    %1664 = vmatpush1.msra.mxu0 %v1663
    %1665 = vmatprep.subr.mxu0 0.0
    %v1666 = vand.u32 %v54, 4294901760
    %v1667 = vsub.f32 %v54, %v1666
    %v1668 = vand.u32 %v1667, 4294901760
    %1669 = vmatpush1.msra.mxu0 %v1668
    %1670 = vmatprep.subr.mxu0 0.0
    %v1671 = vand.u32 %v55, 4294901760
    %v1672 = vsub.f32 %v55, %v1671
    %v1673 = vand.u32 %v1672, 4294901760
    %1674 = vmatpush1.msra.mxu0 %v1673
    %1675 = vmatprep.subr.mxu0 0.0
    %v1676 = vand.u32 %v56, 4294901760
    %v1677 = vsub.f32 %v56, %v1676
    %v1678 = vand.u32 %v1677, 4294901760
    %1679 = vmatpush1.msra.mxu0 %v1678
    %1680 = vmatprep.subr.mxu0 0.0
    %v1681 = vand.u32 %v57, 4294901760
    %v1682 = vsub.f32 %v57, %v1681
    %v1683 = vand.u32 %v1682, 4294901760
    %1684 = vmatpush1.msra.mxu0 %v1683
    %1685 = vmatprep.subr.mxu0 0.0
    %v1686 = vand.u32 %v58, 4294901760
    %v1687 = vsub.f32 %v58, %v1686
    %v1688 = vand.u32 %v1687, 4294901760
    %1689 = vmatpush1.msra.mxu0 %v1688
    %1690 = vmatprep.subr.mxu0 0.0
    %v1691 = vand.u32 %v59, 4294901760
    %v1692 = vsub.f32 %v59, %v1691
    %v1693 = vand.u32 %v1692, 4294901760
    %1694 = vmatpush1.msra.mxu0 %v1693
    %1695 = vmatprep.subr.mxu0 0.0
    %v1696 = vand.u32 %v60, 4294901760
    %v1697 = vsub.f32 %v60, %v1696
    %v1698 = vand.u32 %v1697, 4294901760
    %1699 = vmatpush1.msra.mxu0 %v1698
    %1700 = vmatprep.subr.mxu0 0.0
    %v1701 = vand.u32 %v61, 4294901760
    %v1702 = vsub.f32 %v61, %v1701
    %v1703 = vand.u32 %v1702, 4294901760
    %1704 = vmatpush1.msra.mxu0 %v1703
    %1705 = vmatprep.subr.mxu0 0.0
    %v1706 = vand.u32 %v62, 4294901760
    %v1707 = vsub.f32 %v62, %v1706
    %v1708 = vand.u32 %v1707, 4294901760
    %1709 = vmatpush1.msra.mxu0 %v1708
    %1710 = vmatprep.subr.mxu0 0.0
    %v1711 = vand.u32 %v63, 4294901760
    %v1712 = vsub.f32 %v63, %v1711
    %v1713 = vand.u32 %v1712, 4294901760
    %1714 = vmatpush1.msra.mxu0 %v1713
    %1715 = vmatprep.subr.mxu0 0.0
    %v1716 = vand.u32 %v64, 4294901760
    %v1717 = vsub.f32 %v64, %v1716
    %v1718 = vand.u32 %v1717, 4294901760
    %1719 = vmatpush1.msra.mxu0 %v1718
    %1720 = vmatprep.subr.mxu0 0.0
    %v1721 = vand.u32 %v65, 4294901760
    %v1722 = vsub.f32 %v65, %v1721
    %v1723 = vand.u32 %v1722, 4294901760
    %1724 = vmatpush1.msra.mxu0 %v1723
    %1725 = vmatprep.subr.mxu0 0.0
    %v1726 = vand.u32 %v66, 4294901760
    %v1727 = vsub.f32 %v66, %v1726
    %v1728 = vand.u32 %v1727, 4294901760
    %1729 = vmatpush1.msra.mxu0 %v1728
    %1730 = vmatprep.subr.mxu0 0.0
    %v1731 = vand.u32 %v67, 4294901760
    %v1732 = vsub.f32 %v67, %v1731
    %v1733 = vand.u32 %v1732, 4294901760
    %1734 = vmatpush1.msra.mxu0 %v1733
    %1735 = vmatprep.subr.mxu0 0.0
    %1736 = vmatpush1.msra.mxu0 0.0
    %1737 = vmatprep.subr.mxu0 0.0
    %1738 = vmatpush1.msra.mxu0 0.0
    %1739 = vmatprep.subr.mxu0 0.0
    %1740 = vmatpush1.msra.mxu0 0.0
    %1741 = vmatprep.subr.mxu0 0.0
    %1742 = vmatpush1.msra.mxu0 0.0
    %1743 = vmatprep.subr.mxu0 0.0
    %1744 = vmatpush1.msra.mxu0 0.0
    %1745 = vmatprep.subr.mxu0 0.0
    %1746 = vmatpush1.msra.mxu0 0.0
    %1747 = vmatprep.subr.mxu0 0.0
    %1748 = vmatpush1.msra.mxu0 0.0
    %1749 = vmatprep.subr.mxu0 0.0
    %1750 = vmatpush1.msra.mxu0 0.0
    %1751 = vmatprep.subr.mxu0 0.0
    %1752 = vmatpush1.msra.mxu0 0.0
    %1753 = vmatprep.subr.mxu0 0.0
    %1754 = vmatpush1.msra.mxu0 0.0
    %1755 = vmatprep.subr.mxu0 0.0
    %1756 = vmatpush1.msra.mxu0 0.0
    %1757 = vmatprep.subr.mxu0 0.0
    %1758 = vmatpush1.msra.mxu0 0.0
    %1759 = vmatprep.subr.mxu0 0.0
    %1760 = vmatpush1.msra.mxu0 0.0
    %1761 = vmatprep.subr.mxu0 0.0
    %1762 = vmatpush1.msra.mxu0 0.0
    %1763 = vmatprep.subr.mxu0 0.0
    %1764 = vmatpush1.msra.mxu0 0.0
    %1765 = vmatprep.subr.mxu0 0.0
    %1766 = vmatpush1.msra.mxu0 0.0
    %1767 = vmatprep.mubr.f32.mxu0 0.0
    %v1768 = vand.u32 %v1218, 4294901760
    %1769 = vmatmul.mubr.f32.gmra.mrb[0].mxu0 %v1768
    %v1770 = vpop.f32.mrb[0].mxu0
    %v1771 = vadd.f32 %v1652, %v1770
    %v1772 = vpop.f32.mrb[0].mxu0
    %1773 = vdwg.mxu0
    %1774 = vmatprep.subr.mxu0 0.0
    %v1775 = vand.u32 %v52, 4294901760
    %1776 = vmatpush1.msra.mxu0 %v1775
    %1777 = vmatprep.subr.mxu0 0.0
    %v1778 = vand.u32 %v53, 4294901760
    %1779 = vmatpush1.msra.mxu0 %v1778
    %1780 = vmatprep.subr.mxu0 0.0
    %v1781 = vand.u32 %v54, 4294901760
    %1782 = vmatpush1.msra.mxu0 %v1781
    %1783 = vmatprep.subr.mxu0 0.0
    %v1784 = vand.u32 %v55, 4294901760
    %1785 = vmatpush1.msra.mxu0 %v1784
    %1786 = vmatprep.subr.mxu0 0.0
    %v1787 = vand.u32 %v56, 4294901760
    %1788 = vmatpush1.msra.mxu0 %v1787
    %1789 = vmatprep.subr.mxu0 0.0
    %v1790 = vand.u32 %v57, 4294901760
    %1791 = vmatpush1.msra.mxu0 %v1790
    %1792 = vmatprep.subr.mxu0 0.0
    %v1793 = vand.u32 %v58, 4294901760
    %1794 = vmatpush1.msra.mxu0 %v1793
    %1795 = vmatprep.subr.mxu0 0.0
    %v1796 = vand.u32 %v59, 4294901760
    %1797 = vmatpush1.msra.mxu0 %v1796
    %1798 = vmatprep.subr.mxu0 0.0
    %v1799 = vand.u32 %v60, 4294901760
    %1800 = vmatpush1.msra.mxu0 %v1799
    %1801 = vmatprep.subr.mxu0 0.0
    %v1802 = vand.u32 %v61, 4294901760
    %1803 = vmatpush1.msra.mxu0 %v1802
    %1804 = vmatprep.subr.mxu0 0.0
    %v1805 = vand.u32 %v62, 4294901760
    %1806 = vmatpush1.msra.mxu0 %v1805
    %1807 = vmatprep.subr.mxu0 0.0
    %v1808 = vand.u32 %v63, 4294901760
    %1809 = vmatpush1.msra.mxu0 %v1808
    %1810 = vmatprep.subr.mxu0 0.0
    %v1811 = vand.u32 %v64, 4294901760
    %1812 = vmatpush1.msra.mxu0 %v1811
    %1813 = vmatprep.subr.mxu0 0.0
    %v1814 = vand.u32 %v65, 4294901760
    %1815 = vmatpush1.msra.mxu0 %v1814
    %1816 = vmatprep.subr.mxu0 0.0
    %v1817 = vand.u32 %v66, 4294901760
    %1818 = vmatpush1.msra.mxu0 %v1817
    %1819 = vmatprep.subr.mxu0 0.0
    %v1820 = vand.u32 %v67, 4294901760
    %1821 = vmatpush1.msra.mxu0 %v1820
    %1822 = vmatprep.subr.mxu0 0.0
    %1823 = vmatpush1.msra.mxu0 0.0
    %1824 = vmatprep.subr.mxu0 0.0
    %1825 = vmatpush1.msra.mxu0 0.0
    %1826 = vmatprep.subr.mxu0 0.0
    %1827 = vmatpush1.msra.mxu0 0.0
    %1828 = vmatprep.subr.mxu0 0.0
    %1829 = vmatpush1.msra.mxu0 0.0
    %1830 = vmatprep.subr.mxu0 0.0
    %1831 = vmatpush1.msra.mxu0 0.0
    %1832 = vmatprep.subr.mxu0 0.0
    %1833 = vmatpush1.msra.mxu0 0.0
    %1834 = vmatprep.subr.mxu0 0.0
    %1835 = vmatpush1.msra.mxu0 0.0
    %1836 = vmatprep.subr.mxu0 0.0
    %1837 = vmatpush1.msra.mxu0 0.0
    %1838 = vmatprep.subr.mxu0 0.0
    %1839 = vmatpush1.msra.mxu0 0.0
    %1840 = vmatprep.subr.mxu0 0.0
    %1841 = vmatpush1.msra.mxu0 0.0
    %1842 = vmatprep.subr.mxu0 0.0
    %1843 = vmatpush1.msra.mxu0 0.0
    %1844 = vmatprep.subr.mxu0 0.0
    %1845 = vmatpush1.msra.mxu0 0.0
    %1846 = vmatprep.subr.mxu0 0.0
    %1847 = vmatpush1.msra.mxu0 0.0
    %1848 = vmatprep.subr.mxu0 0.0
    %1849 = vmatpush1.msra.mxu0 0.0
    %1850 = vmatprep.subr.mxu0 0.0
    %1851 = vmatpush1.msra.mxu0 0.0
    %1852 = vmatprep.subr.mxu0 0.0
    %1853 = vmatpush1.msra.mxu0 0.0
    %1854 = vmatprep.mubr.f32.mxu0 0.0
    %v1855 = vand.u32 %v1218, 4294901760
    %1856 = vmatmul.mubr.f32.gmra.mrb[0].mxu0 %v1855
    %v1857 = vpop.f32.mrb[0].mxu0
    %v1858 = vadd.f32 %v1771, %v1857
    %v1859 = vpop.f32.mrb[0].mxu0
    %1860 = vdwg.mxu0
    %v1861 = vmul.f32 %v86, %v1858
    %v1862 = vmul.f32 %v1861, 0.33333334
    %v1863 = vadd.f32 %v1219, %v1862
    %1864 = vmatprep.subr.mxu0 0.0
    %v1865 = vand.u32 %v52, 4294901760
    %1866 = vmatpush1.msra.mxu0 %v1865
    %1867 = vmatprep.subr.mxu0 0.0
    %v1868 = vand.u32 %v53, 4294901760
    %1869 = vmatpush1.msra.mxu0 %v1868
    %1870 = vmatprep.subr.mxu0 0.0
    %v1871 = vand.u32 %v54, 4294901760
    %1872 = vmatpush1.msra.mxu0 %v1871
    %1873 = vmatprep.subr.mxu0 0.0
    %v1874 = vand.u32 %v55, 4294901760
    %1875 = vmatpush1.msra.mxu0 %v1874
    %1876 = vmatprep.subr.mxu0 0.0
    %v1877 = vand.u32 %v56, 4294901760
    %1878 = vmatpush1.msra.mxu0 %v1877
    %1879 = vmatprep.subr.mxu0 0.0
    %v1880 = vand.u32 %v57, 4294901760
    %1881 = vmatpush1.msra.mxu0 %v1880
    %1882 = vmatprep.subr.mxu0 0.0
    %v1883 = vand.u32 %v58, 4294901760
    %1884 = vmatpush1.msra.mxu0 %v1883
    %1885 = vmatprep.subr.mxu0 0.0
    %v1886 = vand.u32 %v59, 4294901760
    %1887 = vmatpush1.msra.mxu0 %v1886
    %1888 = vmatprep.subr.mxu0 0.0
    %v1889 = vand.u32 %v60, 4294901760
    %1890 = vmatpush1.msra.mxu0 %v1889
    %1891 = vmatprep.subr.mxu0 0.0
    %v1892 = vand.u32 %v61, 4294901760
    %1893 = vmatpush1.msra.mxu0 %v1892
    %1894 = vmatprep.subr.mxu0 0.0
    %v1895 = vand.u32 %v62, 4294901760
    %1896 = vmatpush1.msra.mxu0 %v1895
    %1897 = vmatprep.subr.mxu0 0.0
    %v1898 = vand.u32 %v63, 4294901760
    %1899 = vmatpush1.msra.mxu0 %v1898
    %1900 = vmatprep.subr.mxu0 0.0
    %v1901 = vand.u32 %v64, 4294901760
    %1902 = vmatpush1.msra.mxu0 %v1901
    %1903 = vmatprep.subr.mxu0 0.0
    %v1904 = vand.u32 %v65, 4294901760
    %1905 = vmatpush1.msra.mxu0 %v1904
    %1906 = vmatprep.subr.mxu0 0.0
    %v1907 = vand.u32 %v66, 4294901760
    %1908 = vmatpush1.msra.mxu0 %v1907
    %1909 = vmatprep.subr.mxu0 0.0
    %v1910 = vand.u32 %v67, 4294901760
    %1911 = vmatpush1.msra.mxu0 %v1910
    %1912 = vmatprep.subr.mxu0 0.0
    %1913 = vmatpush1.msra.mxu0 0.0
    %1914 = vmatprep.subr.mxu0 0.0
    %1915 = vmatpush1.msra.mxu0 0.0
    %1916 = vmatprep.subr.mxu0 0.0
    %1917 = vmatpush1.msra.mxu0 0.0
    %1918 = vmatprep.subr.mxu0 0.0
    %1919 = vmatpush1.msra.mxu0 0.0
    %1920 = vmatprep.subr.mxu0 0.0
    %1921 = vmatpush1.msra.mxu0 0.0
    %1922 = vmatprep.subr.mxu0 0.0
    %1923 = vmatpush1.msra.mxu0 0.0
    %1924 = vmatprep.subr.mxu0 0.0
    %1925 = vmatpush1.msra.mxu0 0.0
    %1926 = vmatprep.subr.mxu0 0.0
    %1927 = vmatpush1.msra.mxu0 0.0
    %1928 = vmatprep.subr.mxu0 0.0
    %1929 = vmatpush1.msra.mxu0 0.0
    %1930 = vmatprep.subr.mxu0 0.0
    %1931 = vmatpush1.msra.mxu0 0.0
    %1932 = vmatprep.subr.mxu0 0.0
    %1933 = vmatpush1.msra.mxu0 0.0
    %1934 = vmatprep.subr.mxu0 0.0
    %1935 = vmatpush1.msra.mxu0 0.0
    %1936 = vmatprep.subr.mxu0 0.0
    %1937 = vmatpush1.msra.mxu0 0.0
    %1938 = vmatprep.subr.mxu0 0.0
    %1939 = vmatpush1.msra.mxu0 0.0
    %1940 = vmatprep.subr.mxu0 0.0
    %1941 = vmatpush1.msra.mxu0 0.0
    %1942 = vmatprep.subr.mxu0 0.0
    %1943 = vmatpush1.msra.mxu0 0.0
    %1944 = vmatprep.mubr.f32.mxu0 0.0
    %v1945 = vand.u32 %v1862, 4294901760
    %v1946 = vsub.f32 %v1862, %v1945
    %v1947 = vand.u32 %v1946, 4294901760
    %v1948 = vsub.f32 %v1946, %v1947
    %v1949 = vand.u32 %v1948, 4294901760
    %1950 = vmatmul.mubr.f32.gmra.mrb[0].mxu0 %v1949
    %v1951 = vpop.f32.mrb[0].mxu0
    %v1952 = vadd.f32 0.0, %v1951
    %v1953 = vpop.f32.mrb[0].mxu0
    %1954 = vdwg.mxu0
    %1955 = vmatprep.subr.mxu0 0.0
    %v1956 = vand.u32 %v52, 4294901760
    %v1957 = vsub.f32 %v52, %v1956
    %v1958 = vand.u32 %v1957, 4294901760
    %v1959 = vsub.f32 %v1957, %v1958
    %v1960 = vand.u32 %v1959, 4294901760
    %1961 = vmatpush1.msra.mxu0 %v1960
    %1962 = vmatprep.subr.mxu0 0.0
    %v1963 = vand.u32 %v53, 4294901760
    %v1964 = vsub.f32 %v53, %v1963
    %v1965 = vand.u32 %v1964, 4294901760
    %v1966 = vsub.f32 %v1964, %v1965
    %v1967 = vand.u32 %v1966, 4294901760
    %1968 = vmatpush1.msra.mxu0 %v1967
    %1969 = vmatprep.subr.mxu0 0.0
    %v1970 = vand.u32 %v54, 4294901760
    %v1971 = vsub.f32 %v54, %v1970
    %v1972 = vand.u32 %v1971, 4294901760
    %v1973 = vsub.f32 %v1971, %v1972
    %v1974 = vand.u32 %v1973, 4294901760
    %1975 = vmatpush1.msra.mxu0 %v1974
    %1976 = vmatprep.subr.mxu0 0.0
    %v1977 = vand.u32 %v55, 4294901760
    %v1978 = vsub.f32 %v55, %v1977
    %v1979 = vand.u32 %v1978, 4294901760
    %v1980 = vsub.f32 %v1978, %v1979
    %v1981 = vand.u32 %v1980, 4294901760
    %1982 = vmatpush1.msra.mxu0 %v1981
    %1983 = vmatprep.subr.mxu0 0.0
    %v1984 = vand.u32 %v56, 4294901760
    %v1985 = vsub.f32 %v56, %v1984
    %v1986 = vand.u32 %v1985, 4294901760
    %v1987 = vsub.f32 %v1985, %v1986
    %v1988 = vand.u32 %v1987, 4294901760
    %1989 = vmatpush1.msra.mxu0 %v1988
    %1990 = vmatprep.subr.mxu0 0.0
    %v1991 = vand.u32 %v57, 4294901760
    %v1992 = vsub.f32 %v57, %v1991
    %v1993 = vand.u32 %v1992, 4294901760
    %v1994 = vsub.f32 %v1992, %v1993
    %v1995 = vand.u32 %v1994, 4294901760
    %1996 = vmatpush1.msra.mxu0 %v1995
    %1997 = vmatprep.subr.mxu0 0.0
    %v1998 = vand.u32 %v58, 4294901760
    %v1999 = vsub.f32 %v58, %v1998
    %v2000 = vand.u32 %v1999, 4294901760
    %v2001 = vsub.f32 %v1999, %v2000
    %v2002 = vand.u32 %v2001, 4294901760
    %2003 = vmatpush1.msra.mxu0 %v2002
    %2004 = vmatprep.subr.mxu0 0.0
    %v2005 = vand.u32 %v59, 4294901760
    %v2006 = vsub.f32 %v59, %v2005
    %v2007 = vand.u32 %v2006, 4294901760
    %v2008 = vsub.f32 %v2006, %v2007
    %v2009 = vand.u32 %v2008, 4294901760
    %2010 = vmatpush1.msra.mxu0 %v2009
    %2011 = vmatprep.subr.mxu0 0.0
    %v2012 = vand.u32 %v60, 4294901760
    %v2013 = vsub.f32 %v60, %v2012
    %v2014 = vand.u32 %v2013, 4294901760
    %v2015 = vsub.f32 %v2013, %v2014
    %v2016 = vand.u32 %v2015, 4294901760
    %2017 = vmatpush1.msra.mxu0 %v2016
    %2018 = vmatprep.subr.mxu0 0.0
    %v2019 = vand.u32 %v61, 4294901760
    %v2020 = vsub.f32 %v61, %v2019
    %v2021 = vand.u32 %v2020, 4294901760
    %v2022 = vsub.f32 %v2020, %v2021
    %v2023 = vand.u32 %v2022, 4294901760
    %2024 = vmatpush1.msra.mxu0 %v2023
    %2025 = vmatprep.subr.mxu0 0.0
    %v2026 = vand.u32 %v62, 4294901760
    %v2027 = vsub.f32 %v62, %v2026
    %v2028 = vand.u32 %v2027, 4294901760
    %v2029 = vsub.f32 %v2027, %v2028
    %v2030 = vand.u32 %v2029, 4294901760
    %2031 = vmatpush1.msra.mxu0 %v2030
    %2032 = vmatprep.subr.mxu0 0.0
    %v2033 = vand.u32 %v63, 4294901760
    %v2034 = vsub.f32 %v63, %v2033
    %v2035 = vand.u32 %v2034, 4294901760
    %v2036 = vsub.f32 %v2034, %v2035
    %v2037 = vand.u32 %v2036, 4294901760
    %2038 = vmatpush1.msra.mxu0 %v2037
    %2039 = vmatprep.subr.mxu0 0.0
    %v2040 = vand.u32 %v64, 4294901760
    %v2041 = vsub.f32 %v64, %v2040
    %v2042 = vand.u32 %v2041, 4294901760
    %v2043 = vsub.f32 %v2041, %v2042
    %v2044 = vand.u32 %v2043, 4294901760
    %2045 = vmatpush1.msra.mxu0 %v2044
    %2046 = vmatprep.subr.mxu0 0.0
    %v2047 = vand.u32 %v65, 4294901760
    %v2048 = vsub.f32 %v65, %v2047
    %v2049 = vand.u32 %v2048, 4294901760
    %v2050 = vsub.f32 %v2048, %v2049
    %v2051 = vand.u32 %v2050, 4294901760
    %2052 = vmatpush1.msra.mxu0 %v2051
    %2053 = vmatprep.subr.mxu0 0.0
    %v2054 = vand.u32 %v66, 4294901760
    %v2055 = vsub.f32 %v66, %v2054
    %v2056 = vand.u32 %v2055, 4294901760
    %v2057 = vsub.f32 %v2055, %v2056
    %v2058 = vand.u32 %v2057, 4294901760
    %2059 = vmatpush1.msra.mxu0 %v2058
    %2060 = vmatprep.subr.mxu0 0.0
    %v2061 = vand.u32 %v67, 4294901760
    %v2062 = vsub.f32 %v67, %v2061
    %v2063 = vand.u32 %v2062, 4294901760
    %v2064 = vsub.f32 %v2062, %v2063
    %v2065 = vand.u32 %v2064, 4294901760
    %2066 = vmatpush1.msra.mxu0 %v2065
    %2067 = vmatprep.subr.mxu0 0.0
    %2068 = vmatpush1.msra.mxu0 0.0
    %2069 = vmatprep.subr.mxu0 0.0
    %2070 = vmatpush1.msra.mxu0 0.0
    %2071 = vmatprep.subr.mxu0 0.0
    %2072 = vmatpush1.msra.mxu0 0.0
    %2073 = vmatprep.subr.mxu0 0.0
    %2074 = vmatpush1.msra.mxu0 0.0
    %2075 = vmatprep.subr.mxu0 0.0
    %2076 = vmatpush1.msra.mxu0 0.0
    %2077 = vmatprep.subr.mxu0 0.0
    %2078 = vmatpush1.msra.mxu0 0.0
    %2079 = vmatprep.subr.mxu0 0.0
    %2080 = vmatpush1.msra.mxu0 0.0
    %2081 = vmatprep.subr.mxu0 0.0
    %2082 = vmatpush1.msra.mxu0 0.0
    %2083 = vmatprep.subr.mxu0 0.0
    %2084 = vmatpush1.msra.mxu0 0.0
    %2085 = vmatprep.subr.mxu0 0.0
    %2086 = vmatpush1.msra.mxu0 0.0
    %2087 = vmatprep.subr.mxu0 0.0
    %2088 = vmatpush1.msra.mxu0 0.0
    %2089 = vmatprep.subr.mxu0 0.0
    %2090 = vmatpush1.msra.mxu0 0.0
    %2091 = vmatprep.subr.mxu0 0.0
    %2092 = vmatpush1.msra.mxu0 0.0
    %2093 = vmatprep.subr.mxu0 0.0
    %2094 = vmatpush1.msra.mxu0 0.0
    %2095 = vmatprep.subr.mxu0 0.0
    %2096 = vmatpush1.msra.mxu0 0.0
    %2097 = vmatprep.subr.mxu0 0.0
    %2098 = vmatpush1.msra.mxu0 0.0
    %2099 = vmatprep.mubr.f32.mxu0 0.0
    %v2100 = vand.u32 %v1862, 4294901760
    %2101 = vmatmul.mubr.f32.gmra.mrb[0].mxu0 %v2100
    %v2102 = vpop.f32.mrb[0].mxu0
    %v2103 = vadd.f32 %v1952, %v2102
    %v2104 = vpop.f32.mrb[0].mxu0
    %2105 = vdwg.mxu0
    %2106 = vmatprep.subr.mxu0 0.0
    %v2107 = vand.u32 %v52, 4294901760
    %v2108 = vsub.f32 %v52, %v2107
    %2109 = vmatpush1.msra.mxu0 %v2108
    %2110 = vmatprep.subr.mxu0 0.0
    %v2111 = vand.u32 %v53, 4294901760
    %v2112 = vsub.f32 %v53, %v2111
    %2113 = vmatpush1.msra.mxu0 %v2112
    %2114 = vmatprep.subr.mxu0 0.0
    %v2115 = vand.u32 %v54, 4294901760
    %v2116 = vsub.f32 %v54, %v2115
    %2117 = vmatpush1.msra.mxu0 %v2116
    %2118 = vmatprep.subr.mxu0 0.0
    %v2119 = vand.u32 %v55, 4294901760
    %v2120 = vsub.f32 %v55, %v2119
    %2121 = vmatpush1.msra.mxu0 %v2120
    %2122 = vmatprep.subr.mxu0 0.0
    %v2123 = vand.u32 %v56, 4294901760
    %v2124 = vsub.f32 %v56, %v2123
    %2125 = vmatpush1.msra.mxu0 %v2124
    %2126 = vmatprep.subr.mxu0 0.0
    %v2127 = vand.u32 %v57, 4294901760
    %v2128 = vsub.f32 %v57, %v2127
    %2129 = vmatpush1.msra.mxu0 %v2128
    %2130 = vmatprep.subr.mxu0 0.0
    %v2131 = vand.u32 %v58, 4294901760
    %v2132 = vsub.f32 %v58, %v2131
    %2133 = vmatpush1.msra.mxu0 %v2132
    %2134 = vmatprep.subr.mxu0 0.0
    %v2135 = vand.u32 %v59, 4294901760
    %v2136 = vsub.f32 %v59, %v2135
    %2137 = vmatpush1.msra.mxu0 %v2136
    %2138 = vmatprep.subr.mxu0 0.0
    %v2139 = vand.u32 %v60, 4294901760
    %v2140 = vsub.f32 %v60, %v2139
    %2141 = vmatpush1.msra.mxu0 %v2140
    %2142 = vmatprep.subr.mxu0 0.0
    %v2143 = vand.u32 %v61, 4294901760
    %v2144 = vsub.f32 %v61, %v2143
    %2145 = vmatpush1.msra.mxu0 %v2144
    %2146 = vmatprep.subr.mxu0 0.0
    %v2147 = vand.u32 %v62, 4294901760
    %v2148 = vsub.f32 %v62, %v2147
    %2149 = vmatpush1.msra.mxu0 %v2148
    %2150 = vmatprep.subr.mxu0 0.0
    %v2151 = vand.u32 %v63, 4294901760
    %v2152 = vsub.f32 %v63, %v2151
    %2153 = vmatpush1.msra.mxu0 %v2152
    %2154 = vmatprep.subr.mxu0 0.0
    %v2155 = vand.u32 %v64, 4294901760
    %v2156 = vsub.f32 %v64, %v2155
    %2157 = vmatpush1.msra.mxu0 %v2156
    %2158 = vmatprep.subr.mxu0 0.0
    %v2159 = vand.u32 %v65, 4294901760
    %v2160 = vsub.f32 %v65, %v2159
    %2161 = vmatpush1.msra.mxu0 %v2160
    %2162 = vmatprep.subr.mxu0 0.0
    %v2163 = vand.u32 %v66, 4294901760
    %v2164 = vsub.f32 %v66, %v2163
    %2165 = vmatpush1.msra.mxu0 %v2164
    %2166 = vmatprep.subr.mxu0 0.0
    %v2167 = vand.u32 %v67, 4294901760
    %v2168 = vsub.f32 %v67, %v2167
    %2169 = vmatpush1.msra.mxu0 %v2168
    %2170 = vmatprep.subr.mxu0 0.0
    %2171 = vmatpush1.msra.mxu0 0.0
    %2172 = vmatprep.subr.mxu0 0.0
    %2173 = vmatpush1.msra.mxu0 0.0
    %2174 = vmatprep.subr.mxu0 0.0
    %2175 = vmatpush1.msra.mxu0 0.0
    %2176 = vmatprep.subr.mxu0 0.0
    %2177 = vmatpush1.msra.mxu0 0.0
    %2178 = vmatprep.subr.mxu0 0.0
    %2179 = vmatpush1.msra.mxu0 0.0
    %2180 = vmatprep.subr.mxu0 0.0
    %2181 = vmatpush1.msra.mxu0 0.0
    %2182 = vmatprep.subr.mxu0 0.0
    %2183 = vmatpush1.msra.mxu0 0.0
    %2184 = vmatprep.subr.mxu0 0.0
    %2185 = vmatpush1.msra.mxu0 0.0
    %2186 = vmatprep.subr.mxu0 0.0
    %2187 = vmatpush1.msra.mxu0 0.0
    %2188 = vmatprep.subr.mxu0 0.0
    %2189 = vmatpush1.msra.mxu0 0.0
    %2190 = vmatprep.subr.mxu0 0.0
    %2191 = vmatpush1.msra.mxu0 0.0
    %2192 = vmatprep.subr.mxu0 0.0
    %2193 = vmatpush1.msra.mxu0 0.0
    %2194 = vmatprep.subr.mxu0 0.0
    %2195 = vmatpush1.msra.mxu0 0.0
    %2196 = vmatprep.subr.mxu0 0.0
    %2197 = vmatpush1.msra.mxu0 0.0
    %2198 = vmatprep.subr.mxu0 0.0
    %2199 = vmatpush1.msra.mxu0 0.0
    %2200 = vmatprep.subr.mxu0 0.0
    %2201 = vmatpush1.msra.mxu0 0.0
    %2202 = vmatprep.mubr.f32.mxu0 0.0
    %v2203 = vand.u32 %v1862, 4294901760
    %v2204 = vsub.f32 %v1862, %v2203
    %2205 = vmatmul.mubr.f32.gmra.mrb[0].mxu0 %v2204
    %v2206 = vpop.f32.mrb[0].mxu0
    %v2207 = vadd.f32 %v2103, %v2206
    %v2208 = vpop.f32.mrb[0].mxu0
    %2209 = vdwg.mxu0
    %2210 = vmatprep.subr.mxu0 0.0
    %v2211 = vand.u32 %v52, 4294901760
    %2212 = vmatpush1.msra.mxu0 %v2211
    %2213 = vmatprep.subr.mxu0 0.0
    %v2214 = vand.u32 %v53, 4294901760
    %2215 = vmatpush1.msra.mxu0 %v2214
    %2216 = vmatprep.subr.mxu0 0.0
    %v2217 = vand.u32 %v54, 4294901760
    %2218 = vmatpush1.msra.mxu0 %v2217
    %2219 = vmatprep.subr.mxu0 0.0
    %v2220 = vand.u32 %v55, 4294901760
    %2221 = vmatpush1.msra.mxu0 %v2220
    %2222 = vmatprep.subr.mxu0 0.0
    %v2223 = vand.u32 %v56, 4294901760
    %2224 = vmatpush1.msra.mxu0 %v2223
    %2225 = vmatprep.subr.mxu0 0.0
    %v2226 = vand.u32 %v57, 4294901760
    %2227 = vmatpush1.msra.mxu0 %v2226
    %2228 = vmatprep.subr.mxu0 0.0
    %v2229 = vand.u32 %v58, 4294901760
    %2230 = vmatpush1.msra.mxu0 %v2229
    %2231 = vmatprep.subr.mxu0 0.0
    %v2232 = vand.u32 %v59, 4294901760
    %2233 = vmatpush1.msra.mxu0 %v2232
    %2234 = vmatprep.subr.mxu0 0.0
    %v2235 = vand.u32 %v60, 4294901760
    %2236 = vmatpush1.msra.mxu0 %v2235
    %2237 = vmatprep.subr.mxu0 0.0
    %v2238 = vand.u32 %v61, 4294901760
    %2239 = vmatpush1.msra.mxu0 %v2238
    %2240 = vmatprep.subr.mxu0 0.0
    %v2241 = vand.u32 %v62, 4294901760
    %2242 = vmatpush1.msra.mxu0 %v2241
    %2243 = vmatprep.subr.mxu0 0.0
    %v2244 = vand.u32 %v63, 4294901760
    %2245 = vmatpush1.msra.mxu0 %v2244
    %2246 = vmatprep.subr.mxu0 0.0
    %v2247 = vand.u32 %v64, 4294901760
    %2248 = vmatpush1.msra.mxu0 %v2247
    %2249 = vmatprep.subr.mxu0 0.0
    %v2250 = vand.u32 %v65, 4294901760
    %2251 = vmatpush1.msra.mxu0 %v2250
    %2252 = vmatprep.subr.mxu0 0.0
    %v2253 = vand.u32 %v66, 4294901760
    %2254 = vmatpush1.msra.mxu0 %v2253
    %2255 = vmatprep.subr.mxu0 0.0
    %v2256 = vand.u32 %v67, 4294901760
    %2257 = vmatpush1.msra.mxu0 %v2256
    %2258 = vmatprep.subr.mxu0 0.0
    %2259 = vmatpush1.msra.mxu0 0.0
    %2260 = vmatprep.subr.mxu0 0.0
    %2261 = vmatpush1.msra.mxu0 0.0
    %2262 = vmatprep.subr.mxu0 0.0
    %2263 = vmatpush1.msra.mxu0 0.0
    %2264 = vmatprep.subr.mxu0 0.0
    %2265 = vmatpush1.msra.mxu0 0.0
    %2266 = vmatprep.subr.mxu0 0.0
    %2267 = vmatpush1.msra.mxu0 0.0
    %2268 = vmatprep.subr.mxu0 0.0
    %2269 = vmatpush1.msra.mxu0 0.0
    %2270 = vmatprep.subr.mxu0 0.0
    %2271 = vmatpush1.msra.mxu0 0.0
    %2272 = vmatprep.subr.mxu0 0.0
    %2273 = vmatpush1.msra.mxu0 0.0
    %2274 = vmatprep.subr.mxu0 0.0
    %2275 = vmatpush1.msra.mxu0 0.0
    %2276 = vmatprep.subr.mxu0 0.0
    %2277 = vmatpush1.msra.mxu0 0.0
    %2278 = vmatprep.subr.mxu0 0.0
    %2279 = vmatpush1.msra.mxu0 0.0
    %2280 = vmatprep.subr.mxu0 0.0
    %2281 = vmatpush1.msra.mxu0 0.0
    %2282 = vmatprep.subr.mxu0 0.0
    %2283 = vmatpush1.msra.mxu0 0.0
    %2284 = vmatprep.subr.mxu0 0.0
    %2285 = vmatpush1.msra.mxu0 0.0
    %2286 = vmatprep.subr.mxu0 0.0
    %2287 = vmatpush1.msra.mxu0 0.0
    %2288 = vmatprep.subr.mxu0 0.0
    %2289 = vmatpush1.msra.mxu0 0.0
    %2290 = vmatprep.mubr.f32.mxu0 0.0
    %v2291 = vand.u32 %v1862, 4294901760
    %v2292 = vsub.f32 %v1862, %v2291
    %v2293 = vand.u32 %v2292, 4294901760
    %2294 = vmatmul.mubr.f32.gmra.mrb[0].mxu0 %v2293
    %v2295 = vpop.f32.mrb[0].mxu0
    %v2296 = vadd.f32 %v2207, %v2295
    %v2297 = vpop.f32.mrb[0].mxu0
    %2298 = vdwg.mxu0
    %2299 = vmatprep.subr.mxu0 0.0
    %v2300 = vand.u32 %v52, 4294901760
    %v2301 = vsub.f32 %v52, %v2300
    %v2302 = vand.u32 %v2301, 4294901760
    %2303 = vmatpush1.msra.mxu0 %v2302
    %2304 = vmatprep.subr.mxu0 0.0
    %v2305 = vand.u32 %v53, 4294901760
    %v2306 = vsub.f32 %v53, %v2305
    %v2307 = vand.u32 %v2306, 4294901760
    %2308 = vmatpush1.msra.mxu0 %v2307
    %2309 = vmatprep.subr.mxu0 0.0
    %v2310 = vand.u32 %v54, 4294901760
    %v2311 = vsub.f32 %v54, %v2310
    %v2312 = vand.u32 %v2311, 4294901760
    %2313 = vmatpush1.msra.mxu0 %v2312
    %2314 = vmatprep.subr.mxu0 0.0
    %v2315 = vand.u32 %v55, 4294901760
    %v2316 = vsub.f32 %v55, %v2315
    %v2317 = vand.u32 %v2316, 4294901760
    %2318 = vmatpush1.msra.mxu0 %v2317
    %2319 = vmatprep.subr.mxu0 0.0
    %v2320 = vand.u32 %v56, 4294901760
    %v2321 = vsub.f32 %v56, %v2320
    %v2322 = vand.u32 %v2321, 4294901760
    %2323 = vmatpush1.msra.mxu0 %v2322
    %2324 = vmatprep.subr.mxu0 0.0
    %v2325 = vand.u32 %v57, 4294901760
    %v2326 = vsub.f32 %v57, %v2325
    %v2327 = vand.u32 %v2326, 4294901760
    %2328 = vmatpush1.msra.mxu0 %v2327
    %2329 = vmatprep.subr.mxu0 0.0
    %v2330 = vand.u32 %v58, 4294901760
    %v2331 = vsub.f32 %v58, %v2330
    %v2332 = vand.u32 %v2331, 4294901760
    %2333 = vmatpush1.msra.mxu0 %v2332
    %2334 = vmatprep.subr.mxu0 0.0
    %v2335 = vand.u32 %v59, 4294901760
    %v2336 = vsub.f32 %v59, %v2335
    %v2337 = vand.u32 %v2336, 4294901760
    %2338 = vmatpush1.msra.mxu0 %v2337
    %2339 = vmatprep.subr.mxu0 0.0
    %v2340 = vand.u32 %v60, 4294901760
    %v2341 = vsub.f32 %v60, %v2340
    %v2342 = vand.u32 %v2341, 4294901760
    %2343 = vmatpush1.msra.mxu0 %v2342
    %2344 = vmatprep.subr.mxu0 0.0
    %v2345 = vand.u32 %v61, 4294901760
    %v2346 = vsub.f32 %v61, %v2345
    %v2347 = vand.u32 %v2346, 4294901760
    %2348 = vmatpush1.msra.mxu0 %v2347
    %2349 = vmatprep.subr.mxu0 0.0
    %v2350 = vand.u32 %v62, 4294901760
    %v2351 = vsub.f32 %v62, %v2350
    %v2352 = vand.u32 %v2351, 4294901760
    %2353 = vmatpush1.msra.mxu0 %v2352
    %2354 = vmatprep.subr.mxu0 0.0
    %v2355 = vand.u32 %v63, 4294901760
    %v2356 = vsub.f32 %v63, %v2355
    %v2357 = vand.u32 %v2356, 4294901760
    %2358 = vmatpush1.msra.mxu0 %v2357
    %2359 = vmatprep.subr.mxu0 0.0
    %v2360 = vand.u32 %v64, 4294901760
    %v2361 = vsub.f32 %v64, %v2360
    %v2362 = vand.u32 %v2361, 4294901760
    %2363 = vmatpush1.msra.mxu0 %v2362
    %2364 = vmatprep.subr.mxu0 0.0
    %v2365 = vand.u32 %v65, 4294901760
    %v2366 = vsub.f32 %v65, %v2365
    %v2367 = vand.u32 %v2366, 4294901760
    %2368 = vmatpush1.msra.mxu0 %v2367
    %2369 = vmatprep.subr.mxu0 0.0
    %v2370 = vand.u32 %v66, 4294901760
    %v2371 = vsub.f32 %v66, %v2370
    %v2372 = vand.u32 %v2371, 4294901760
    %2373 = vmatpush1.msra.mxu0 %v2372
    %2374 = vmatprep.subr.mxu0 0.0
    %v2375 = vand.u32 %v67, 4294901760
    %v2376 = vsub.f32 %v67, %v2375
    %v2377 = vand.u32 %v2376, 4294901760
    %2378 = vmatpush1.msra.mxu0 %v2377
    %2379 = vmatprep.subr.mxu0 0.0
    %2380 = vmatpush1.msra.mxu0 0.0
    %2381 = vmatprep.subr.mxu0 0.0
    %2382 = vmatpush1.msra.mxu0 0.0
    %2383 = vmatprep.subr.mxu0 0.0
    %2384 = vmatpush1.msra.mxu0 0.0
    %2385 = vmatprep.subr.mxu0 0.0
    %2386 = vmatpush1.msra.mxu0 0.0
    %2387 = vmatprep.subr.mxu0 0.0
    %2388 = vmatpush1.msra.mxu0 0.0
    %2389 = vmatprep.subr.mxu0 0.0
    %2390 = vmatpush1.msra.mxu0 0.0
    %2391 = vmatprep.subr.mxu0 0.0
    %2392 = vmatpush1.msra.mxu0 0.0
    %2393 = vmatprep.subr.mxu0 0.0
    %2394 = vmatpush1.msra.mxu0 0.0
    %2395 = vmatprep.subr.mxu0 0.0
    %2396 = vmatpush1.msra.mxu0 0.0
    %2397 = vmatprep.subr.mxu0 0.0
    %2398 = vmatpush1.msra.mxu0 0.0
    %2399 = vmatprep.subr.mxu0 0.0
    %2400 = vmatpush1.msra.mxu0 0.0
    %2401 = vmatprep.subr.mxu0 0.0
    %2402 = vmatpush1.msra.mxu0 0.0
    %2403 = vmatprep.subr.mxu0 0.0
    %2404 = vmatpush1.msra.mxu0 0.0
    %2405 = vmatprep.subr.mxu0 0.0
    %2406 = vmatpush1.msra.mxu0 0.0
    %2407 = vmatprep.subr.mxu0 0.0
    %2408 = vmatpush1.msra.mxu0 0.0
    %2409 = vmatprep.subr.mxu0 0.0
    %2410 = vmatpush1.msra.mxu0 0.0
    %2411 = vmatprep.mubr.f32.mxu0 0.0
    %v2412 = vand.u32 %v1862, 4294901760
    %2413 = vmatmul.mubr.f32.gmra.mrb[0].mxu0 %v2412
    %v2414 = vpop.f32.mrb[0].mxu0
    %v2415 = vadd.f32 %v2296, %v2414
    %v2416 = vpop.f32.mrb[0].mxu0
    %2417 = vdwg.mxu0
    %2418 = vmatprep.subr.mxu0 0.0
    %v2419 = vand.u32 %v52, 4294901760
    %2420 = vmatpush1.msra.mxu0 %v2419
    %2421 = vmatprep.subr.mxu0 0.0
    %v2422 = vand.u32 %v53, 4294901760
    %2423 = vmatpush1.msra.mxu0 %v2422
    %2424 = vmatprep.subr.mxu0 0.0
    %v2425 = vand.u32 %v54, 4294901760
    %2426 = vmatpush1.msra.mxu0 %v2425
    %2427 = vmatprep.subr.mxu0 0.0
    %v2428 = vand.u32 %v55, 4294901760
    %2429 = vmatpush1.msra.mxu0 %v2428
    %2430 = vmatprep.subr.mxu0 0.0
    %v2431 = vand.u32 %v56, 4294901760
    %2432 = vmatpush1.msra.mxu0 %v2431
    %2433 = vmatprep.subr.mxu0 0.0
    %v2434 = vand.u32 %v57, 4294901760
    %2435 = vmatpush1.msra.mxu0 %v2434
    %2436 = vmatprep.subr.mxu0 0.0
    %v2437 = vand.u32 %v58, 4294901760
    %2438 = vmatpush1.msra.mxu0 %v2437
    %2439 = vmatprep.subr.mxu0 0.0
    %v2440 = vand.u32 %v59, 4294901760
    %2441 = vmatpush1.msra.mxu0 %v2440
    %2442 = vmatprep.subr.mxu0 0.0
    %v2443 = vand.u32 %v60, 4294901760
    %2444 = vmatpush1.msra.mxu0 %v2443
    %2445 = vmatprep.subr.mxu0 0.0
    %v2446 = vand.u32 %v61, 4294901760
    %2447 = vmatpush1.msra.mxu0 %v2446
    %2448 = vmatprep.subr.mxu0 0.0
    %v2449 = vand.u32 %v62, 4294901760
    %2450 = vmatpush1.msra.mxu0 %v2449
    %2451 = vmatprep.subr.mxu0 0.0
    %v2452 = vand.u32 %v63, 4294901760
    %2453 = vmatpush1.msra.mxu0 %v2452
    %2454 = vmatprep.subr.mxu0 0.0
    %v2455 = vand.u32 %v64, 4294901760
    %2456 = vmatpush1.msra.mxu0 %v2455
    %2457 = vmatprep.subr.mxu0 0.0
    %v2458 = vand.u32 %v65, 4294901760
    %2459 = vmatpush1.msra.mxu0 %v2458
    %2460 = vmatprep.subr.mxu0 0.0
    %v2461 = vand.u32 %v66, 4294901760
    %2462 = vmatpush1.msra.mxu0 %v2461
    %2463 = vmatprep.subr.mxu0 0.0
    %v2464 = vand.u32 %v67, 4294901760
    %2465 = vmatpush1.msra.mxu0 %v2464
    %2466 = vmatprep.subr.mxu0 0.0
    %2467 = vmatpush1.msra.mxu0 0.0
    %2468 = vmatprep.subr.mxu0 0.0
    %2469 = vmatpush1.msra.mxu0 0.0
    %2470 = vmatprep.subr.mxu0 0.0
    %2471 = vmatpush1.msra.mxu0 0.0
    %2472 = vmatprep.subr.mxu0 0.0
    %2473 = vmatpush1.msra.mxu0 0.0
    %2474 = vmatprep.subr.mxu0 0.0
    %2475 = vmatpush1.msra.mxu0 0.0
    %2476 = vmatprep.subr.mxu0 0.0
    %2477 = vmatpush1.msra.mxu0 0.0
    %2478 = vmatprep.subr.mxu0 0.0
    %2479 = vmatpush1.msra.mxu0 0.0
    %2480 = vmatprep.subr.mxu0 0.0
    %2481 = vmatpush1.msra.mxu0 0.0
    %2482 = vmatprep.subr.mxu0 0.0
    %2483 = vmatpush1.msra.mxu0 0.0
    %2484 = vmatprep.subr.mxu0 0.0
    %2485 = vmatpush1.msra.mxu0 0.0
    %2486 = vmatprep.subr.mxu0 0.0
    %2487 = vmatpush1.msra.mxu0 0.0
    %2488 = vmatprep.subr.mxu0 0.0
    %2489 = vmatpush1.msra.mxu0 0.0
    %2490 = vmatprep.subr.mxu0 0.0
    %2491 = vmatpush1.msra.mxu0 0.0
    %2492 = vmatprep.subr.mxu0 0.0
    %2493 = vmatpush1.msra.mxu0 0.0
    %2494 = vmatprep.subr.mxu0 0.0
    %2495 = vmatpush1.msra.mxu0 0.0
    %2496 = vmatprep.subr.mxu0 0.0
    %2497 = vmatpush1.msra.mxu0 0.0
    %2498 = vmatprep.mubr.f32.mxu0 0.0
    %v2499 = vand.u32 %v1862, 4294901760
    %2500 = vmatmul.mubr.f32.gmra.mrb[0].mxu0 %v2499
    %v2501 = vpop.f32.mrb[0].mxu0
    %v2502 = vadd.f32 %v2415, %v2501
    %v2503 = vpop.f32.mrb[0].mxu0
    %2504 = vdwg.mxu0
    %v2505 = vmul.f32 %v86, %v2502
    %v2506 = vmul.f32 %v2505, 0.25
    %v2507 = vadd.f32 %v1863, %v2506
    %2508 = vmatprep.subr.mxu0 0.0
    %v2509 = vand.u32 %v52, 4294901760
    %2510 = vmatpush1.msra.mxu0 %v2509
    %2511 = vmatprep.subr.mxu0 0.0
    %v2512 = vand.u32 %v53, 4294901760
    %2513 = vmatpush1.msra.mxu0 %v2512
    %2514 = vmatprep.subr.mxu0 0.0
    %v2515 = vand.u32 %v54, 4294901760
    %2516 = vmatpush1.msra.mxu0 %v2515
    %2517 = vmatprep.subr.mxu0 0.0
    %v2518 = vand.u32 %v55, 4294901760
    %2519 = vmatpush1.msra.mxu0 %v2518
    %2520 = vmatprep.subr.mxu0 0.0
    %v2521 = vand.u32 %v56, 4294901760
    %2522 = vmatpush1.msra.mxu0 %v2521
    %2523 = vmatprep.subr.mxu0 0.0
    %v2524 = vand.u32 %v57, 4294901760
    %2525 = vmatpush1.msra.mxu0 %v2524
    %2526 = vmatprep.subr.mxu0 0.0
    %v2527 = vand.u32 %v58, 4294901760
    %2528 = vmatpush1.msra.mxu0 %v2527
    %2529 = vmatprep.subr.mxu0 0.0
    %v2530 = vand.u32 %v59, 4294901760
    %2531 = vmatpush1.msra.mxu0 %v2530
    %2532 = vmatprep.subr.mxu0 0.0
    %v2533 = vand.u32 %v60, 4294901760
    %2534 = vmatpush1.msra.mxu0 %v2533
    %2535 = vmatprep.subr.mxu0 0.0
    %v2536 = vand.u32 %v61, 4294901760
    %2537 = vmatpush1.msra.mxu0 %v2536
    %2538 = vmatprep.subr.mxu0 0.0
    %v2539 = vand.u32 %v62, 4294901760
    %2540 = vmatpush1.msra.mxu0 %v2539
    %2541 = vmatprep.subr.mxu0 0.0
    %v2542 = vand.u32 %v63, 4294901760
    %2543 = vmatpush1.msra.mxu0 %v2542
    %2544 = vmatprep.subr.mxu0 0.0
    %v2545 = vand.u32 %v64, 4294901760
    %2546 = vmatpush1.msra.mxu0 %v2545
    %2547 = vmatprep.subr.mxu0 0.0
    %v2548 = vand.u32 %v65, 4294901760
    %2549 = vmatpush1.msra.mxu0 %v2548
    %2550 = vmatprep.subr.mxu0 0.0
    %v2551 = vand.u32 %v66, 4294901760
    %2552 = vmatpush1.msra.mxu0 %v2551
    %2553 = vmatprep.subr.mxu0 0.0
    %v2554 = vand.u32 %v67, 4294901760
    %2555 = vmatpush1.msra.mxu0 %v2554
    %2556 = vmatprep.subr.mxu0 0.0
    %2557 = vmatpush1.msra.mxu0 0.0
    %2558 = vmatprep.subr.mxu0 0.0
    %2559 = vmatpush1.msra.mxu0 0.0
    %2560 = vmatprep.subr.mxu0 0.0
    %2561 = vmatpush1.msra.mxu0 0.0
    %2562 = vmatprep.subr.mxu0 0.0
    %2563 = vmatpush1.msra.mxu0 0.0
    %2564 = vmatprep.subr.mxu0 0.0
    %2565 = vmatpush1.msra.mxu0 0.0
    %2566 = vmatprep.subr.mxu0 0.0
    %2567 = vmatpush1.msra.mxu0 0.0
    %2568 = vmatprep.subr.mxu0 0.0
    %2569 = vmatpush1.msra.mxu0 0.0
    %2570 = vmatprep.subr.mxu0 0.0
    %2571 = vmatpush1.msra.mxu0 0.0
    %2572 = vmatprep.subr.mxu0 0.0
    %2573 = vmatpush1.msra.mxu0 0.0
    %2574 = vmatprep.subr.mxu0 0.0
    %2575 = vmatpush1.msra.mxu0 0.0
    %2576 = vmatprep.subr.mxu0 0.0
    %2577 = vmatpush1.msra.mxu0 0.0
    %2578 = vmatprep.subr.mxu0 0.0
    %2579 = vmatpush1.msra.mxu0 0.0
    %2580 = vmatprep.subr.mxu0 0.0
    %2581 = vmatpush1.msra.mxu0 0.0
    %2582 = vmatprep.subr.mxu0 0.0
    %2583 = vmatpush1.msra.mxu0 0.0
    %2584 = vmatprep.subr.mxu0 0.0
    %2585 = vmatpush1.msra.mxu0 0.0
    %2586 = vmatprep.subr.mxu0 0.0
    %2587 = vmatpush1.msra.mxu0 0.0
    %2588 = vmatprep.mubr.f32.mxu0 0.0
    %v2589 = vand.u32 %v2506, 4294901760
    %v2590 = vsub.f32 %v2506, %v2589
    %v2591 = vand.u32 %v2590, 4294901760
    %v2592 = vsub.f32 %v2590, %v2591
    %v2593 = vand.u32 %v2592, 4294901760
    %2594 = vmatmul.mubr.f32.gmra.mrb[0].mxu0 %v2593
    %v2595 = vpop.f32.mrb[0].mxu0
    %v2596 = vadd.f32 0.0, %v2595
    %v2597 = vpop.f32.mrb[0].mxu0
    %2598 = vdwg.mxu0
    %2599 = vmatprep.subr.mxu0 0.0
    %v2600 = vand.u32 %v52, 4294901760
    %v2601 = vsub.f32 %v52, %v2600
    %v2602 = vand.u32 %v2601, 4294901760
    %v2603 = vsub.f32 %v2601, %v2602
    %v2604 = vand.u32 %v2603, 4294901760
    %2605 = vmatpush1.msra.mxu0 %v2604
    %2606 = vmatprep.subr.mxu0 0.0
    %v2607 = vand.u32 %v53, 4294901760
    %v2608 = vsub.f32 %v53, %v2607
    %v2609 = vand.u32 %v2608, 4294901760
    %v2610 = vsub.f32 %v2608, %v2609
    %v2611 = vand.u32 %v2610, 4294901760
    %2612 = vmatpush1.msra.mxu0 %v2611
    %2613 = vmatprep.subr.mxu0 0.0
    %v2614 = vand.u32 %v54, 4294901760
    %v2615 = vsub.f32 %v54, %v2614
    %v2616 = vand.u32 %v2615, 4294901760
    %v2617 = vsub.f32 %v2615, %v2616
    %v2618 = vand.u32 %v2617, 4294901760
    %2619 = vmatpush1.msra.mxu0 %v2618
    %2620 = vmatprep.subr.mxu0 0.0
    %v2621 = vand.u32 %v55, 4294901760
    %v2622 = vsub.f32 %v55, %v2621
    %v2623 = vand.u32 %v2622, 4294901760
    %v2624 = vsub.f32 %v2622, %v2623
    %v2625 = vand.u32 %v2624, 4294901760
    %2626 = vmatpush1.msra.mxu0 %v2625
    %2627 = vmatprep.subr.mxu0 0.0
    %v2628 = vand.u32 %v56, 4294901760
    %v2629 = vsub.f32 %v56, %v2628
    %v2630 = vand.u32 %v2629, 4294901760
    %v2631 = vsub.f32 %v2629, %v2630
    %v2632 = vand.u32 %v2631, 4294901760
    %2633 = vmatpush1.msra.mxu0 %v2632
    %2634 = vmatprep.subr.mxu0 0.0
    %v2635 = vand.u32 %v57, 4294901760
    %v2636 = vsub.f32 %v57, %v2635
    %v2637 = vand.u32 %v2636, 4294901760
    %v2638 = vsub.f32 %v2636, %v2637
    %v2639 = vand.u32 %v2638, 4294901760
    %2640 = vmatpush1.msra.mxu0 %v2639
    %2641 = vmatprep.subr.mxu0 0.0
    %v2642 = vand.u32 %v58, 4294901760
    %v2643 = vsub.f32 %v58, %v2642
    %v2644 = vand.u32 %v2643, 4294901760
    %v2645 = vsub.f32 %v2643, %v2644
    %v2646 = vand.u32 %v2645, 4294901760
    %2647 = vmatpush1.msra.mxu0 %v2646
    %2648 = vmatprep.subr.mxu0 0.0
    %v2649 = vand.u32 %v59, 4294901760
    %v2650 = vsub.f32 %v59, %v2649
    %v2651 = vand.u32 %v2650, 4294901760
    %v2652 = vsub.f32 %v2650, %v2651
    %v2653 = vand.u32 %v2652, 4294901760
    %2654 = vmatpush1.msra.mxu0 %v2653
    %2655 = vmatprep.subr.mxu0 0.0
    %v2656 = vand.u32 %v60, 4294901760
    %v2657 = vsub.f32 %v60, %v2656
    %v2658 = vand.u32 %v2657, 4294901760
    %v2659 = vsub.f32 %v2657, %v2658
    %v2660 = vand.u32 %v2659, 4294901760
    %2661 = vmatpush1.msra.mxu0 %v2660
    %2662 = vmatprep.subr.mxu0 0.0
    %v2663 = vand.u32 %v61, 4294901760
    %v2664 = vsub.f32 %v61, %v2663
    %v2665 = vand.u32 %v2664, 4294901760
    %v2666 = vsub.f32 %v2664, %v2665
    %v2667 = vand.u32 %v2666, 4294901760
    %2668 = vmatpush1.msra.mxu0 %v2667
    %2669 = vmatprep.subr.mxu0 0.0
    %v2670 = vand.u32 %v62, 4294901760
    %v2671 = vsub.f32 %v62, %v2670
    %v2672 = vand.u32 %v2671, 4294901760
    %v2673 = vsub.f32 %v2671, %v2672
    %v2674 = vand.u32 %v2673, 4294901760
    %2675 = vmatpush1.msra.mxu0 %v2674
    %2676 = vmatprep.subr.mxu0 0.0
    %v2677 = vand.u32 %v63, 4294901760
    %v2678 = vsub.f32 %v63, %v2677
    %v2679 = vand.u32 %v2678, 4294901760
    %v2680 = vsub.f32 %v2678, %v2679
    %v2681 = vand.u32 %v2680, 4294901760
    %2682 = vmatpush1.msra.mxu0 %v2681
    %2683 = vmatprep.subr.mxu0 0.0
    %v2684 = vand.u32 %v64, 4294901760
    %v2685 = vsub.f32 %v64, %v2684
    %v2686 = vand.u32 %v2685, 4294901760
    %v2687 = vsub.f32 %v2685, %v2686
    %v2688 = vand.u32 %v2687, 4294901760
    %2689 = vmatpush1.msra.mxu0 %v2688
    %2690 = vmatprep.subr.mxu0 0.0
    %v2691 = vand.u32 %v65, 4294901760
    %v2692 = vsub.f32 %v65, %v2691
    %v2693 = vand.u32 %v2692, 4294901760
    %v2694 = vsub.f32 %v2692, %v2693
    %v2695 = vand.u32 %v2694, 4294901760
    %2696 = vmatpush1.msra.mxu0 %v2695
    %2697 = vmatprep.subr.mxu0 0.0
    %v2698 = vand.u32 %v66, 4294901760
    %v2699 = vsub.f32 %v66, %v2698
    %v2700 = vand.u32 %v2699, 4294901760
    %v2701 = vsub.f32 %v2699, %v2700
    %v2702 = vand.u32 %v2701, 4294901760
    %2703 = vmatpush1.msra.mxu0 %v2702
    %2704 = vmatprep.subr.mxu0 0.0
    %v2705 = vand.u32 %v67, 4294901760
    %v2706 = vsub.f32 %v67, %v2705
    %v2707 = vand.u32 %v2706, 4294901760
    %v2708 = vsub.f32 %v2706, %v2707
    %v2709 = vand.u32 %v2708, 4294901760
    %2710 = vmatpush1.msra.mxu0 %v2709
    %2711 = vmatprep.subr.mxu0 0.0
    %2712 = vmatpush1.msra.mxu0 0.0
    %2713 = vmatprep.subr.mxu0 0.0
    %2714 = vmatpush1.msra.mxu0 0.0
    %2715 = vmatprep.subr.mxu0 0.0
    %2716 = vmatpush1.msra.mxu0 0.0
    %2717 = vmatprep.subr.mxu0 0.0
    %2718 = vmatpush1.msra.mxu0 0.0
    %2719 = vmatprep.subr.mxu0 0.0
    %2720 = vmatpush1.msra.mxu0 0.0
    %2721 = vmatprep.subr.mxu0 0.0
    %2722 = vmatpush1.msra.mxu0 0.0
    %2723 = vmatprep.subr.mxu0 0.0
    %2724 = vmatpush1.msra.mxu0 0.0
    %2725 = vmatprep.subr.mxu0 0.0
    %2726 = vmatpush1.msra.mxu0 0.0
    %2727 = vmatprep.subr.mxu0 0.0
    %2728 = vmatpush1.msra.mxu0 0.0
    %2729 = vmatprep.subr.mxu0 0.0
    %2730 = vmatpush1.msra.mxu0 0.0
    %2731 = vmatprep.subr.mxu0 0.0
    %2732 = vmatpush1.msra.mxu0 0.0
    %2733 = vmatprep.subr.mxu0 0.0
    %2734 = vmatpush1.msra.mxu0 0.0
    %2735 = vmatprep.subr.mxu0 0.0
    %2736 = vmatpush1.msra.mxu0 0.0
    %2737 = vmatprep.subr.mxu0 0.0
    %2738 = vmatpush1.msra.mxu0 0.0
    %2739 = vmatprep.subr.mxu0 0.0
    %2740 = vmatpush1.msra.mxu0 0.0
    %2741 = vmatprep.subr.mxu0 0.0
    %2742 = vmatpush1.msra.mxu0 0.0
    %2743 = vmatprep.mubr.f32.mxu0 0.0
    %v2744 = vand.u32 %v2506, 4294901760
    %2745 = vmatmul.mubr.f32.gmra.mrb[0].mxu0 %v2744
    %v2746 = vpop.f32.mrb[0].mxu0
    %v2747 = vadd.f32 %v2596, %v2746
    %v2748 = vpop.f32.mrb[0].mxu0
    %2749 = vdwg.mxu0
    %2750 = vmatprep.subr.mxu0 0.0
    %v2751 = vand.u32 %v52, 4294901760
    %v2752 = vsub.f32 %v52, %v2751
    %2753 = vmatpush1.msra.mxu0 %v2752
    %2754 = vmatprep.subr.mxu0 0.0
    %v2755 = vand.u32 %v53, 4294901760
    %v2756 = vsub.f32 %v53, %v2755
    %2757 = vmatpush1.msra.mxu0 %v2756
    %2758 = vmatprep.subr.mxu0 0.0
    %v2759 = vand.u32 %v54, 4294901760
    %v2760 = vsub.f32 %v54, %v2759
    %2761 = vmatpush1.msra.mxu0 %v2760
    %2762 = vmatprep.subr.mxu0 0.0
    %v2763 = vand.u32 %v55, 4294901760
    %v2764 = vsub.f32 %v55, %v2763
    %2765 = vmatpush1.msra.mxu0 %v2764
    %2766 = vmatprep.subr.mxu0 0.0
    %v2767 = vand.u32 %v56, 4294901760
    %v2768 = vsub.f32 %v56, %v2767
    %2769 = vmatpush1.msra.mxu0 %v2768
    %2770 = vmatprep.subr.mxu0 0.0
    %v2771 = vand.u32 %v57, 4294901760
    %v2772 = vsub.f32 %v57, %v2771
    %2773 = vmatpush1.msra.mxu0 %v2772
    %2774 = vmatprep.subr.mxu0 0.0
    %v2775 = vand.u32 %v58, 4294901760
    %v2776 = vsub.f32 %v58, %v2775
    %2777 = vmatpush1.msra.mxu0 %v2776
    %2778 = vmatprep.subr.mxu0 0.0
    %v2779 = vand.u32 %v59, 4294901760
    %v2780 = vsub.f32 %v59, %v2779
    %2781 = vmatpush1.msra.mxu0 %v2780
    %2782 = vmatprep.subr.mxu0 0.0
    %v2783 = vand.u32 %v60, 4294901760
    %v2784 = vsub.f32 %v60, %v2783
    %2785 = vmatpush1.msra.mxu0 %v2784
    %2786 = vmatprep.subr.mxu0 0.0
    %v2787 = vand.u32 %v61, 4294901760
    %v2788 = vsub.f32 %v61, %v2787
    %2789 = vmatpush1.msra.mxu0 %v2788
    %2790 = vmatprep.subr.mxu0 0.0
    %v2791 = vand.u32 %v62, 4294901760
    %v2792 = vsub.f32 %v62, %v2791
    %2793 = vmatpush1.msra.mxu0 %v2792
    %2794 = vmatprep.subr.mxu0 0.0
    %v2795 = vand.u32 %v63, 4294901760
    %v2796 = vsub.f32 %v63, %v2795
    %2797 = vmatpush1.msra.mxu0 %v2796
    %2798 = vmatprep.subr.mxu0 0.0
    %v2799 = vand.u32 %v64, 4294901760
    %v2800 = vsub.f32 %v64, %v2799
    %2801 = vmatpush1.msra.mxu0 %v2800
    %2802 = vmatprep.subr.mxu0 0.0
    %v2803 = vand.u32 %v65, 4294901760
    %v2804 = vsub.f32 %v65, %v2803
    %2805 = vmatpush1.msra.mxu0 %v2804
    %2806 = vmatprep.subr.mxu0 0.0
    %v2807 = vand.u32 %v66, 4294901760
    %v2808 = vsub.f32 %v66, %v2807
    %2809 = vmatpush1.msra.mxu0 %v2808
    %2810 = vmatprep.subr.mxu0 0.0
    %v2811 = vand.u32 %v67, 4294901760
    %v2812 = vsub.f32 %v67, %v2811
    %2813 = vmatpush1.msra.mxu0 %v2812
    %2814 = vmatprep.subr.mxu0 0.0
    %2815 = vmatpush1.msra.mxu0 0.0
    %2816 = vmatprep.subr.mxu0 0.0
    %2817 = vmatpush1.msra.mxu0 0.0
    %2818 = vmatprep.subr.mxu0 0.0
    %2819 = vmatpush1.msra.mxu0 0.0
    %2820 = vmatprep.subr.mxu0 0.0
    %2821 = vmatpush1.msra.mxu0 0.0
    %2822 = vmatprep.subr.mxu0 0.0
    %2823 = vmatpush1.msra.mxu0 0.0
    %2824 = vmatprep.subr.mxu0 0.0
    %2825 = vmatpush1.msra.mxu0 0.0
    %2826 = vmatprep.subr.mxu0 0.0
    %2827 = vmatpush1.msra.mxu0 0.0
    %2828 = vmatprep.subr.mxu0 0.0
    %2829 = vmatpush1.msra.mxu0 0.0
    %2830 = vmatprep.subr.mxu0 0.0
    %2831 = vmatpush1.msra.mxu0 0.0
    %2832 = vmatprep.subr.mxu0 0.0
    %2833 = vmatpush1.msra.mxu0 0.0
    %2834 = vmatprep.subr.mxu0 0.0
    %2835 = vmatpush1.msra.mxu0 0.0
    %2836 = vmatprep.subr.mxu0 0.0
    %2837 = vmatpush1.msra.mxu0 0.0
    %2838 = vmatprep.subr.mxu0 0.0
    %2839 = vmatpush1.msra.mxu0 0.0
    %2840 = vmatprep.subr.mxu0 0.0
    %2841 = vmatpush1.msra.mxu0 0.0
    %2842 = vmatprep.subr.mxu0 0.0
    %2843 = vmatpush1.msra.mxu0 0.0
    %2844 = vmatprep.subr.mxu0 0.0
    %2845 = vmatpush1.msra.mxu0 0.0
    %2846 = vmatprep.mubr.f32.mxu0 0.0
    %v2847 = vand.u32 %v2506, 4294901760
    %v2848 = vsub.f32 %v2506, %v2847
    %2849 = vmatmul.mubr.f32.gmra.mrb[0].mxu0 %v2848
    %v2850 = vpop.f32.mrb[0].mxu0
    %v2851 = vadd.f32 %v2747, %v2850
    %v2852 = vpop.f32.mrb[0].mxu0
    %2853 = vdwg.mxu0
    %2854 = vmatprep.subr.mxu0 0.0
    %v2855 = vand.u32 %v52, 4294901760
    %2856 = vmatpush1.msra.mxu0 %v2855
    %2857 = vmatprep.subr.mxu0 0.0
    %v2858 = vand.u32 %v53, 4294901760
    %2859 = vmatpush1.msra.mxu0 %v2858
    %2860 = vmatprep.subr.mxu0 0.0
    %v2861 = vand.u32 %v54, 4294901760
    %2862 = vmatpush1.msra.mxu0 %v2861
    %2863 = vmatprep.subr.mxu0 0.0
    %v2864 = vand.u32 %v55, 4294901760
    %2865 = vmatpush1.msra.mxu0 %v2864
    %2866 = vmatprep.subr.mxu0 0.0
    %v2867 = vand.u32 %v56, 4294901760
    %2868 = vmatpush1.msra.mxu0 %v2867
    %2869 = vmatprep.subr.mxu0 0.0
    %v2870 = vand.u32 %v57, 4294901760
    %2871 = vmatpush1.msra.mxu0 %v2870
    %2872 = vmatprep.subr.mxu0 0.0
    %v2873 = vand.u32 %v58, 4294901760
    %2874 = vmatpush1.msra.mxu0 %v2873
    %2875 = vmatprep.subr.mxu0 0.0
    %v2876 = vand.u32 %v59, 4294901760
    %2877 = vmatpush1.msra.mxu0 %v2876
    %2878 = vmatprep.subr.mxu0 0.0
    %v2879 = vand.u32 %v60, 4294901760
    %2880 = vmatpush1.msra.mxu0 %v2879
    %2881 = vmatprep.subr.mxu0 0.0
    %v2882 = vand.u32 %v61, 4294901760
    %2883 = vmatpush1.msra.mxu0 %v2882
    %2884 = vmatprep.subr.mxu0 0.0
    %v2885 = vand.u32 %v62, 4294901760
    %2886 = vmatpush1.msra.mxu0 %v2885
    %2887 = vmatprep.subr.mxu0 0.0
    %v2888 = vand.u32 %v63, 4294901760
    %2889 = vmatpush1.msra.mxu0 %v2888
    %2890 = vmatprep.subr.mxu0 0.0
    %v2891 = vand.u32 %v64, 4294901760
    %2892 = vmatpush1.msra.mxu0 %v2891
    %2893 = vmatprep.subr.mxu0 0.0
    %v2894 = vand.u32 %v65, 4294901760
    %2895 = vmatpush1.msra.mxu0 %v2894
    %2896 = vmatprep.subr.mxu0 0.0
    %v2897 = vand.u32 %v66, 4294901760
    %2898 = vmatpush1.msra.mxu0 %v2897
    %2899 = vmatprep.subr.mxu0 0.0
    %v2900 = vand.u32 %v67, 4294901760
    %2901 = vmatpush1.msra.mxu0 %v2900
    %2902 = vmatprep.subr.mxu0 0.0
    %2903 = vmatpush1.msra.mxu0 0.0
    %2904 = vmatprep.subr.mxu0 0.0
    %2905 = vmatpush1.msra.mxu0 0.0
    %2906 = vmatprep.subr.mxu0 0.0
    %2907 = vmatpush1.msra.mxu0 0.0
    %2908 = vmatprep.subr.mxu0 0.0
    %2909 = vmatpush1.msra.mxu0 0.0
    %2910 = vmatprep.subr.mxu0 0.0
    %2911 = vmatpush1.msra.mxu0 0.0
    %2912 = vmatprep.subr.mxu0 0.0
    %2913 = vmatpush1.msra.mxu0 0.0
    %2914 = vmatprep.subr.mxu0 0.0
    %2915 = vmatpush1.msra.mxu0 0.0
    %2916 = vmatprep.subr.mxu0 0.0
    %2917 = vmatpush1.msra.mxu0 0.0
    %2918 = vmatprep.subr.mxu0 0.0
    %2919 = vmatpush1.msra.mxu0 0.0
    %2920 = vmatprep.subr.mxu0 0.0
    %2921 = vmatpush1.msra.mxu0 0.0
    %2922 = vmatprep.subr.mxu0 0.0
    %2923 = vmatpush1.msra.mxu0 0.0
    %2924 = vmatprep.subr.mxu0 0.0
    %2925 = vmatpush1.msra.mxu0 0.0
    %2926 = vmatprep.subr.mxu0 0.0
    %2927 = vmatpush1.msra.mxu0 0.0
    %2928 = vmatprep.subr.mxu0 0.0
    %2929 = vmatpush1.msra.mxu0 0.0
    %2930 = vmatprep.subr.mxu0 0.0
    %2931 = vmatpush1.msra.mxu0 0.0
    %2932 = vmatprep.subr.mxu0 0.0
    %2933 = vmatpush1.msra.mxu0 0.0
    %2934 = vmatprep.mubr.f32.mxu0 0.0
    %v2935 = vand.u32 %v2506, 4294901760
    %v2936 = vsub.f32 %v2506, %v2935
    %v2937 = vand.u32 %v2936, 4294901760
    %2938 = vmatmul.mubr.f32.gmra.mrb[0].mxu0 %v2937
    %v2939 = vpop.f32.mrb[0].mxu0
    %v2940 = vadd.f32 %v2851, %v2939
    %v2941 = vpop.f32.mrb[0].mxu0
    %2942 = vdwg.mxu0
    %2943 = vmatprep.subr.mxu0 0.0
    %v2944 = vand.u32 %v52, 4294901760
    %v2945 = vsub.f32 %v52, %v2944
    %v2946 = vand.u32 %v2945, 4294901760
    %2947 = vmatpush1.msra.mxu0 %v2946
    %2948 = vmatprep.subr.mxu0 0.0
    %v2949 = vand.u32 %v53, 4294901760
    %v2950 = vsub.f32 %v53, %v2949
    %v2951 = vand.u32 %v2950, 4294901760
    %2952 = vmatpush1.msra.mxu0 %v2951
    %2953 = vmatprep.subr.mxu0 0.0
    %v2954 = vand.u32 %v54, 4294901760
    %v2955 = vsub.f32 %v54, %v2954
    %v2956 = vand.u32 %v2955, 4294901760
    %2957 = vmatpush1.msra.mxu0 %v2956
    %2958 = vmatprep.subr.mxu0 0.0
    %v2959 = vand.u32 %v55, 4294901760
    %v2960 = vsub.f32 %v55, %v2959
    %v2961 = vand.u32 %v2960, 4294901760
    %2962 = vmatpush1.msra.mxu0 %v2961
    %2963 = vmatprep.subr.mxu0 0.0
    %v2964 = vand.u32 %v56, 4294901760
    %v2965 = vsub.f32 %v56, %v2964
    %v2966 = vand.u32 %v2965, 4294901760
    %2967 = vmatpush1.msra.mxu0 %v2966
    %2968 = vmatprep.subr.mxu0 0.0
    %v2969 = vand.u32 %v57, 4294901760
    %v2970 = vsub.f32 %v57, %v2969
    %v2971 = vand.u32 %v2970, 4294901760
    %2972 = vmatpush1.msra.mxu0 %v2971
    %2973 = vmatprep.subr.mxu0 0.0
    %v2974 = vand.u32 %v58, 4294901760
    %v2975 = vsub.f32 %v58, %v2974
    %v2976 = vand.u32 %v2975, 4294901760
    %2977 = vmatpush1.msra.mxu0 %v2976
    %2978 = vmatprep.subr.mxu0 0.0
    %v2979 = vand.u32 %v59, 4294901760
    %v2980 = vsub.f32 %v59, %v2979
    %v2981 = vand.u32 %v2980, 4294901760
    %2982 = vmatpush1.msra.mxu0 %v2981
    %2983 = vmatprep.subr.mxu0 0.0
    %v2984 = vand.u32 %v60, 4294901760
    %v2985 = vsub.f32 %v60, %v2984
    %v2986 = vand.u32 %v2985, 4294901760
    %2987 = vmatpush1.msra.mxu0 %v2986
    %2988 = vmatprep.subr.mxu0 0.0
    %v2989 = vand.u32 %v61, 4294901760
    %v2990 = vsub.f32 %v61, %v2989
    %v2991 = vand.u32 %v2990, 4294901760
    %2992 = vmatpush1.msra.mxu0 %v2991
    %2993 = vmatprep.subr.mxu0 0.0
    %v2994 = vand.u32 %v62, 4294901760
    %v2995 = vsub.f32 %v62, %v2994
    %v2996 = vand.u32 %v2995, 4294901760
    %2997 = vmatpush1.msra.mxu0 %v2996
    %2998 = vmatprep.subr.mxu0 0.0
    %v2999 = vand.u32 %v63, 4294901760
    %v3000 = vsub.f32 %v63, %v2999
    %v3001 = vand.u32 %v3000, 4294901760
    %3002 = vmatpush1.msra.mxu0 %v3001
    %3003 = vmatprep.subr.mxu0 0.0
    %v3004 = vand.u32 %v64, 4294901760
    %v3005 = vsub.f32 %v64, %v3004
    %v3006 = vand.u32 %v3005, 4294901760
    %3007 = vmatpush1.msra.mxu0 %v3006
    %3008 = vmatprep.subr.mxu0 0.0
    %v3009 = vand.u32 %v65, 4294901760
    %v3010 = vsub.f32 %v65, %v3009
    %v3011 = vand.u32 %v3010, 4294901760
    %3012 = vmatpush1.msra.mxu0 %v3011
    %3013 = vmatprep.subr.mxu0 0.0
    %v3014 = vand.u32 %v66, 4294901760
    %v3015 = vsub.f32 %v66, %v3014
    %v3016 = vand.u32 %v3015, 4294901760
    %3017 = vmatpush1.msra.mxu0 %v3016
    %3018 = vmatprep.subr.mxu0 0.0
    %v3019 = vand.u32 %v67, 4294901760
    %v3020 = vsub.f32 %v67, %v3019
    %v3021 = vand.u32 %v3020, 4294901760
    %3022 = vmatpush1.msra.mxu0 %v3021
    %3023 = vmatprep.subr.mxu0 0.0
    %3024 = vmatpush1.msra.mxu0 0.0
    %3025 = vmatprep.subr.mxu0 0.0
    %3026 = vmatpush1.msra.mxu0 0.0
    %3027 = vmatprep.subr.mxu0 0.0
    %3028 = vmatpush1.msra.mxu0 0.0
    %3029 = vmatprep.subr.mxu0 0.0
    %3030 = vmatpush1.msra.mxu0 0.0
    %3031 = vmatprep.subr.mxu0 0.0
    %3032 = vmatpush1.msra.mxu0 0.0
    %3033 = vmatprep.subr.mxu0 0.0
    %3034 = vmatpush1.msra.mxu0 0.0
    %3035 = vmatprep.subr.mxu0 0.0
    %3036 = vmatpush1.msra.mxu0 0.0
    %3037 = vmatprep.subr.mxu0 0.0
    %3038 = vmatpush1.msra.mxu0 0.0
    %3039 = vmatprep.subr.mxu0 0.0
    %3040 = vmatpush1.msra.mxu0 0.0
    %3041 = vmatprep.subr.mxu0 0.0
    %3042 = vmatpush1.msra.mxu0 0.0
    %3043 = vmatprep.subr.mxu0 0.0
    %3044 = vmatpush1.msra.mxu0 0.0
    %3045 = vmatprep.subr.mxu0 0.0
    %3046 = vmatpush1.msra.mxu0 0.0
    %3047 = vmatprep.subr.mxu0 0.0
    %3048 = vmatpush1.msra.mxu0 0.0
    %3049 = vmatprep.subr.mxu0 0.0
    %3050 = vmatpush1.msra.mxu0 0.0
    %3051 = vmatprep.subr.mxu0 0.0
    %3052 = vmatpush1.msra.mxu0 0.0
    %3053 = vmatprep.subr.mxu0 0.0
    %3054 = vmatpush1.msra.mxu0 0.0
    %3055 = vmatprep.mubr.f32.mxu0 0.0
    %v3056 = vand.u32 %v2506, 4294901760
    %3057 = vmatmul.mubr.f32.gmra.mrb[0].mxu0 %v3056
    %v3058 = vpop.f32.mrb[0].mxu0
    %v3059 = vadd.f32 %v2940, %v3058
    %v3060 = vpop.f32.mrb[0].mxu0
    %3061 = vdwg.mxu0
    %3062 = vmatprep.subr.mxu0 0.0
    %v3063 = vand.u32 %v52, 4294901760
    %3064 = vmatpush1.msra.mxu0 %v3063
    %3065 = vmatprep.subr.mxu0 0.0
    %v3066 = vand.u32 %v53, 4294901760
    %3067 = vmatpush1.msra.mxu0 %v3066
    %3068 = vmatprep.subr.mxu0 0.0
    %v3069 = vand.u32 %v54, 4294901760
    %3070 = vmatpush1.msra.mxu0 %v3069
    %3071 = vmatprep.subr.mxu0 0.0
    %v3072 = vand.u32 %v55, 4294901760
    %3073 = vmatpush1.msra.mxu0 %v3072
    %3074 = vmatprep.subr.mxu0 0.0
    %v3075 = vand.u32 %v56, 4294901760
    %3076 = vmatpush1.msra.mxu0 %v3075
    %3077 = vmatprep.subr.mxu0 0.0
    %v3078 = vand.u32 %v57, 4294901760
    %3079 = vmatpush1.msra.mxu0 %v3078
    %3080 = vmatprep.subr.mxu0 0.0
    %v3081 = vand.u32 %v58, 4294901760
    %3082 = vmatpush1.msra.mxu0 %v3081
    %3083 = vmatprep.subr.mxu0 0.0
    %v3084 = vand.u32 %v59, 4294901760
    %3085 = vmatpush1.msra.mxu0 %v3084
    %3086 = vmatprep.subr.mxu0 0.0
    %v3087 = vand.u32 %v60, 4294901760
    %3088 = vmatpush1.msra.mxu0 %v3087
    %3089 = vmatprep.subr.mxu0 0.0
    %v3090 = vand.u32 %v61, 4294901760
    %3091 = vmatpush1.msra.mxu0 %v3090
    %3092 = vmatprep.subr.mxu0 0.0
    %v3093 = vand.u32 %v62, 4294901760
    %3094 = vmatpush1.msra.mxu0 %v3093
    %3095 = vmatprep.subr.mxu0 0.0
    %v3096 = vand.u32 %v63, 4294901760
    %3097 = vmatpush1.msra.mxu0 %v3096
    %3098 = vmatprep.subr.mxu0 0.0
    %v3099 = vand.u32 %v64, 4294901760
    %3100 = vmatpush1.msra.mxu0 %v3099
    %3101 = vmatprep.subr.mxu0 0.0
    %v3102 = vand.u32 %v65, 4294901760
    %3103 = vmatpush1.msra.mxu0 %v3102
    %3104 = vmatprep.subr.mxu0 0.0
    %v3105 = vand.u32 %v66, 4294901760
    %3106 = vmatpush1.msra.mxu0 %v3105
    %3107 = vmatprep.subr.mxu0 0.0
    %v3108 = vand.u32 %v67, 4294901760
    %3109 = vmatpush1.msra.mxu0 %v3108
    %3110 = vmatprep.subr.mxu0 0.0
    %3111 = vmatpush1.msra.mxu0 0.0
    %3112 = vmatprep.subr.mxu0 0.0
    %3113 = vmatpush1.msra.mxu0 0.0
    %3114 = vmatprep.subr.mxu0 0.0
    %3115 = vmatpush1.msra.mxu0 0.0
    %3116 = vmatprep.subr.mxu0 0.0
    %3117 = vmatpush1.msra.mxu0 0.0
    %3118 = vmatprep.subr.mxu0 0.0
    %3119 = vmatpush1.msra.mxu0 0.0
    %3120 = vmatprep.subr.mxu0 0.0
    %3121 = vmatpush1.msra.mxu0 0.0
    %3122 = vmatprep.subr.mxu0 0.0
    %3123 = vmatpush1.msra.mxu0 0.0
    %3124 = vmatprep.subr.mxu0 0.0
    %3125 = vmatpush1.msra.mxu0 0.0
    %3126 = vmatprep.subr.mxu0 0.0
    %3127 = vmatpush1.msra.mxu0 0.0
    %3128 = vmatprep.subr.mxu0 0.0
    %3129 = vmatpush1.msra.mxu0 0.0
    %3130 = vmatprep.subr.mxu0 0.0
    %3131 = vmatpush1.msra.mxu0 0.0
    %3132 = vmatprep.subr.mxu0 0.0
    %3133 = vmatpush1.msra.mxu0 0.0
    %3134 = vmatprep.subr.mxu0 0.0
    %3135 = vmatpush1.msra.mxu0 0.0
    %3136 = vmatprep.subr.mxu0 0.0
    %3137 = vmatpush1.msra.mxu0 0.0
    %3138 = vmatprep.subr.mxu0 0.0
    %3139 = vmatpush1.msra.mxu0 0.0
    %3140 = vmatprep.subr.mxu0 0.0
    %3141 = vmatpush1.msra.mxu0 0.0
    %3142 = vmatprep.mubr.f32.mxu0 0.0
    %v3143 = vand.u32 %v2506, 4294901760
    %3144 = vmatmul.mubr.f32.gmra.mrb[0].mxu0 %v3143
    %v3145 = vpop.f32.mrb[0].mxu0
    %v3146 = vadd.f32 %v3059, %v3145
    %v3147 = vpop.f32.mrb[0].mxu0
    %3148 = vdwg.mxu0
    %v3149 = vmul.f32 %v86, %v3146
    %v3150 = vmul.f32 %v3149, 0.2
    %v3151 = vadd.f32 %v2507, %v3150
    %3152 = vmatprep.subr.mxu0 0.0
    %v3153 = vand.u32 %v52, 4294901760
    %3154 = vmatpush1.msra.mxu0 %v3153
    %3155 = vmatprep.subr.mxu0 0.0
    %v3156 = vand.u32 %v53, 4294901760
    %3157 = vmatpush1.msra.mxu0 %v3156
    %3158 = vmatprep.subr.mxu0 0.0
    %v3159 = vand.u32 %v54, 4294901760
    %3160 = vmatpush1.msra.mxu0 %v3159
    %3161 = vmatprep.subr.mxu0 0.0
    %v3162 = vand.u32 %v55, 4294901760
    %3163 = vmatpush1.msra.mxu0 %v3162
    %3164 = vmatprep.subr.mxu0 0.0
    %v3165 = vand.u32 %v56, 4294901760
    %3166 = vmatpush1.msra.mxu0 %v3165
    %3167 = vmatprep.subr.mxu0 0.0
    %v3168 = vand.u32 %v57, 4294901760
    %3169 = vmatpush1.msra.mxu0 %v3168
    %3170 = vmatprep.subr.mxu0 0.0
    %v3171 = vand.u32 %v58, 4294901760
    %3172 = vmatpush1.msra.mxu0 %v3171
    %3173 = vmatprep.subr.mxu0 0.0
    %v3174 = vand.u32 %v59, 4294901760
    %3175 = vmatpush1.msra.mxu0 %v3174
    %3176 = vmatprep.subr.mxu0 0.0
    %v3177 = vand.u32 %v60, 4294901760
    %3178 = vmatpush1.msra.mxu0 %v3177
    %3179 = vmatprep.subr.mxu0 0.0
    %v3180 = vand.u32 %v61, 4294901760
    %3181 = vmatpush1.msra.mxu0 %v3180
    %3182 = vmatprep.subr.mxu0 0.0
    %v3183 = vand.u32 %v62, 4294901760
    %3184 = vmatpush1.msra.mxu0 %v3183
    %3185 = vmatprep.subr.mxu0 0.0
    %v3186 = vand.u32 %v63, 4294901760
    %3187 = vmatpush1.msra.mxu0 %v3186
    %3188 = vmatprep.subr.mxu0 0.0
    %v3189 = vand.u32 %v64, 4294901760
    %3190 = vmatpush1.msra.mxu0 %v3189
    %3191 = vmatprep.subr.mxu0 0.0
    %v3192 = vand.u32 %v65, 4294901760
    %3193 = vmatpush1.msra.mxu0 %v3192
    %3194 = vmatprep.subr.mxu0 0.0
    %v3195 = vand.u32 %v66, 4294901760
    %3196 = vmatpush1.msra.mxu0 %v3195
    %3197 = vmatprep.subr.mxu0 0.0
    %v3198 = vand.u32 %v67, 4294901760
    %3199 = vmatpush1.msra.mxu0 %v3198
    %3200 = vmatprep.subr.mxu0 0.0
    %3201 = vmatpush1.msra.mxu0 0.0
    %3202 = vmatprep.subr.mxu0 0.0
    %3203 = vmatpush1.msra.mxu0 0.0
    %3204 = vmatprep.subr.mxu0 0.0
    %3205 = vmatpush1.msra.mxu0 0.0
    %3206 = vmatprep.subr.mxu0 0.0
    %3207 = vmatpush1.msra.mxu0 0.0
    %3208 = vmatprep.subr.mxu0 0.0
    %3209 = vmatpush1.msra.mxu0 0.0
    %3210 = vmatprep.subr.mxu0 0.0
    %3211 = vmatpush1.msra.mxu0 0.0
    %3212 = vmatprep.subr.mxu0 0.0
    %3213 = vmatpush1.msra.mxu0 0.0
    %3214 = vmatprep.subr.mxu0 0.0
    %3215 = vmatpush1.msra.mxu0 0.0
    %3216 = vmatprep.subr.mxu0 0.0
    %3217 = vmatpush1.msra.mxu0 0.0
    %3218 = vmatprep.subr.mxu0 0.0
    %3219 = vmatpush1.msra.mxu0 0.0
    %3220 = vmatprep.subr.mxu0 0.0
    %3221 = vmatpush1.msra.mxu0 0.0
    %3222 = vmatprep.subr.mxu0 0.0
    %3223 = vmatpush1.msra.mxu0 0.0
    %3224 = vmatprep.subr.mxu0 0.0
    %3225 = vmatpush1.msra.mxu0 0.0
    %3226 = vmatprep.subr.mxu0 0.0
    %3227 = vmatpush1.msra.mxu0 0.0
    %3228 = vmatprep.subr.mxu0 0.0
    %3229 = vmatpush1.msra.mxu0 0.0
    %3230 = vmatprep.subr.mxu0 0.0
    %3231 = vmatpush1.msra.mxu0 0.0
    %3232 = vmatprep.mubr.f32.mxu0 0.0
    %v3233 = vand.u32 %v3150, 4294901760
    %v3234 = vsub.f32 %v3150, %v3233
    %v3235 = vand.u32 %v3234, 4294901760
    %v3236 = vsub.f32 %v3234, %v3235
    %v3237 = vand.u32 %v3236, 4294901760
    %3238 = vmatmul.mubr.f32.gmra.mrb[0].mxu0 %v3237
    %v3239 = vpop.f32.mrb[0].mxu0
    %v3240 = vadd.f32 0.0, %v3239
    %v3241 = vpop.f32.mrb[0].mxu0
    %3242 = vdwg.mxu0
    %3243 = vmatprep.subr.mxu0 0.0
    %v3244 = vand.u32 %v52, 4294901760
    %v3245 = vsub.f32 %v52, %v3244
    %v3246 = vand.u32 %v3245, 4294901760
    %v3247 = vsub.f32 %v3245, %v3246
    %v3248 = vand.u32 %v3247, 4294901760
    %3249 = vmatpush1.msra.mxu0 %v3248
    %3250 = vmatprep.subr.mxu0 0.0
    %v3251 = vand.u32 %v53, 4294901760
    %v3252 = vsub.f32 %v53, %v3251
    %v3253 = vand.u32 %v3252, 4294901760
    %v3254 = vsub.f32 %v3252, %v3253
    %v3255 = vand.u32 %v3254, 4294901760
    %3256 = vmatpush1.msra.mxu0 %v3255
    %3257 = vmatprep.subr.mxu0 0.0
    %v3258 = vand.u32 %v54, 4294901760
    %v3259 = vsub.f32 %v54, %v3258
    %v3260 = vand.u32 %v3259, 4294901760
    %v3261 = vsub.f32 %v3259, %v3260
    %v3262 = vand.u32 %v3261, 4294901760
    %3263 = vmatpush1.msra.mxu0 %v3262
    %3264 = vmatprep.subr.mxu0 0.0
    %v3265 = vand.u32 %v55, 4294901760
    %v3266 = vsub.f32 %v55, %v3265
    %v3267 = vand.u32 %v3266, 4294901760
    %v3268 = vsub.f32 %v3266, %v3267
    %v3269 = vand.u32 %v3268, 4294901760
    %3270 = vmatpush1.msra.mxu0 %v3269
    %3271 = vmatprep.subr.mxu0 0.0
    %v3272 = vand.u32 %v56, 4294901760
    %v3273 = vsub.f32 %v56, %v3272
    %v3274 = vand.u32 %v3273, 4294901760
    %v3275 = vsub.f32 %v3273, %v3274
    %v3276 = vand.u32 %v3275, 4294901760
    %3277 = vmatpush1.msra.mxu0 %v3276
    %3278 = vmatprep.subr.mxu0 0.0
    %v3279 = vand.u32 %v57, 4294901760
    %v3280 = vsub.f32 %v57, %v3279
    %v3281 = vand.u32 %v3280, 4294901760
    %v3282 = vsub.f32 %v3280, %v3281
    %v3283 = vand.u32 %v3282, 4294901760
    %3284 = vmatpush1.msra.mxu0 %v3283
    %3285 = vmatprep.subr.mxu0 0.0
    %v3286 = vand.u32 %v58, 4294901760
    %v3287 = vsub.f32 %v58, %v3286
    %v3288 = vand.u32 %v3287, 4294901760
    %v3289 = vsub.f32 %v3287, %v3288
    %v3290 = vand.u32 %v3289, 4294901760
    %3291 = vmatpush1.msra.mxu0 %v3290
    %3292 = vmatprep.subr.mxu0 0.0
    %v3293 = vand.u32 %v59, 4294901760
    %v3294 = vsub.f32 %v59, %v3293
    %v3295 = vand.u32 %v3294, 4294901760
    %v3296 = vsub.f32 %v3294, %v3295
    %v3297 = vand.u32 %v3296, 4294901760
    %3298 = vmatpush1.msra.mxu0 %v3297
    %3299 = vmatprep.subr.mxu0 0.0
    %v3300 = vand.u32 %v60, 4294901760
    %v3301 = vsub.f32 %v60, %v3300
    %v3302 = vand.u32 %v3301, 4294901760
    %v3303 = vsub.f32 %v3301, %v3302
    %v3304 = vand.u32 %v3303, 4294901760
    %3305 = vmatpush1.msra.mxu0 %v3304
    %3306 = vmatprep.subr.mxu0 0.0
    %v3307 = vand.u32 %v61, 4294901760
    %v3308 = vsub.f32 %v61, %v3307
    %v3309 = vand.u32 %v3308, 4294901760
    %v3310 = vsub.f32 %v3308, %v3309
    %v3311 = vand.u32 %v3310, 4294901760
    %3312 = vmatpush1.msra.mxu0 %v3311
    %3313 = vmatprep.subr.mxu0 0.0
    %v3314 = vand.u32 %v62, 4294901760
    %v3315 = vsub.f32 %v62, %v3314
    %v3316 = vand.u32 %v3315, 4294901760
    %v3317 = vsub.f32 %v3315, %v3316
    %v3318 = vand.u32 %v3317, 4294901760
    %3319 = vmatpush1.msra.mxu0 %v3318
    %3320 = vmatprep.subr.mxu0 0.0
    %v3321 = vand.u32 %v63, 4294901760
    %v3322 = vsub.f32 %v63, %v3321
    %v3323 = vand.u32 %v3322, 4294901760
    %v3324 = vsub.f32 %v3322, %v3323
    %v3325 = vand.u32 %v3324, 4294901760
    %3326 = vmatpush1.msra.mxu0 %v3325
    %3327 = vmatprep.subr.mxu0 0.0
    %v3328 = vand.u32 %v64, 4294901760
    %v3329 = vsub.f32 %v64, %v3328
    %v3330 = vand.u32 %v3329, 4294901760
    %v3331 = vsub.f32 %v3329, %v3330
    %v3332 = vand.u32 %v3331, 4294901760
    %3333 = vmatpush1.msra.mxu0 %v3332
    %3334 = vmatprep.subr.mxu0 0.0
    %v3335 = vand.u32 %v65, 4294901760
    %v3336 = vsub.f32 %v65, %v3335
    %v3337 = vand.u32 %v3336, 4294901760
    %v3338 = vsub.f32 %v3336, %v3337
    %v3339 = vand.u32 %v3338, 4294901760
    %3340 = vmatpush1.msra.mxu0 %v3339
    %3341 = vmatprep.subr.mxu0 0.0
    %v3342 = vand.u32 %v66, 4294901760
    %v3343 = vsub.f32 %v66, %v3342
    %v3344 = vand.u32 %v3343, 4294901760
    %v3345 = vsub.f32 %v3343, %v3344
    %v3346 = vand.u32 %v3345, 4294901760
    %3347 = vmatpush1.msra.mxu0 %v3346
    %3348 = vmatprep.subr.mxu0 0.0
    %v3349 = vand.u32 %v67, 4294901760
    %v3350 = vsub.f32 %v67, %v3349
    %v3351 = vand.u32 %v3350, 4294901760
    %v3352 = vsub.f32 %v3350, %v3351
    %v3353 = vand.u32 %v3352, 4294901760
    %3354 = vmatpush1.msra.mxu0 %v3353
    %3355 = vmatprep.subr.mxu0 0.0
    %3356 = vmatpush1.msra.mxu0 0.0
    %3357 = vmatprep.subr.mxu0 0.0
    %3358 = vmatpush1.msra.mxu0 0.0
    %3359 = vmatprep.subr.mxu0 0.0
    %3360 = vmatpush1.msra.mxu0 0.0
    %3361 = vmatprep.subr.mxu0 0.0
    %3362 = vmatpush1.msra.mxu0 0.0
    %3363 = vmatprep.subr.mxu0 0.0
    %3364 = vmatpush1.msra.mxu0 0.0
    %3365 = vmatprep.subr.mxu0 0.0
    %3366 = vmatpush1.msra.mxu0 0.0
    %3367 = vmatprep.subr.mxu0 0.0
    %3368 = vmatpush1.msra.mxu0 0.0
    %3369 = vmatprep.subr.mxu0 0.0
    %3370 = vmatpush1.msra.mxu0 0.0
    %3371 = vmatprep.subr.mxu0 0.0
    %3372 = vmatpush1.msra.mxu0 0.0
    %3373 = vmatprep.subr.mxu0 0.0
    %3374 = vmatpush1.msra.mxu0 0.0
    %3375 = vmatprep.subr.mxu0 0.0
    %3376 = vmatpush1.msra.mxu0 0.0
    %3377 = vmatprep.subr.mxu0 0.0
    %3378 = vmatpush1.msra.mxu0 0.0
    %3379 = vmatprep.subr.mxu0 0.0
    %3380 = vmatpush1.msra.mxu0 0.0
    %3381 = vmatprep.subr.mxu0 0.0
    %3382 = vmatpush1.msra.mxu0 0.0
    %3383 = vmatprep.subr.mxu0 0.0
    %3384 = vmatpush1.msra.mxu0 0.0
    %3385 = vmatprep.subr.mxu0 0.0
    %3386 = vmatpush1.msra.mxu0 0.0
    %3387 = vmatprep.mubr.f32.mxu0 0.0
    %v3388 = vand.u32 %v3150, 4294901760
    %3389 = vmatmul.mubr.f32.gmra.mrb[0].mxu0 %v3388
    %v3390 = vpop.f32.mrb[0].mxu0
    %v3391 = vadd.f32 %v3240, %v3390
    %v3392 = vpop.f32.mrb[0].mxu0
    %3393 = vdwg.mxu0
    %3394 = vmatprep.subr.mxu0 0.0
    %v3395 = vand.u32 %v52, 4294901760
    %v3396 = vsub.f32 %v52, %v3395
    %3397 = vmatpush1.msra.mxu0 %v3396
    %3398 = vmatprep.subr.mxu0 0.0
    %v3399 = vand.u32 %v53, 4294901760
    %v3400 = vsub.f32 %v53, %v3399
    %3401 = vmatpush1.msra.mxu0 %v3400
    %3402 = vmatprep.subr.mxu0 0.0
    %v3403 = vand.u32 %v54, 4294901760
    %v3404 = vsub.f32 %v54, %v3403
    %3405 = vmatpush1.msra.mxu0 %v3404
    %3406 = vmatprep.subr.mxu0 0.0
    %v3407 = vand.u32 %v55, 4294901760
    %v3408 = vsub.f32 %v55, %v3407
    %3409 = vmatpush1.msra.mxu0 %v3408
    %3410 = vmatprep.subr.mxu0 0.0
    %v3411 = vand.u32 %v56, 4294901760
    %v3412 = vsub.f32 %v56, %v3411
    %3413 = vmatpush1.msra.mxu0 %v3412
    %3414 = vmatprep.subr.mxu0 0.0
    %v3415 = vand.u32 %v57, 4294901760
    %v3416 = vsub.f32 %v57, %v3415
    %3417 = vmatpush1.msra.mxu0 %v3416
    %3418 = vmatprep.subr.mxu0 0.0
    %v3419 = vand.u32 %v58, 4294901760
    %v3420 = vsub.f32 %v58, %v3419
    %3421 = vmatpush1.msra.mxu0 %v3420
    %3422 = vmatprep.subr.mxu0 0.0
    %v3423 = vand.u32 %v59, 4294901760
    %v3424 = vsub.f32 %v59, %v3423
    %3425 = vmatpush1.msra.mxu0 %v3424
    %3426 = vmatprep.subr.mxu0 0.0
    %v3427 = vand.u32 %v60, 4294901760
    %v3428 = vsub.f32 %v60, %v3427
    %3429 = vmatpush1.msra.mxu0 %v3428
    %3430 = vmatprep.subr.mxu0 0.0
    %v3431 = vand.u32 %v61, 4294901760
    %v3432 = vsub.f32 %v61, %v3431
    %3433 = vmatpush1.msra.mxu0 %v3432
    %3434 = vmatprep.subr.mxu0 0.0
    %v3435 = vand.u32 %v62, 4294901760
    %v3436 = vsub.f32 %v62, %v3435
    %3437 = vmatpush1.msra.mxu0 %v3436
    %3438 = vmatprep.subr.mxu0 0.0
    %v3439 = vand.u32 %v63, 4294901760
    %v3440 = vsub.f32 %v63, %v3439
    %3441 = vmatpush1.msra.mxu0 %v3440
    %3442 = vmatprep.subr.mxu0 0.0
    %v3443 = vand.u32 %v64, 4294901760
    %v3444 = vsub.f32 %v64, %v3443
    %3445 = vmatpush1.msra.mxu0 %v3444
    %3446 = vmatprep.subr.mxu0 0.0
    %v3447 = vand.u32 %v65, 4294901760
    %v3448 = vsub.f32 %v65, %v3447
    %3449 = vmatpush1.msra.mxu0 %v3448
    %3450 = vmatprep.subr.mxu0 0.0
    %v3451 = vand.u32 %v66, 4294901760
    %v3452 = vsub.f32 %v66, %v3451
    %3453 = vmatpush1.msra.mxu0 %v3452
    %3454 = vmatprep.subr.mxu0 0.0
    %v3455 = vand.u32 %v67, 4294901760
    %v3456 = vsub.f32 %v67, %v3455
    %3457 = vmatpush1.msra.mxu0 %v3456
    %3458 = vmatprep.subr.mxu0 0.0
    %3459 = vmatpush1.msra.mxu0 0.0
    %3460 = vmatprep.subr.mxu0 0.0
    %3461 = vmatpush1.msra.mxu0 0.0
    %3462 = vmatprep.subr.mxu0 0.0
    %3463 = vmatpush1.msra.mxu0 0.0
    %3464 = vmatprep.subr.mxu0 0.0
    %3465 = vmatpush1.msra.mxu0 0.0
    %3466 = vmatprep.subr.mxu0 0.0
    %3467 = vmatpush1.msra.mxu0 0.0
    %3468 = vmatprep.subr.mxu0 0.0
    %3469 = vmatpush1.msra.mxu0 0.0
    %3470 = vmatprep.subr.mxu0 0.0
    %3471 = vmatpush1.msra.mxu0 0.0
    %3472 = vmatprep.subr.mxu0 0.0
    %3473 = vmatpush1.msra.mxu0 0.0
    %3474 = vmatprep.subr.mxu0 0.0
    %3475 = vmatpush1.msra.mxu0 0.0
    %3476 = vmatprep.subr.mxu0 0.0
    %3477 = vmatpush1.msra.mxu0 0.0
    %3478 = vmatprep.subr.mxu0 0.0
    %3479 = vmatpush1.msra.mxu0 0.0
    %3480 = vmatprep.subr.mxu0 0.0
    %3481 = vmatpush1.msra.mxu0 0.0
    %3482 = vmatprep.subr.mxu0 0.0
    %3483 = vmatpush1.msra.mxu0 0.0
    %3484 = vmatprep.subr.mxu0 0.0
    %3485 = vmatpush1.msra.mxu0 0.0
    %3486 = vmatprep.subr.mxu0 0.0
    %3487 = vmatpush1.msra.mxu0 0.0
    %3488 = vmatprep.subr.mxu0 0.0
    %3489 = vmatpush1.msra.mxu0 0.0
    %3490 = vmatprep.mubr.f32.mxu0 0.0
    %v3491 = vand.u32 %v3150, 4294901760
    %v3492 = vsub.f32 %v3150, %v3491
    %3493 = vmatmul.mubr.f32.gmra.mrb[0].mxu0 %v3492
    %v3494 = vpop.f32.mrb[0].mxu0
    %v3495 = vadd.f32 %v3391, %v3494
    %v3496 = vpop.f32.mrb[0].mxu0
    %3497 = vdwg.mxu0
    %3498 = vmatprep.subr.mxu0 0.0
    %v3499 = vand.u32 %v52, 4294901760
    %3500 = vmatpush1.msra.mxu0 %v3499
    %3501 = vmatprep.subr.mxu0 0.0
    %v3502 = vand.u32 %v53, 4294901760
    %3503 = vmatpush1.msra.mxu0 %v3502
    %3504 = vmatprep.subr.mxu0 0.0
    %v3505 = vand.u32 %v54, 4294901760
    %3506 = vmatpush1.msra.mxu0 %v3505
    %3507 = vmatprep.subr.mxu0 0.0
    %v3508 = vand.u32 %v55, 4294901760
    %3509 = vmatpush1.msra.mxu0 %v3508
    %3510 = vmatprep.subr.mxu0 0.0
    %v3511 = vand.u32 %v56, 4294901760
    %3512 = vmatpush1.msra.mxu0 %v3511
    %3513 = vmatprep.subr.mxu0 0.0
    %v3514 = vand.u32 %v57, 4294901760
    %3515 = vmatpush1.msra.mxu0 %v3514
    %3516 = vmatprep.subr.mxu0 0.0
    %v3517 = vand.u32 %v58, 4294901760
    %3518 = vmatpush1.msra.mxu0 %v3517
    %3519 = vmatprep.subr.mxu0 0.0
    %v3520 = vand.u32 %v59, 4294901760
    %3521 = vmatpush1.msra.mxu0 %v3520
    %3522 = vmatprep.subr.mxu0 0.0
    %v3523 = vand.u32 %v60, 4294901760
    %3524 = vmatpush1.msra.mxu0 %v3523
    %3525 = vmatprep.subr.mxu0 0.0
    %v3526 = vand.u32 %v61, 4294901760
    %3527 = vmatpush1.msra.mxu0 %v3526
    %3528 = vmatprep.subr.mxu0 0.0
    %v3529 = vand.u32 %v62, 4294901760
    %3530 = vmatpush1.msra.mxu0 %v3529
    %3531 = vmatprep.subr.mxu0 0.0
    %v3532 = vand.u32 %v63, 4294901760
    %3533 = vmatpush1.msra.mxu0 %v3532
    %3534 = vmatprep.subr.mxu0 0.0
    %v3535 = vand.u32 %v64, 4294901760
    %3536 = vmatpush1.msra.mxu0 %v3535
    %3537 = vmatprep.subr.mxu0 0.0
    %v3538 = vand.u32 %v65, 4294901760
    %3539 = vmatpush1.msra.mxu0 %v3538
    %3540 = vmatprep.subr.mxu0 0.0
    %v3541 = vand.u32 %v66, 4294901760
    %3542 = vmatpush1.msra.mxu0 %v3541
    %3543 = vmatprep.subr.mxu0 0.0
    %v3544 = vand.u32 %v67, 4294901760
    %3545 = vmatpush1.msra.mxu0 %v3544
    %3546 = vmatprep.subr.mxu0 0.0
    %3547 = vmatpush1.msra.mxu0 0.0
    %3548 = vmatprep.subr.mxu0 0.0
    %3549 = vmatpush1.msra.mxu0 0.0
    %3550 = vmatprep.subr.mxu0 0.0
    %3551 = vmatpush1.msra.mxu0 0.0
    %3552 = vmatprep.subr.mxu0 0.0
    %3553 = vmatpush1.msra.mxu0 0.0
    %3554 = vmatprep.subr.mxu0 0.0
    %3555 = vmatpush1.msra.mxu0 0.0
    %3556 = vmatprep.subr.mxu0 0.0
    %3557 = vmatpush1.msra.mxu0 0.0
    %3558 = vmatprep.subr.mxu0 0.0
    %3559 = vmatpush1.msra.mxu0 0.0
    %3560 = vmatprep.subr.mxu0 0.0
    %3561 = vmatpush1.msra.mxu0 0.0
    %3562 = vmatprep.subr.mxu0 0.0
    %3563 = vmatpush1.msra.mxu0 0.0
    %3564 = vmatprep.subr.mxu0 0.0
    %3565 = vmatpush1.msra.mxu0 0.0
    %3566 = vmatprep.subr.mxu0 0.0
    %3567 = vmatpush1.msra.mxu0 0.0
    %3568 = vmatprep.subr.mxu0 0.0
    %3569 = vmatpush1.msra.mxu0 0.0
    %3570 = vmatprep.subr.mxu0 0.0
    %3571 = vmatpush1.msra.mxu0 0.0
    %3572 = vmatprep.subr.mxu0 0.0
    %3573 = vmatpush1.msra.mxu0 0.0
    %3574 = vmatprep.subr.mxu0 0.0
    %3575 = vmatpush1.msra.mxu0 0.0
    %3576 = vmatprep.subr.mxu0 0.0
    %3577 = vmatpush1.msra.mxu0 0.0
    %3578 = vmatprep.mubr.f32.mxu0 0.0
    %v3579 = vand.u32 %v3150, 4294901760
    %v3580 = vsub.f32 %v3150, %v3579
    %v3581 = vand.u32 %v3580, 4294901760
    %3582 = vmatmul.mubr.f32.gmra.mrb[0].mxu0 %v3581
    %v3583 = vpop.f32.mrb[0].mxu0
    %v3584 = vadd.f32 %v3495, %v3583
    %v3585 = vpop.f32.mrb[0].mxu0
    %3586 = vdwg.mxu0
    %3587 = vmatprep.subr.mxu0 0.0
    %v3588 = vand.u32 %v52, 4294901760
    %v3589 = vsub.f32 %v52, %v3588
    %v3590 = vand.u32 %v3589, 4294901760
    %3591 = vmatpush1.msra.mxu0 %v3590
    %3592 = vmatprep.subr.mxu0 0.0
    %v3593 = vand.u32 %v53, 4294901760
    %v3594 = vsub.f32 %v53, %v3593
    %v3595 = vand.u32 %v3594, 4294901760
    %3596 = vmatpush1.msra.mxu0 %v3595
    %3597 = vmatprep.subr.mxu0 0.0
    %v3598 = vand.u32 %v54, 4294901760
    %v3599 = vsub.f32 %v54, %v3598
    %v3600 = vand.u32 %v3599, 4294901760
    %3601 = vmatpush1.msra.mxu0 %v3600
    %3602 = vmatprep.subr.mxu0 0.0
    %v3603 = vand.u32 %v55, 4294901760
    %v3604 = vsub.f32 %v55, %v3603
    %v3605 = vand.u32 %v3604, 4294901760
    %3606 = vmatpush1.msra.mxu0 %v3605
    %3607 = vmatprep.subr.mxu0 0.0
    %v3608 = vand.u32 %v56, 4294901760
    %v3609 = vsub.f32 %v56, %v3608
    %v3610 = vand.u32 %v3609, 4294901760
    %3611 = vmatpush1.msra.mxu0 %v3610
    %3612 = vmatprep.subr.mxu0 0.0
    %v3613 = vand.u32 %v57, 4294901760
    %v3614 = vsub.f32 %v57, %v3613
    %v3615 = vand.u32 %v3614, 4294901760
    %3616 = vmatpush1.msra.mxu0 %v3615
    %3617 = vmatprep.subr.mxu0 0.0
    %v3618 = vand.u32 %v58, 4294901760
    %v3619 = vsub.f32 %v58, %v3618
    %v3620 = vand.u32 %v3619, 4294901760
    %3621 = vmatpush1.msra.mxu0 %v3620
    %3622 = vmatprep.subr.mxu0 0.0
    %v3623 = vand.u32 %v59, 4294901760
    %v3624 = vsub.f32 %v59, %v3623
    %v3625 = vand.u32 %v3624, 4294901760
    %3626 = vmatpush1.msra.mxu0 %v3625
    %3627 = vmatprep.subr.mxu0 0.0
    %v3628 = vand.u32 %v60, 4294901760
    %v3629 = vsub.f32 %v60, %v3628
    %v3630 = vand.u32 %v3629, 4294901760
    %3631 = vmatpush1.msra.mxu0 %v3630
    %3632 = vmatprep.subr.mxu0 0.0
    %v3633 = vand.u32 %v61, 4294901760
    %v3634 = vsub.f32 %v61, %v3633
    %v3635 = vand.u32 %v3634, 4294901760
    %3636 = vmatpush1.msra.mxu0 %v3635
    %3637 = vmatprep.subr.mxu0 0.0
    %v3638 = vand.u32 %v62, 4294901760
    %v3639 = vsub.f32 %v62, %v3638
    %v3640 = vand.u32 %v3639, 4294901760
    %3641 = vmatpush1.msra.mxu0 %v3640
    %3642 = vmatprep.subr.mxu0 0.0
    %v3643 = vand.u32 %v63, 4294901760
    %v3644 = vsub.f32 %v63, %v3643
    %v3645 = vand.u32 %v3644, 4294901760
    %3646 = vmatpush1.msra.mxu0 %v3645
    %3647 = vmatprep.subr.mxu0 0.0
    %v3648 = vand.u32 %v64, 4294901760
    %v3649 = vsub.f32 %v64, %v3648
    %v3650 = vand.u32 %v3649, 4294901760
    %3651 = vmatpush1.msra.mxu0 %v3650
    %3652 = vmatprep.subr.mxu0 0.0
    %v3653 = vand.u32 %v65, 4294901760
    %v3654 = vsub.f32 %v65, %v3653
    %v3655 = vand.u32 %v3654, 4294901760
    %3656 = vmatpush1.msra.mxu0 %v3655
    %3657 = vmatprep.subr.mxu0 0.0
    %v3658 = vand.u32 %v66, 4294901760
    %v3659 = vsub.f32 %v66, %v3658
    %v3660 = vand.u32 %v3659, 4294901760
    %3661 = vmatpush1.msra.mxu0 %v3660
    %3662 = vmatprep.subr.mxu0 0.0
    %v3663 = vand.u32 %v67, 4294901760
    %v3664 = vsub.f32 %v67, %v3663
    %v3665 = vand.u32 %v3664, 4294901760
    %3666 = vmatpush1.msra.mxu0 %v3665
    %3667 = vmatprep.subr.mxu0 0.0
    %3668 = vmatpush1.msra.mxu0 0.0
    %3669 = vmatprep.subr.mxu0 0.0
    %3670 = vmatpush1.msra.mxu0 0.0
    %3671 = vmatprep.subr.mxu0 0.0
    %3672 = vmatpush1.msra.mxu0 0.0
    %3673 = vmatprep.subr.mxu0 0.0
    %3674 = vmatpush1.msra.mxu0 0.0
    %3675 = vmatprep.subr.mxu0 0.0
    %3676 = vmatpush1.msra.mxu0 0.0
    %3677 = vmatprep.subr.mxu0 0.0
    %3678 = vmatpush1.msra.mxu0 0.0
    %3679 = vmatprep.subr.mxu0 0.0
    %3680 = vmatpush1.msra.mxu0 0.0
    %3681 = vmatprep.subr.mxu0 0.0
    %3682 = vmatpush1.msra.mxu0 0.0
    %3683 = vmatprep.subr.mxu0 0.0
    %3684 = vmatpush1.msra.mxu0 0.0
    %3685 = vmatprep.subr.mxu0 0.0
    %3686 = vmatpush1.msra.mxu0 0.0
    %3687 = vmatprep.subr.mxu0 0.0
    %3688 = vmatpush1.msra.mxu0 0.0
    %3689 = vmatprep.subr.mxu0 0.0
    %3690 = vmatpush1.msra.mxu0 0.0
    %3691 = vmatprep.subr.mxu0 0.0
    %3692 = vmatpush1.msra.mxu0 0.0
    %3693 = vmatprep.subr.mxu0 0.0
    %3694 = vmatpush1.msra.mxu0 0.0
    %3695 = vmatprep.subr.mxu0 0.0
    %3696 = vmatpush1.msra.mxu0 0.0
    %3697 = vmatprep.subr.mxu0 0.0
    %3698 = vmatpush1.msra.mxu0 0.0
    %3699 = vmatprep.mubr.f32.mxu0 0.0
    %v3700 = vand.u32 %v3150, 4294901760
    %3701 = vmatmul.mubr.f32.gmra.mrb[0].mxu0 %v3700
    %v3702 = vpop.f32.mrb[0].mxu0
    %v3703 = vadd.f32 %v3584, %v3702
    %v3704 = vpop.f32.mrb[0].mxu0
    %3705 = vdwg.mxu0
    %3706 = vmatprep.subr.mxu0 0.0
    %v3707 = vand.u32 %v52, 4294901760
    %3708 = vmatpush1.msra.mxu0 %v3707
    %3709 = vmatprep.subr.mxu0 0.0
    %v3710 = vand.u32 %v53, 4294901760
    %3711 = vmatpush1.msra.mxu0 %v3710
    %3712 = vmatprep.subr.mxu0 0.0
    %v3713 = vand.u32 %v54, 4294901760
    %3714 = vmatpush1.msra.mxu0 %v3713
    %3715 = vmatprep.subr.mxu0 0.0
    %v3716 = vand.u32 %v55, 4294901760
    %3717 = vmatpush1.msra.mxu0 %v3716
    %3718 = vmatprep.subr.mxu0 0.0
    %v3719 = vand.u32 %v56, 4294901760
    %3720 = vmatpush1.msra.mxu0 %v3719
    %3721 = vmatprep.subr.mxu0 0.0
    %v3722 = vand.u32 %v57, 4294901760
    %3723 = vmatpush1.msra.mxu0 %v3722
    %3724 = vmatprep.subr.mxu0 0.0
    %v3725 = vand.u32 %v58, 4294901760
    %3726 = vmatpush1.msra.mxu0 %v3725
    %3727 = vmatprep.subr.mxu0 0.0
    %v3728 = vand.u32 %v59, 4294901760
    %3729 = vmatpush1.msra.mxu0 %v3728
    %3730 = vmatprep.subr.mxu0 0.0
    %v3731 = vand.u32 %v60, 4294901760
    %3732 = vmatpush1.msra.mxu0 %v3731
    %3733 = vmatprep.subr.mxu0 0.0
    %v3734 = vand.u32 %v61, 4294901760
    %3735 = vmatpush1.msra.mxu0 %v3734
    %3736 = vmatprep.subr.mxu0 0.0
    %v3737 = vand.u32 %v62, 4294901760
    %3738 = vmatpush1.msra.mxu0 %v3737
    %3739 = vmatprep.subr.mxu0 0.0
    %v3740 = vand.u32 %v63, 4294901760
    %3741 = vmatpush1.msra.mxu0 %v3740
    %3742 = vmatprep.subr.mxu0 0.0
    %v3743 = vand.u32 %v64, 4294901760
    %3744 = vmatpush1.msra.mxu0 %v3743
    %3745 = vmatprep.subr.mxu0 0.0
    %v3746 = vand.u32 %v65, 4294901760
    %3747 = vmatpush1.msra.mxu0 %v3746
    %3748 = vmatprep.subr.mxu0 0.0
    %v3749 = vand.u32 %v66, 4294901760
    %3750 = vmatpush1.msra.mxu0 %v3749
    %3751 = vmatprep.subr.mxu0 0.0
    %v3752 = vand.u32 %v67, 4294901760
    %3753 = vmatpush1.msra.mxu0 %v3752
    %3754 = vmatprep.subr.mxu0 0.0
    %3755 = vmatpush1.msra.mxu0 0.0
    %3756 = vmatprep.subr.mxu0 0.0
    %3757 = vmatpush1.msra.mxu0 0.0
    %3758 = vmatprep.subr.mxu0 0.0
    %3759 = vmatpush1.msra.mxu0 0.0
    %3760 = vmatprep.subr.mxu0 0.0
    %3761 = vmatpush1.msra.mxu0 0.0
    %3762 = vmatprep.subr.mxu0 0.0
    %3763 = vmatpush1.msra.mxu0 0.0
    %3764 = vmatprep.subr.mxu0 0.0
    %3765 = vmatpush1.msra.mxu0 0.0
    %3766 = vmatprep.subr.mxu0 0.0
    %3767 = vmatpush1.msra.mxu0 0.0
    %3768 = vmatprep.subr.mxu0 0.0
    %3769 = vmatpush1.msra.mxu0 0.0
    %3770 = vmatprep.subr.mxu0 0.0
    %3771 = vmatpush1.msra.mxu0 0.0
    %3772 = vmatprep.subr.mxu0 0.0
    %3773 = vmatpush1.msra.mxu0 0.0
    %3774 = vmatprep.subr.mxu0 0.0
    %3775 = vmatpush1.msra.mxu0 0.0
    %3776 = vmatprep.subr.mxu0 0.0
    %3777 = vmatpush1.msra.mxu0 0.0
    %3778 = vmatprep.subr.mxu0 0.0
    %3779 = vmatpush1.msra.mxu0 0.0
    %3780 = vmatprep.subr.mxu0 0.0
    %3781 = vmatpush1.msra.mxu0 0.0
    %3782 = vmatprep.subr.mxu0 0.0
    %3783 = vmatpush1.msra.mxu0 0.0
    %3784 = vmatprep.subr.mxu0 0.0
    %3785 = vmatpush1.msra.mxu0 0.0
    %3786 = vmatprep.mubr.f32.mxu0 0.0
    %v3787 = vand.u32 %v3150, 4294901760
    %3788 = vmatmul.mubr.f32.gmra.mrb[0].mxu0 %v3787
    %v3789 = vpop.f32.mrb[0].mxu0
    %v3790 = vadd.f32 %v3703, %v3789
    %v3791 = vpop.f32.mrb[0].mxu0
    %3792 = vdwg.mxu0
    %v3793 = vmul.f32 %v86, %v3790
    %v3794 = vmul.f32 %v3793, 0.16666667
    %v3795 = vadd.f32 %v3151, %v3794
    %3796 = vmatprep.subr.mxu0 0.0
    %v3797 = vand.u32 %v52, 4294901760
    %3798 = vmatpush1.msra.mxu0 %v3797
    %3799 = vmatprep.subr.mxu0 0.0
    %v3800 = vand.u32 %v53, 4294901760
    %3801 = vmatpush1.msra.mxu0 %v3800
    %3802 = vmatprep.subr.mxu0 0.0
    %v3803 = vand.u32 %v54, 4294901760
    %3804 = vmatpush1.msra.mxu0 %v3803
    %3805 = vmatprep.subr.mxu0 0.0
    %v3806 = vand.u32 %v55, 4294901760
    %3807 = vmatpush1.msra.mxu0 %v3806
    %3808 = vmatprep.subr.mxu0 0.0
    %v3809 = vand.u32 %v56, 4294901760
    %3810 = vmatpush1.msra.mxu0 %v3809
    %3811 = vmatprep.subr.mxu0 0.0
    %v3812 = vand.u32 %v57, 4294901760
    %3813 = vmatpush1.msra.mxu0 %v3812
    %3814 = vmatprep.subr.mxu0 0.0
    %v3815 = vand.u32 %v58, 4294901760
    %3816 = vmatpush1.msra.mxu0 %v3815
    %3817 = vmatprep.subr.mxu0 0.0
    %v3818 = vand.u32 %v59, 4294901760
    %3819 = vmatpush1.msra.mxu0 %v3818
    %3820 = vmatprep.subr.mxu0 0.0
    %v3821 = vand.u32 %v60, 4294901760
    %3822 = vmatpush1.msra.mxu0 %v3821
    %3823 = vmatprep.subr.mxu0 0.0
    %v3824 = vand.u32 %v61, 4294901760
    %3825 = vmatpush1.msra.mxu0 %v3824
    %3826 = vmatprep.subr.mxu0 0.0
    %v3827 = vand.u32 %v62, 4294901760
    %3828 = vmatpush1.msra.mxu0 %v3827
    %3829 = vmatprep.subr.mxu0 0.0
    %v3830 = vand.u32 %v63, 4294901760
    %3831 = vmatpush1.msra.mxu0 %v3830
    %3832 = vmatprep.subr.mxu0 0.0
    %v3833 = vand.u32 %v64, 4294901760
    %3834 = vmatpush1.msra.mxu0 %v3833
    %3835 = vmatprep.subr.mxu0 0.0
    %v3836 = vand.u32 %v65, 4294901760
    %3837 = vmatpush1.msra.mxu0 %v3836
    %3838 = vmatprep.subr.mxu0 0.0
    %v3839 = vand.u32 %v66, 4294901760
    %3840 = vmatpush1.msra.mxu0 %v3839
    %3841 = vmatprep.subr.mxu0 0.0
    %v3842 = vand.u32 %v67, 4294901760
    %3843 = vmatpush1.msra.mxu0 %v3842
    %3844 = vmatprep.subr.mxu0 0.0
    %3845 = vmatpush1.msra.mxu0 0.0
    %3846 = vmatprep.subr.mxu0 0.0
    %3847 = vmatpush1.msra.mxu0 0.0
    %3848 = vmatprep.subr.mxu0 0.0
    %3849 = vmatpush1.msra.mxu0 0.0
    %3850 = vmatprep.subr.mxu0 0.0
    %3851 = vmatpush1.msra.mxu0 0.0
    %3852 = vmatprep.subr.mxu0 0.0
    %3853 = vmatpush1.msra.mxu0 0.0
    %3854 = vmatprep.subr.mxu0 0.0
    %3855 = vmatpush1.msra.mxu0 0.0
    %3856 = vmatprep.subr.mxu0 0.0
    %3857 = vmatpush1.msra.mxu0 0.0
    %3858 = vmatprep.subr.mxu0 0.0
    %3859 = vmatpush1.msra.mxu0 0.0
    %3860 = vmatprep.subr.mxu0 0.0
    %3861 = vmatpush1.msra.mxu0 0.0
    %3862 = vmatprep.subr.mxu0 0.0
    %3863 = vmatpush1.msra.mxu0 0.0
    %3864 = vmatprep.subr.mxu0 0.0
    %3865 = vmatpush1.msra.mxu0 0.0
    %3866 = vmatprep.subr.mxu0 0.0
    %3867 = vmatpush1.msra.mxu0 0.0
    %3868 = vmatprep.subr.mxu0 0.0
    %3869 = vmatpush1.msra.mxu0 0.0
    %3870 = vmatprep.subr.mxu0 0.0
    %3871 = vmatpush1.msra.mxu0 0.0
    %3872 = vmatprep.subr.mxu0 0.0
    %3873 = vmatpush1.msra.mxu0 0.0
    %3874 = vmatprep.subr.mxu0 0.0
    %3875 = vmatpush1.msra.mxu0 0.0
    %3876 = vmatprep.mubr.f32.mxu0 0.0
    %v3877 = vand.u32 %v3794, 4294901760
    %v3878 = vsub.f32 %v3794, %v3877
    %v3879 = vand.u32 %v3878, 4294901760
    %v3880 = vsub.f32 %v3878, %v3879
    %v3881 = vand.u32 %v3880, 4294901760
    %3882 = vmatmul.mubr.f32.gmra.mrb[0].mxu0 %v3881
    %v3883 = vpop.f32.mrb[0].mxu0
    %v3884 = vadd.f32 0.0, %v3883
    %v3885 = vpop.f32.mrb[0].mxu0
    %3886 = vdwg.mxu0
    %3887 = vmatprep.subr.mxu0 0.0
    %v3888 = vand.u32 %v52, 4294901760
    %v3889 = vsub.f32 %v52, %v3888
    %v3890 = vand.u32 %v3889, 4294901760
    %v3891 = vsub.f32 %v3889, %v3890
    %v3892 = vand.u32 %v3891, 4294901760
    %3893 = vmatpush1.msra.mxu0 %v3892
    %3894 = vmatprep.subr.mxu0 0.0
    %v3895 = vand.u32 %v53, 4294901760
    %v3896 = vsub.f32 %v53, %v3895
    %v3897 = vand.u32 %v3896, 4294901760
    %v3898 = vsub.f32 %v3896, %v3897
    %v3899 = vand.u32 %v3898, 4294901760
    %3900 = vmatpush1.msra.mxu0 %v3899
    %3901 = vmatprep.subr.mxu0 0.0
    %v3902 = vand.u32 %v54, 4294901760
    %v3903 = vsub.f32 %v54, %v3902
    %v3904 = vand.u32 %v3903, 4294901760
    %v3905 = vsub.f32 %v3903, %v3904
    %v3906 = vand.u32 %v3905, 4294901760
    %3907 = vmatpush1.msra.mxu0 %v3906
    %3908 = vmatprep.subr.mxu0 0.0
    %v3909 = vand.u32 %v55, 4294901760
    %v3910 = vsub.f32 %v55, %v3909
    %v3911 = vand.u32 %v3910, 4294901760
    %v3912 = vsub.f32 %v3910, %v3911
    %v3913 = vand.u32 %v3912, 4294901760
    %3914 = vmatpush1.msra.mxu0 %v3913
    %3915 = vmatprep.subr.mxu0 0.0
    %v3916 = vand.u32 %v56, 4294901760
    %v3917 = vsub.f32 %v56, %v3916
    %v3918 = vand.u32 %v3917, 4294901760
    %v3919 = vsub.f32 %v3917, %v3918
    %v3920 = vand.u32 %v3919, 4294901760
    %3921 = vmatpush1.msra.mxu0 %v3920
    %3922 = vmatprep.subr.mxu0 0.0
    %v3923 = vand.u32 %v57, 4294901760
    %v3924 = vsub.f32 %v57, %v3923
    %v3925 = vand.u32 %v3924, 4294901760
    %v3926 = vsub.f32 %v3924, %v3925
    %v3927 = vand.u32 %v3926, 4294901760
    %3928 = vmatpush1.msra.mxu0 %v3927
    %3929 = vmatprep.subr.mxu0 0.0
    %v3930 = vand.u32 %v58, 4294901760
    %v3931 = vsub.f32 %v58, %v3930
    %v3932 = vand.u32 %v3931, 4294901760
    %v3933 = vsub.f32 %v3931, %v3932
    %v3934 = vand.u32 %v3933, 4294901760
    %3935 = vmatpush1.msra.mxu0 %v3934
    %3936 = vmatprep.subr.mxu0 0.0
    %v3937 = vand.u32 %v59, 4294901760
    %v3938 = vsub.f32 %v59, %v3937
    %v3939 = vand.u32 %v3938, 4294901760
    %v3940 = vsub.f32 %v3938, %v3939
    %v3941 = vand.u32 %v3940, 4294901760
    %3942 = vmatpush1.msra.mxu0 %v3941
    %3943 = vmatprep.subr.mxu0 0.0
    %v3944 = vand.u32 %v60, 4294901760
    %v3945 = vsub.f32 %v60, %v3944
    %v3946 = vand.u32 %v3945, 4294901760
    %v3947 = vsub.f32 %v3945, %v3946
    %v3948 = vand.u32 %v3947, 4294901760
    %3949 = vmatpush1.msra.mxu0 %v3948
    %3950 = vmatprep.subr.mxu0 0.0
    %v3951 = vand.u32 %v61, 4294901760
    %v3952 = vsub.f32 %v61, %v3951
    %v3953 = vand.u32 %v3952, 4294901760
    %v3954 = vsub.f32 %v3952, %v3953
    %v3955 = vand.u32 %v3954, 4294901760
    %3956 = vmatpush1.msra.mxu0 %v3955
    %3957 = vmatprep.subr.mxu0 0.0
    %v3958 = vand.u32 %v62, 4294901760
    %v3959 = vsub.f32 %v62, %v3958
    %v3960 = vand.u32 %v3959, 4294901760
    %v3961 = vsub.f32 %v3959, %v3960
    %v3962 = vand.u32 %v3961, 4294901760
    %3963 = vmatpush1.msra.mxu0 %v3962
    %3964 = vmatprep.subr.mxu0 0.0
    %v3965 = vand.u32 %v63, 4294901760
    %v3966 = vsub.f32 %v63, %v3965
    %v3967 = vand.u32 %v3966, 4294901760
    %v3968 = vsub.f32 %v3966, %v3967
    %v3969 = vand.u32 %v3968, 4294901760
    %3970 = vmatpush1.msra.mxu0 %v3969
    %3971 = vmatprep.subr.mxu0 0.0
    %v3972 = vand.u32 %v64, 4294901760
    %v3973 = vsub.f32 %v64, %v3972
    %v3974 = vand.u32 %v3973, 4294901760
    %v3975 = vsub.f32 %v3973, %v3974
    %v3976 = vand.u32 %v3975, 4294901760
    %3977 = vmatpush1.msra.mxu0 %v3976
    %3978 = vmatprep.subr.mxu0 0.0
    %v3979 = vand.u32 %v65, 4294901760
    %v3980 = vsub.f32 %v65, %v3979
    %v3981 = vand.u32 %v3980, 4294901760
    %v3982 = vsub.f32 %v3980, %v3981
    %v3983 = vand.u32 %v3982, 4294901760
    %3984 = vmatpush1.msra.mxu0 %v3983
    %3985 = vmatprep.subr.mxu0 0.0
    %v3986 = vand.u32 %v66, 4294901760
    %v3987 = vsub.f32 %v66, %v3986
    %v3988 = vand.u32 %v3987, 4294901760
    %v3989 = vsub.f32 %v3987, %v3988
    %v3990 = vand.u32 %v3989, 4294901760
    %3991 = vmatpush1.msra.mxu0 %v3990
    %3992 = vmatprep.subr.mxu0 0.0
    %v3993 = vand.u32 %v67, 4294901760
    %v3994 = vsub.f32 %v67, %v3993
    %v3995 = vand.u32 %v3994, 4294901760
    %v3996 = vsub.f32 %v3994, %v3995
    %v3997 = vand.u32 %v3996, 4294901760
    %3998 = vmatpush1.msra.mxu0 %v3997
    %3999 = vmatprep.subr.mxu0 0.0
    %4000 = vmatpush1.msra.mxu0 0.0
    %4001 = vmatprep.subr.mxu0 0.0
    %4002 = vmatpush1.msra.mxu0 0.0
    %4003 = vmatprep.subr.mxu0 0.0
    %4004 = vmatpush1.msra.mxu0 0.0
    %4005 = vmatprep.subr.mxu0 0.0
    %4006 = vmatpush1.msra.mxu0 0.0
    %4007 = vmatprep.subr.mxu0 0.0
    %4008 = vmatpush1.msra.mxu0 0.0
    %4009 = vmatprep.subr.mxu0 0.0
    %4010 = vmatpush1.msra.mxu0 0.0
    %4011 = vmatprep.subr.mxu0 0.0
    %4012 = vmatpush1.msra.mxu0 0.0
    %4013 = vmatprep.subr.mxu0 0.0
    %4014 = vmatpush1.msra.mxu0 0.0
    %4015 = vmatprep.subr.mxu0 0.0
    %4016 = vmatpush1.msra.mxu0 0.0
    %4017 = vmatprep.subr.mxu0 0.0
    %4018 = vmatpush1.msra.mxu0 0.0
    %4019 = vmatprep.subr.mxu0 0.0
    %4020 = vmatpush1.msra.mxu0 0.0
    %4021 = vmatprep.subr.mxu0 0.0
    %4022 = vmatpush1.msra.mxu0 0.0
    %4023 = vmatprep.subr.mxu0 0.0
    %4024 = vmatpush1.msra.mxu0 0.0
    %4025 = vmatprep.subr.mxu0 0.0
    %4026 = vmatpush1.msra.mxu0 0.0
    %4027 = vmatprep.subr.mxu0 0.0
    %4028 = vmatpush1.msra.mxu0 0.0
    %4029 = vmatprep.subr.mxu0 0.0
    %4030 = vmatpush1.msra.mxu0 0.0
    %4031 = vmatprep.mubr.f32.mxu0 0.0
    %v4032 = vand.u32 %v3794, 4294901760
    %4033 = vmatmul.mubr.f32.gmra.mrb[0].mxu0 %v4032
    %v4034 = vpop.f32.mrb[0].mxu0
    %v4035 = vadd.f32 %v3884, %v4034
    %v4036 = vpop.f32.mrb[0].mxu0
    %4037 = vdwg.mxu0
    %4038 = vmatprep.subr.mxu0 0.0
    %v4039 = vand.u32 %v52, 4294901760
    %v4040 = vsub.f32 %v52, %v4039
    %4041 = vmatpush1.msra.mxu0 %v4040
    %4042 = vmatprep.subr.mxu0 0.0
    %v4043 = vand.u32 %v53, 4294901760
    %v4044 = vsub.f32 %v53, %v4043
    %4045 = vmatpush1.msra.mxu0 %v4044
    %4046 = vmatprep.subr.mxu0 0.0
    %v4047 = vand.u32 %v54, 4294901760
    %v4048 = vsub.f32 %v54, %v4047
    %4049 = vmatpush1.msra.mxu0 %v4048
    %4050 = vmatprep.subr.mxu0 0.0
    %v4051 = vand.u32 %v55, 4294901760
    %v4052 = vsub.f32 %v55, %v4051
    %4053 = vmatpush1.msra.mxu0 %v4052
    %4054 = vmatprep.subr.mxu0 0.0
    %v4055 = vand.u32 %v56, 4294901760
    %v4056 = vsub.f32 %v56, %v4055
    %4057 = vmatpush1.msra.mxu0 %v4056
    %4058 = vmatprep.subr.mxu0 0.0
    %v4059 = vand.u32 %v57, 4294901760
    %v4060 = vsub.f32 %v57, %v4059
    %4061 = vmatpush1.msra.mxu0 %v4060
    %4062 = vmatprep.subr.mxu0 0.0
    %v4063 = vand.u32 %v58, 4294901760
    %v4064 = vsub.f32 %v58, %v4063
    %4065 = vmatpush1.msra.mxu0 %v4064
    %4066 = vmatprep.subr.mxu0 0.0
    %v4067 = vand.u32 %v59, 4294901760
    %v4068 = vsub.f32 %v59, %v4067
    %4069 = vmatpush1.msra.mxu0 %v4068
    %4070 = vmatprep.subr.mxu0 0.0
    %v4071 = vand.u32 %v60, 4294901760
    %v4072 = vsub.f32 %v60, %v4071
    %4073 = vmatpush1.msra.mxu0 %v4072
    %4074 = vmatprep.subr.mxu0 0.0
    %v4075 = vand.u32 %v61, 4294901760
    %v4076 = vsub.f32 %v61, %v4075
    %4077 = vmatpush1.msra.mxu0 %v4076
    %4078 = vmatprep.subr.mxu0 0.0
    %v4079 = vand.u32 %v62, 4294901760
    %v4080 = vsub.f32 %v62, %v4079
    %4081 = vmatpush1.msra.mxu0 %v4080
    %4082 = vmatprep.subr.mxu0 0.0
    %v4083 = vand.u32 %v63, 4294901760
    %v4084 = vsub.f32 %v63, %v4083
    %4085 = vmatpush1.msra.mxu0 %v4084
    %4086 = vmatprep.subr.mxu0 0.0
    %v4087 = vand.u32 %v64, 4294901760
    %v4088 = vsub.f32 %v64, %v4087
    %4089 = vmatpush1.msra.mxu0 %v4088
    %4090 = vmatprep.subr.mxu0 0.0
    %v4091 = vand.u32 %v65, 4294901760
    %v4092 = vsub.f32 %v65, %v4091
    %4093 = vmatpush1.msra.mxu0 %v4092
    %4094 = vmatprep.subr.mxu0 0.0
    %v4095 = vand.u32 %v66, 4294901760
    %v4096 = vsub.f32 %v66, %v4095
    %4097 = vmatpush1.msra.mxu0 %v4096
    %4098 = vmatprep.subr.mxu0 0.0
    %v4099 = vand.u32 %v67, 4294901760
    %v4100 = vsub.f32 %v67, %v4099
    %4101 = vmatpush1.msra.mxu0 %v4100
    %4102 = vmatprep.subr.mxu0 0.0
    %4103 = vmatpush1.msra.mxu0 0.0
    %4104 = vmatprep.subr.mxu0 0.0
    %4105 = vmatpush1.msra.mxu0 0.0
    %4106 = vmatprep.subr.mxu0 0.0
    %4107 = vmatpush1.msra.mxu0 0.0
    %4108 = vmatprep.subr.mxu0 0.0
    %4109 = vmatpush1.msra.mxu0 0.0
    %4110 = vmatprep.subr.mxu0 0.0
    %4111 = vmatpush1.msra.mxu0 0.0
    %4112 = vmatprep.subr.mxu0 0.0
    %4113 = vmatpush1.msra.mxu0 0.0
    %4114 = vmatprep.subr.mxu0 0.0
    %4115 = vmatpush1.msra.mxu0 0.0
    %4116 = vmatprep.subr.mxu0 0.0
    %4117 = vmatpush1.msra.mxu0 0.0
    %4118 = vmatprep.subr.mxu0 0.0
    %4119 = vmatpush1.msra.mxu0 0.0
    %4120 = vmatprep.subr.mxu0 0.0
    %4121 = vmatpush1.msra.mxu0 0.0
    %4122 = vmatprep.subr.mxu0 0.0
    %4123 = vmatpush1.msra.mxu0 0.0
    %4124 = vmatprep.subr.mxu0 0.0
    %4125 = vmatpush1.msra.mxu0 0.0
    %4126 = vmatprep.subr.mxu0 0.0
    %4127 = vmatpush1.msra.mxu0 0.0
    %4128 = vmatprep.subr.mxu0 0.0
    %4129 = vmatpush1.msra.mxu0 0.0
    %4130 = vmatprep.subr.mxu0 0.0
    %4131 = vmatpush1.msra.mxu0 0.0
    %4132 = vmatprep.subr.mxu0 0.0
    %4133 = vmatpush1.msra.mxu0 0.0
    %4134 = vmatprep.mubr.f32.mxu0 0.0
    %v4135 = vand.u32 %v3794, 4294901760
    %v4136 = vsub.f32 %v3794, %v4135
    %4137 = vmatmul.mubr.f32.gmra.mrb[0].mxu0 %v4136
    %v4138 = vpop.f32.mrb[0].mxu0
    %v4139 = vadd.f32 %v4035, %v4138
    %v4140 = vpop.f32.mrb[0].mxu0
    %4141 = vdwg.mxu0
    %4142 = vmatprep.subr.mxu0 0.0
    %v4143 = vand.u32 %v52, 4294901760
    %4144 = vmatpush1.msra.mxu0 %v4143
    %4145 = vmatprep.subr.mxu0 0.0
    %v4146 = vand.u32 %v53, 4294901760
    %4147 = vmatpush1.msra.mxu0 %v4146
    %4148 = vmatprep.subr.mxu0 0.0
    %v4149 = vand.u32 %v54, 4294901760
    %4150 = vmatpush1.msra.mxu0 %v4149
    %4151 = vmatprep.subr.mxu0 0.0
    %v4152 = vand.u32 %v55, 4294901760
    %4153 = vmatpush1.msra.mxu0 %v4152
    %4154 = vmatprep.subr.mxu0 0.0
    %v4155 = vand.u32 %v56, 4294901760
    %4156 = vmatpush1.msra.mxu0 %v4155
    %4157 = vmatprep.subr.mxu0 0.0
    %v4158 = vand.u32 %v57, 4294901760
    %4159 = vmatpush1.msra.mxu0 %v4158
    %4160 = vmatprep.subr.mxu0 0.0
    %v4161 = vand.u32 %v58, 4294901760
    %4162 = vmatpush1.msra.mxu0 %v4161
    %4163 = vmatprep.subr.mxu0 0.0
    %v4164 = vand.u32 %v59, 4294901760
    %4165 = vmatpush1.msra.mxu0 %v4164
    %4166 = vmatprep.subr.mxu0 0.0
    %v4167 = vand.u32 %v60, 4294901760
    %4168 = vmatpush1.msra.mxu0 %v4167
    %4169 = vmatprep.subr.mxu0 0.0
    %v4170 = vand.u32 %v61, 4294901760
    %4171 = vmatpush1.msra.mxu0 %v4170
    %4172 = vmatprep.subr.mxu0 0.0
    %v4173 = vand.u32 %v62, 4294901760
    %4174 = vmatpush1.msra.mxu0 %v4173
    %4175 = vmatprep.subr.mxu0 0.0
    %v4176 = vand.u32 %v63, 4294901760
    %4177 = vmatpush1.msra.mxu0 %v4176
    %4178 = vmatprep.subr.mxu0 0.0
    %v4179 = vand.u32 %v64, 4294901760
    %4180 = vmatpush1.msra.mxu0 %v4179
    %4181 = vmatprep.subr.mxu0 0.0
    %v4182 = vand.u32 %v65, 4294901760
    %4183 = vmatpush1.msra.mxu0 %v4182
    %4184 = vmatprep.subr.mxu0 0.0
    %v4185 = vand.u32 %v66, 4294901760
    %4186 = vmatpush1.msra.mxu0 %v4185
    %4187 = vmatprep.subr.mxu0 0.0
    %v4188 = vand.u32 %v67, 4294901760
    %4189 = vmatpush1.msra.mxu0 %v4188
    %4190 = vmatprep.subr.mxu0 0.0
    %4191 = vmatpush1.msra.mxu0 0.0
    %4192 = vmatprep.subr.mxu0 0.0
    %4193 = vmatpush1.msra.mxu0 0.0
    %4194 = vmatprep.subr.mxu0 0.0
    %4195 = vmatpush1.msra.mxu0 0.0
    %4196 = vmatprep.subr.mxu0 0.0
    %4197 = vmatpush1.msra.mxu0 0.0
    %4198 = vmatprep.subr.mxu0 0.0
    %4199 = vmatpush1.msra.mxu0 0.0
    %4200 = vmatprep.subr.mxu0 0.0
    %4201 = vmatpush1.msra.mxu0 0.0
    %4202 = vmatprep.subr.mxu0 0.0
    %4203 = vmatpush1.msra.mxu0 0.0
    %4204 = vmatprep.subr.mxu0 0.0
    %4205 = vmatpush1.msra.mxu0 0.0
    %4206 = vmatprep.subr.mxu0 0.0
    %4207 = vmatpush1.msra.mxu0 0.0
    %4208 = vmatprep.subr.mxu0 0.0
    %4209 = vmatpush1.msra.mxu0 0.0
    %4210 = vmatprep.subr.mxu0 0.0
    %4211 = vmatpush1.msra.mxu0 0.0
    %4212 = vmatprep.subr.mxu0 0.0
    %4213 = vmatpush1.msra.mxu0 0.0
    %4214 = vmatprep.subr.mxu0 0.0
    %4215 = vmatpush1.msra.mxu0 0.0
    %4216 = vmatprep.subr.mxu0 0.0
    %4217 = vmatpush1.msra.mxu0 0.0
    %4218 = vmatprep.subr.mxu0 0.0
    %4219 = vmatpush1.msra.mxu0 0.0
    %4220 = vmatprep.subr.mxu0 0.0
    %4221 = vmatpush1.msra.mxu0 0.0
    %4222 = vmatprep.mubr.f32.mxu0 0.0
    %v4223 = vand.u32 %v3794, 4294901760
    %v4224 = vsub.f32 %v3794, %v4223
    %v4225 = vand.u32 %v4224, 4294901760
    %4226 = vmatmul.mubr.f32.gmra.mrb[0].mxu0 %v4225
    %v4227 = vpop.f32.mrb[0].mxu0
    %v4228 = vadd.f32 %v4139, %v4227
    %v4229 = vpop.f32.mrb[0].mxu0
    %4230 = vdwg.mxu0
    %4231 = vmatprep.subr.mxu0 0.0
    %v4232 = vand.u32 %v52, 4294901760
    %v4233 = vsub.f32 %v52, %v4232
    %v4234 = vand.u32 %v4233, 4294901760
    %4235 = vmatpush1.msra.mxu0 %v4234
    %4236 = vmatprep.subr.mxu0 0.0
    %v4237 = vand.u32 %v53, 4294901760
    %v4238 = vsub.f32 %v53, %v4237
    %v4239 = vand.u32 %v4238, 4294901760
    %4240 = vmatpush1.msra.mxu0 %v4239
    %4241 = vmatprep.subr.mxu0 0.0
    %v4242 = vand.u32 %v54, 4294901760
    %v4243 = vsub.f32 %v54, %v4242
    %v4244 = vand.u32 %v4243, 4294901760
    %4245 = vmatpush1.msra.mxu0 %v4244
    %4246 = vmatprep.subr.mxu0 0.0
    %v4247 = vand.u32 %v55, 4294901760
    %v4248 = vsub.f32 %v55, %v4247
    %v4249 = vand.u32 %v4248, 4294901760
    %4250 = vmatpush1.msra.mxu0 %v4249
    %4251 = vmatprep.subr.mxu0 0.0
    %v4252 = vand.u32 %v56, 4294901760
    %v4253 = vsub.f32 %v56, %v4252
    %v4254 = vand.u32 %v4253, 4294901760
    %4255 = vmatpush1.msra.mxu0 %v4254
    %4256 = vmatprep.subr.mxu0 0.0
    %v4257 = vand.u32 %v57, 4294901760
    %v4258 = vsub.f32 %v57, %v4257
    %v4259 = vand.u32 %v4258, 4294901760
    %4260 = vmatpush1.msra.mxu0 %v4259
    %4261 = vmatprep.subr.mxu0 0.0
    %v4262 = vand.u32 %v58, 4294901760
    %v4263 = vsub.f32 %v58, %v4262
    %v4264 = vand.u32 %v4263, 4294901760
    %4265 = vmatpush1.msra.mxu0 %v4264
    %4266 = vmatprep.subr.mxu0 0.0
    %v4267 = vand.u32 %v59, 4294901760
    %v4268 = vsub.f32 %v59, %v4267
    %v4269 = vand.u32 %v4268, 4294901760
    %4270 = vmatpush1.msra.mxu0 %v4269
    %4271 = vmatprep.subr.mxu0 0.0
    %v4272 = vand.u32 %v60, 4294901760
    %v4273 = vsub.f32 %v60, %v4272
    %v4274 = vand.u32 %v4273, 4294901760
    %4275 = vmatpush1.msra.mxu0 %v4274
    %4276 = vmatprep.subr.mxu0 0.0
    %v4277 = vand.u32 %v61, 4294901760
    %v4278 = vsub.f32 %v61, %v4277
    %v4279 = vand.u32 %v4278, 4294901760
    %4280 = vmatpush1.msra.mxu0 %v4279
    %4281 = vmatprep.subr.mxu0 0.0
    %v4282 = vand.u32 %v62, 4294901760
    %v4283 = vsub.f32 %v62, %v4282
    %v4284 = vand.u32 %v4283, 4294901760
    %4285 = vmatpush1.msra.mxu0 %v4284
    %4286 = vmatprep.subr.mxu0 0.0
    %v4287 = vand.u32 %v63, 4294901760
    %v4288 = vsub.f32 %v63, %v4287
    %v4289 = vand.u32 %v4288, 4294901760
    %4290 = vmatpush1.msra.mxu0 %v4289
    %4291 = vmatprep.subr.mxu0 0.0
    %v4292 = vand.u32 %v64, 4294901760
    %v4293 = vsub.f32 %v64, %v4292
    %v4294 = vand.u32 %v4293, 4294901760
    %4295 = vmatpush1.msra.mxu0 %v4294
    %4296 = vmatprep.subr.mxu0 0.0
    %v4297 = vand.u32 %v65, 4294901760
    %v4298 = vsub.f32 %v65, %v4297
    %v4299 = vand.u32 %v4298, 4294901760
    %4300 = vmatpush1.msra.mxu0 %v4299
    %4301 = vmatprep.subr.mxu0 0.0
    %v4302 = vand.u32 %v66, 4294901760
    %v4303 = vsub.f32 %v66, %v4302
    %v4304 = vand.u32 %v4303, 4294901760
    %4305 = vmatpush1.msra.mxu0 %v4304
    %4306 = vmatprep.subr.mxu0 0.0
    %v4307 = vand.u32 %v67, 4294901760
    %v4308 = vsub.f32 %v67, %v4307
    %v4309 = vand.u32 %v4308, 4294901760
    %4310 = vmatpush1.msra.mxu0 %v4309
    %4311 = vmatprep.subr.mxu0 0.0
    %4312 = vmatpush1.msra.mxu0 0.0
    %4313 = vmatprep.subr.mxu0 0.0
    %4314 = vmatpush1.msra.mxu0 0.0
    %4315 = vmatprep.subr.mxu0 0.0
    %4316 = vmatpush1.msra.mxu0 0.0
    %4317 = vmatprep.subr.mxu0 0.0
    %4318 = vmatpush1.msra.mxu0 0.0
    %4319 = vmatprep.subr.mxu0 0.0
    %4320 = vmatpush1.msra.mxu0 0.0
    %4321 = vmatprep.subr.mxu0 0.0
    %4322 = vmatpush1.msra.mxu0 0.0
    %4323 = vmatprep.subr.mxu0 0.0
    %4324 = vmatpush1.msra.mxu0 0.0
    %4325 = vmatprep.subr.mxu0 0.0
    %4326 = vmatpush1.msra.mxu0 0.0
    %4327 = vmatprep.subr.mxu0 0.0
    %4328 = vmatpush1.msra.mxu0 0.0
    %4329 = vmatprep.subr.mxu0 0.0
    %4330 = vmatpush1.msra.mxu0 0.0
    %4331 = vmatprep.subr.mxu0 0.0
    %4332 = vmatpush1.msra.mxu0 0.0
    %4333 = vmatprep.subr.mxu0 0.0
    %4334 = vmatpush1.msra.mxu0 0.0
    %4335 = vmatprep.subr.mxu0 0.0
    %4336 = vmatpush1.msra.mxu0 0.0
    %4337 = vmatprep.subr.mxu0 0.0
    %4338 = vmatpush1.msra.mxu0 0.0
    %4339 = vmatprep.subr.mxu0 0.0
    %4340 = vmatpush1.msra.mxu0 0.0
    %4341 = vmatprep.subr.mxu0 0.0
    %4342 = vmatpush1.msra.mxu0 0.0
    %4343 = vmatprep.mubr.f32.mxu0 0.0
    %v4344 = vand.u32 %v3794, 4294901760
    %4345 = vmatmul.mubr.f32.gmra.mrb[0].mxu0 %v4344
    %v4346 = vpop.f32.mrb[0].mxu0
    %v4347 = vadd.f32 %v4228, %v4346
    %v4348 = vpop.f32.mrb[0].mxu0
    %4349 = vdwg.mxu0
    %4350 = vmatprep.subr.mxu0 0.0
    %v4351 = vand.u32 %v52, 4294901760
    %4352 = vmatpush1.msra.mxu0 %v4351
    %4353 = vmatprep.subr.mxu0 0.0
    %v4354 = vand.u32 %v53, 4294901760
    %4355 = vmatpush1.msra.mxu0 %v4354
    %4356 = vmatprep.subr.mxu0 0.0
    %v4357 = vand.u32 %v54, 4294901760
    %4358 = vmatpush1.msra.mxu0 %v4357
    %4359 = vmatprep.subr.mxu0 0.0
    %v4360 = vand.u32 %v55, 4294901760
    %4361 = vmatpush1.msra.mxu0 %v4360
    %4362 = vmatprep.subr.mxu0 0.0
    %v4363 = vand.u32 %v56, 4294901760
    %4364 = vmatpush1.msra.mxu0 %v4363
    %4365 = vmatprep.subr.mxu0 0.0
    %v4366 = vand.u32 %v57, 4294901760
    %4367 = vmatpush1.msra.mxu0 %v4366
    %4368 = vmatprep.subr.mxu0 0.0
    %v4369 = vand.u32 %v58, 4294901760
    %4370 = vmatpush1.msra.mxu0 %v4369
    %4371 = vmatprep.subr.mxu0 0.0
    %v4372 = vand.u32 %v59, 4294901760
    %4373 = vmatpush1.msra.mxu0 %v4372
    %4374 = vmatprep.subr.mxu0 0.0
    %v4375 = vand.u32 %v60, 4294901760
    %4376 = vmatpush1.msra.mxu0 %v4375
    %4377 = vmatprep.subr.mxu0 0.0
    %v4378 = vand.u32 %v61, 4294901760
    %4379 = vmatpush1.msra.mxu0 %v4378
    %4380 = vmatprep.subr.mxu0 0.0
    %v4381 = vand.u32 %v62, 4294901760
    %4382 = vmatpush1.msra.mxu0 %v4381
    %4383 = vmatprep.subr.mxu0 0.0
    %v4384 = vand.u32 %v63, 4294901760
    %4385 = vmatpush1.msra.mxu0 %v4384
    %4386 = vmatprep.subr.mxu0 0.0
    %v4387 = vand.u32 %v64, 4294901760
    %4388 = vmatpush1.msra.mxu0 %v4387
    %4389 = vmatprep.subr.mxu0 0.0
    %v4390 = vand.u32 %v65, 4294901760
    %4391 = vmatpush1.msra.mxu0 %v4390
    %4392 = vmatprep.subr.mxu0 0.0
    %v4393 = vand.u32 %v66, 4294901760
    %4394 = vmatpush1.msra.mxu0 %v4393
    %4395 = vmatprep.subr.mxu0 0.0
    %v4396 = vand.u32 %v67, 4294901760
    %4397 = vmatpush1.msra.mxu0 %v4396
    %4398 = vmatprep.subr.mxu0 0.0
    %4399 = vmatpush1.msra.mxu0 0.0
    %4400 = vmatprep.subr.mxu0 0.0
    %4401 = vmatpush1.msra.mxu0 0.0
    %4402 = vmatprep.subr.mxu0 0.0
    %4403 = vmatpush1.msra.mxu0 0.0
    %4404 = vmatprep.subr.mxu0 0.0
    %4405 = vmatpush1.msra.mxu0 0.0
    %4406 = vmatprep.subr.mxu0 0.0
    %4407 = vmatpush1.msra.mxu0 0.0
    %4408 = vmatprep.subr.mxu0 0.0
    %4409 = vmatpush1.msra.mxu0 0.0
    %4410 = vmatprep.subr.mxu0 0.0
    %4411 = vmatpush1.msra.mxu0 0.0
    %4412 = vmatprep.subr.mxu0 0.0
    %4413 = vmatpush1.msra.mxu0 0.0
    %4414 = vmatprep.subr.mxu0 0.0
    %4415 = vmatpush1.msra.mxu0 0.0
    %4416 = vmatprep.subr.mxu0 0.0
    %4417 = vmatpush1.msra.mxu0 0.0
    %4418 = vmatprep.subr.mxu0 0.0
    %4419 = vmatpush1.msra.mxu0 0.0
    %4420 = vmatprep.subr.mxu0 0.0
    %4421 = vmatpush1.msra.mxu0 0.0
    %4422 = vmatprep.subr.mxu0 0.0
    %4423 = vmatpush1.msra.mxu0 0.0
    %4424 = vmatprep.subr.mxu0 0.0
    %4425 = vmatpush1.msra.mxu0 0.0
    %4426 = vmatprep.subr.mxu0 0.0
    %4427 = vmatpush1.msra.mxu0 0.0
    %4428 = vmatprep.subr.mxu0 0.0
    %4429 = vmatpush1.msra.mxu0 0.0
    %4430 = vmatprep.mubr.f32.mxu0 0.0
    %v4431 = vand.u32 %v3794, 4294901760
    %4432 = vmatmul.mubr.f32.gmra.mrb[0].mxu0 %v4431
    %v4433 = vpop.f32.mrb[0].mxu0
    %v4434 = vadd.f32 %v4347, %v4433
    %v4435 = vpop.f32.mrb[0].mxu0
    %4436 = vdwg.mxu0
    %v4437 = vmul.f32 %v86, %v4434
    %v4438 = vmul.f32 %v4437, 0.14285715
    %v4439 = vadd.f32 %v3795, %v4438
    %4440 = vmatprep.subr.mxu0 0.0
    %v4441 = vand.u32 %v52, 4294901760
    %4442 = vmatpush1.msra.mxu0 %v4441
    %4443 = vmatprep.subr.mxu0 0.0
    %v4444 = vand.u32 %v53, 4294901760
    %4445 = vmatpush1.msra.mxu0 %v4444
    %4446 = vmatprep.subr.mxu0 0.0
    %v4447 = vand.u32 %v54, 4294901760
    %4448 = vmatpush1.msra.mxu0 %v4447
    %4449 = vmatprep.subr.mxu0 0.0
    %v4450 = vand.u32 %v55, 4294901760
    %4451 = vmatpush1.msra.mxu0 %v4450
    %4452 = vmatprep.subr.mxu0 0.0
    %v4453 = vand.u32 %v56, 4294901760
    %4454 = vmatpush1.msra.mxu0 %v4453
    %4455 = vmatprep.subr.mxu0 0.0
    %v4456 = vand.u32 %v57, 4294901760
    %4457 = vmatpush1.msra.mxu0 %v4456
    %4458 = vmatprep.subr.mxu0 0.0
    %v4459 = vand.u32 %v58, 4294901760
    %4460 = vmatpush1.msra.mxu0 %v4459
    %4461 = vmatprep.subr.mxu0 0.0
    %v4462 = vand.u32 %v59, 4294901760
    %4463 = vmatpush1.msra.mxu0 %v4462
    %4464 = vmatprep.subr.mxu0 0.0
    %v4465 = vand.u32 %v60, 4294901760
    %4466 = vmatpush1.msra.mxu0 %v4465
    %4467 = vmatprep.subr.mxu0 0.0
    %v4468 = vand.u32 %v61, 4294901760
    %4469 = vmatpush1.msra.mxu0 %v4468
    %4470 = vmatprep.subr.mxu0 0.0
    %v4471 = vand.u32 %v62, 4294901760
    %4472 = vmatpush1.msra.mxu0 %v4471
    %4473 = vmatprep.subr.mxu0 0.0
    %v4474 = vand.u32 %v63, 4294901760
    %4475 = vmatpush1.msra.mxu0 %v4474
    %4476 = vmatprep.subr.mxu0 0.0
    %v4477 = vand.u32 %v64, 4294901760
    %4478 = vmatpush1.msra.mxu0 %v4477
    %4479 = vmatprep.subr.mxu0 0.0
    %v4480 = vand.u32 %v65, 4294901760
    %4481 = vmatpush1.msra.mxu0 %v4480
    %4482 = vmatprep.subr.mxu0 0.0
    %v4483 = vand.u32 %v66, 4294901760
    %4484 = vmatpush1.msra.mxu0 %v4483
    %4485 = vmatprep.subr.mxu0 0.0
    %v4486 = vand.u32 %v67, 4294901760
    %4487 = vmatpush1.msra.mxu0 %v4486
    %4488 = vmatprep.subr.mxu0 0.0
    %4489 = vmatpush1.msra.mxu0 0.0
    %4490 = vmatprep.subr.mxu0 0.0
    %4491 = vmatpush1.msra.mxu0 0.0
    %4492 = vmatprep.subr.mxu0 0.0
    %4493 = vmatpush1.msra.mxu0 0.0
    %4494 = vmatprep.subr.mxu0 0.0
    %4495 = vmatpush1.msra.mxu0 0.0
    %4496 = vmatprep.subr.mxu0 0.0
    %4497 = vmatpush1.msra.mxu0 0.0
    %4498 = vmatprep.subr.mxu0 0.0
    %4499 = vmatpush1.msra.mxu0 0.0
    %4500 = vmatprep.subr.mxu0 0.0
    %4501 = vmatpush1.msra.mxu0 0.0
    %4502 = vmatprep.subr.mxu0 0.0
    %4503 = vmatpush1.msra.mxu0 0.0
    %4504 = vmatprep.subr.mxu0 0.0
    %4505 = vmatpush1.msra.mxu0 0.0
    %4506 = vmatprep.subr.mxu0 0.0
    %4507 = vmatpush1.msra.mxu0 0.0
    %4508 = vmatprep.subr.mxu0 0.0
    %4509 = vmatpush1.msra.mxu0 0.0
    %4510 = vmatprep.subr.mxu0 0.0
    %4511 = vmatpush1.msra.mxu0 0.0
    %4512 = vmatprep.subr.mxu0 0.0
    %4513 = vmatpush1.msra.mxu0 0.0
    %4514 = vmatprep.subr.mxu0 0.0
    %4515 = vmatpush1.msra.mxu0 0.0
    %4516 = vmatprep.subr.mxu0 0.0
    %4517 = vmatpush1.msra.mxu0 0.0
    %4518 = vmatprep.subr.mxu0 0.0
    %4519 = vmatpush1.msra.mxu0 0.0
    %4520 = vmatprep.mubr.f32.mxu0 0.0
    %v4521 = vand.u32 %v4438, 4294901760
    %v4522 = vsub.f32 %v4438, %v4521
    %v4523 = vand.u32 %v4522, 4294901760
    %v4524 = vsub.f32 %v4522, %v4523
    %v4525 = vand.u32 %v4524, 4294901760
    %4526 = vmatmul.mubr.f32.gmra.mrb[0].mxu0 %v4525
    %v4527 = vpop.f32.mrb[0].mxu0
    %v4528 = vadd.f32 0.0, %v4527
    %v4529 = vpop.f32.mrb[0].mxu0
    %4530 = vdwg.mxu0
    %4531 = vmatprep.subr.mxu0 0.0
    %v4532 = vand.u32 %v52, 4294901760
    %v4533 = vsub.f32 %v52, %v4532
    %v4534 = vand.u32 %v4533, 4294901760
    %v4535 = vsub.f32 %v4533, %v4534
    %v4536 = vand.u32 %v4535, 4294901760
    %4537 = vmatpush1.msra.mxu0 %v4536
    %4538 = vmatprep.subr.mxu0 0.0
    %v4539 = vand.u32 %v53, 4294901760
    %v4540 = vsub.f32 %v53, %v4539
    %v4541 = vand.u32 %v4540, 4294901760
    %v4542 = vsub.f32 %v4540, %v4541
    %v4543 = vand.u32 %v4542, 4294901760
    %4544 = vmatpush1.msra.mxu0 %v4543
    %4545 = vmatprep.subr.mxu0 0.0
    %v4546 = vand.u32 %v54, 4294901760
    %v4547 = vsub.f32 %v54, %v4546
    %v4548 = vand.u32 %v4547, 4294901760
    %v4549 = vsub.f32 %v4547, %v4548
    %v4550 = vand.u32 %v4549, 4294901760
    %4551 = vmatpush1.msra.mxu0 %v4550
    %4552 = vmatprep.subr.mxu0 0.0
    %v4553 = vand.u32 %v55, 4294901760
    %v4554 = vsub.f32 %v55, %v4553
    %v4555 = vand.u32 %v4554, 4294901760
    %v4556 = vsub.f32 %v4554, %v4555
    %v4557 = vand.u32 %v4556, 4294901760
    %4558 = vmatpush1.msra.mxu0 %v4557
    %4559 = vmatprep.subr.mxu0 0.0
    %v4560 = vand.u32 %v56, 4294901760
    %v4561 = vsub.f32 %v56, %v4560
    %v4562 = vand.u32 %v4561, 4294901760
    %v4563 = vsub.f32 %v4561, %v4562
    %v4564 = vand.u32 %v4563, 4294901760
    %4565 = vmatpush1.msra.mxu0 %v4564
    %4566 = vmatprep.subr.mxu0 0.0
    %v4567 = vand.u32 %v57, 4294901760
    %v4568 = vsub.f32 %v57, %v4567
    %v4569 = vand.u32 %v4568, 4294901760
    %v4570 = vsub.f32 %v4568, %v4569
    %v4571 = vand.u32 %v4570, 4294901760
    %4572 = vmatpush1.msra.mxu0 %v4571
    %4573 = vmatprep.subr.mxu0 0.0
    %v4574 = vand.u32 %v58, 4294901760
    %v4575 = vsub.f32 %v58, %v4574
    %v4576 = vand.u32 %v4575, 4294901760
    %v4577 = vsub.f32 %v4575, %v4576
    %v4578 = vand.u32 %v4577, 4294901760
    %4579 = vmatpush1.msra.mxu0 %v4578
    %4580 = vmatprep.subr.mxu0 0.0
    %v4581 = vand.u32 %v59, 4294901760
    %v4582 = vsub.f32 %v59, %v4581
    %v4583 = vand.u32 %v4582, 4294901760
    %v4584 = vsub.f32 %v4582, %v4583
    %v4585 = vand.u32 %v4584, 4294901760
    %4586 = vmatpush1.msra.mxu0 %v4585
    %4587 = vmatprep.subr.mxu0 0.0
    %v4588 = vand.u32 %v60, 4294901760
    %v4589 = vsub.f32 %v60, %v4588
    %v4590 = vand.u32 %v4589, 4294901760
    %v4591 = vsub.f32 %v4589, %v4590
    %v4592 = vand.u32 %v4591, 4294901760
    %4593 = vmatpush1.msra.mxu0 %v4592
    %4594 = vmatprep.subr.mxu0 0.0
    %v4595 = vand.u32 %v61, 4294901760
    %v4596 = vsub.f32 %v61, %v4595
    %v4597 = vand.u32 %v4596, 4294901760
    %v4598 = vsub.f32 %v4596, %v4597
    %v4599 = vand.u32 %v4598, 4294901760
    %4600 = vmatpush1.msra.mxu0 %v4599
    %4601 = vmatprep.subr.mxu0 0.0
    %v4602 = vand.u32 %v62, 4294901760
    %v4603 = vsub.f32 %v62, %v4602
    %v4604 = vand.u32 %v4603, 4294901760
    %v4605 = vsub.f32 %v4603, %v4604
    %v4606 = vand.u32 %v4605, 4294901760
    %4607 = vmatpush1.msra.mxu0 %v4606
    %4608 = vmatprep.subr.mxu0 0.0
    %v4609 = vand.u32 %v63, 4294901760
    %v4610 = vsub.f32 %v63, %v4609
    %v4611 = vand.u32 %v4610, 4294901760
    %v4612 = vsub.f32 %v4610, %v4611
    %v4613 = vand.u32 %v4612, 4294901760
    %4614 = vmatpush1.msra.mxu0 %v4613
    %4615 = vmatprep.subr.mxu0 0.0
    %v4616 = vand.u32 %v64, 4294901760
    %v4617 = vsub.f32 %v64, %v4616
    %v4618 = vand.u32 %v4617, 4294901760
    %v4619 = vsub.f32 %v4617, %v4618
    %v4620 = vand.u32 %v4619, 4294901760
    %4621 = vmatpush1.msra.mxu0 %v4620
    %4622 = vmatprep.subr.mxu0 0.0
    %v4623 = vand.u32 %v65, 4294901760
    %v4624 = vsub.f32 %v65, %v4623
    %v4625 = vand.u32 %v4624, 4294901760
    %v4626 = vsub.f32 %v4624, %v4625
    %v4627 = vand.u32 %v4626, 4294901760
    %4628 = vmatpush1.msra.mxu0 %v4627
    %4629 = vmatprep.subr.mxu0 0.0
    %v4630 = vand.u32 %v66, 4294901760
    %v4631 = vsub.f32 %v66, %v4630
    %v4632 = vand.u32 %v4631, 4294901760
    %v4633 = vsub.f32 %v4631, %v4632
    %v4634 = vand.u32 %v4633, 4294901760
    %4635 = vmatpush1.msra.mxu0 %v4634
    %4636 = vmatprep.subr.mxu0 0.0
    %v4637 = vand.u32 %v67, 4294901760
    %v4638 = vsub.f32 %v67, %v4637
    %v4639 = vand.u32 %v4638, 4294901760
    %v4640 = vsub.f32 %v4638, %v4639
    %v4641 = vand.u32 %v4640, 4294901760
    %4642 = vmatpush1.msra.mxu0 %v4641
    %4643 = vmatprep.subr.mxu0 0.0
    %4644 = vmatpush1.msra.mxu0 0.0
    %4645 = vmatprep.subr.mxu0 0.0
    %4646 = vmatpush1.msra.mxu0 0.0
    %4647 = vmatprep.subr.mxu0 0.0
    %4648 = vmatpush1.msra.mxu0 0.0
    %4649 = vmatprep.subr.mxu0 0.0
    %4650 = vmatpush1.msra.mxu0 0.0
    %4651 = vmatprep.subr.mxu0 0.0
    %4652 = vmatpush1.msra.mxu0 0.0
    %4653 = vmatprep.subr.mxu0 0.0
    %4654 = vmatpush1.msra.mxu0 0.0
    %4655 = vmatprep.subr.mxu0 0.0
    %4656 = vmatpush1.msra.mxu0 0.0
    %4657 = vmatprep.subr.mxu0 0.0
    %4658 = vmatpush1.msra.mxu0 0.0
    %4659 = vmatprep.subr.mxu0 0.0
    %4660 = vmatpush1.msra.mxu0 0.0
    %4661 = vmatprep.subr.mxu0 0.0
    %4662 = vmatpush1.msra.mxu0 0.0
    %4663 = vmatprep.subr.mxu0 0.0
    %4664 = vmatpush1.msra.mxu0 0.0
    %4665 = vmatprep.subr.mxu0 0.0
    %4666 = vmatpush1.msra.mxu0 0.0
    %4667 = vmatprep.subr.mxu0 0.0
    %4668 = vmatpush1.msra.mxu0 0.0
    %4669 = vmatprep.subr.mxu0 0.0
    %4670 = vmatpush1.msra.mxu0 0.0
    %4671 = vmatprep.subr.mxu0 0.0
    %4672 = vmatpush1.msra.mxu0 0.0
    %4673 = vmatprep.subr.mxu0 0.0
    %4674 = vmatpush1.msra.mxu0 0.0
    %4675 = vmatprep.mubr.f32.mxu0 0.0
    %v4676 = vand.u32 %v4438, 4294901760
    %4677 = vmatmul.mubr.f32.gmra.mrb[0].mxu0 %v4676
    %v4678 = vpop.f32.mrb[0].mxu0
    %v4679 = vadd.f32 %v4528, %v4678
    %v4680 = vpop.f32.mrb[0].mxu0
    %4681 = vdwg.mxu0
    %4682 = vmatprep.subr.mxu0 0.0
    %v4683 = vand.u32 %v52, 4294901760
    %v4684 = vsub.f32 %v52, %v4683
    %4685 = vmatpush1.msra.mxu0 %v4684
    %4686 = vmatprep.subr.mxu0 0.0
    %v4687 = vand.u32 %v53, 4294901760
    %v4688 = vsub.f32 %v53, %v4687
    %4689 = vmatpush1.msra.mxu0 %v4688
    %4690 = vmatprep.subr.mxu0 0.0
    %v4691 = vand.u32 %v54, 4294901760
    %v4692 = vsub.f32 %v54, %v4691
    %4693 = vmatpush1.msra.mxu0 %v4692
    %4694 = vmatprep.subr.mxu0 0.0
    %v4695 = vand.u32 %v55, 4294901760
    %v4696 = vsub.f32 %v55, %v4695
    %4697 = vmatpush1.msra.mxu0 %v4696
    %4698 = vmatprep.subr.mxu0 0.0
    %v4699 = vand.u32 %v56, 4294901760
    %v4700 = vsub.f32 %v56, %v4699
    %4701 = vmatpush1.msra.mxu0 %v4700
    %4702 = vmatprep.subr.mxu0 0.0
    %v4703 = vand.u32 %v57, 4294901760
    %v4704 = vsub.f32 %v57, %v4703
    %4705 = vmatpush1.msra.mxu0 %v4704
    %4706 = vmatprep.subr.mxu0 0.0
    %v4707 = vand.u32 %v58, 4294901760
    %v4708 = vsub.f32 %v58, %v4707
    %4709 = vmatpush1.msra.mxu0 %v4708
    %4710 = vmatprep.subr.mxu0 0.0
    %v4711 = vand.u32 %v59, 4294901760
    %v4712 = vsub.f32 %v59, %v4711
    %4713 = vmatpush1.msra.mxu0 %v4712
    %4714 = vmatprep.subr.mxu0 0.0
    %v4715 = vand.u32 %v60, 4294901760
    %v4716 = vsub.f32 %v60, %v4715
    %4717 = vmatpush1.msra.mxu0 %v4716
    %4718 = vmatprep.subr.mxu0 0.0
    %v4719 = vand.u32 %v61, 4294901760
    %v4720 = vsub.f32 %v61, %v4719
    %4721 = vmatpush1.msra.mxu0 %v4720
    %4722 = vmatprep.subr.mxu0 0.0
    %v4723 = vand.u32 %v62, 4294901760
    %v4724 = vsub.f32 %v62, %v4723
    %4725 = vmatpush1.msra.mxu0 %v4724
    %4726 = vmatprep.subr.mxu0 0.0
    %v4727 = vand.u32 %v63, 4294901760
    %v4728 = vsub.f32 %v63, %v4727
    %4729 = vmatpush1.msra.mxu0 %v4728
    %4730 = vmatprep.subr.mxu0 0.0
    %v4731 = vand.u32 %v64, 4294901760
    %v4732 = vsub.f32 %v64, %v4731
    %4733 = vmatpush1.msra.mxu0 %v4732
    %4734 = vmatprep.subr.mxu0 0.0
    %v4735 = vand.u32 %v65, 4294901760
    %v4736 = vsub.f32 %v65, %v4735
    %4737 = vmatpush1.msra.mxu0 %v4736
    %4738 = vmatprep.subr.mxu0 0.0
    %v4739 = vand.u32 %v66, 4294901760
    %v4740 = vsub.f32 %v66, %v4739
    %4741 = vmatpush1.msra.mxu0 %v4740
    %4742 = vmatprep.subr.mxu0 0.0
    %v4743 = vand.u32 %v67, 4294901760
    %v4744 = vsub.f32 %v67, %v4743
    %4745 = vmatpush1.msra.mxu0 %v4744
    %4746 = vmatprep.subr.mxu0 0.0
    %4747 = vmatpush1.msra.mxu0 0.0
    %4748 = vmatprep.subr.mxu0 0.0
    %4749 = vmatpush1.msra.mxu0 0.0
    %4750 = vmatprep.subr.mxu0 0.0
    %4751 = vmatpush1.msra.mxu0 0.0
    %4752 = vmatprep.subr.mxu0 0.0
    %4753 = vmatpush1.msra.mxu0 0.0
    %4754 = vmatprep.subr.mxu0 0.0
    %4755 = vmatpush1.msra.mxu0 0.0
    %4756 = vmatprep.subr.mxu0 0.0
    %4757 = vmatpush1.msra.mxu0 0.0
    %4758 = vmatprep.subr.mxu0 0.0
    %4759 = vmatpush1.msra.mxu0 0.0
    %4760 = vmatprep.subr.mxu0 0.0
    %4761 = vmatpush1.msra.mxu0 0.0
    %4762 = vmatprep.subr.mxu0 0.0
    %4763 = vmatpush1.msra.mxu0 0.0
    %4764 = vmatprep.subr.mxu0 0.0
    %4765 = vmatpush1.msra.mxu0 0.0
    %4766 = vmatprep.subr.mxu0 0.0
    %4767 = vmatpush1.msra.mxu0 0.0
    %4768 = vmatprep.subr.mxu0 0.0
    %4769 = vmatpush1.msra.mxu0 0.0
    %4770 = vmatprep.subr.mxu0 0.0
    %4771 = vmatpush1.msra.mxu0 0.0
    %4772 = vmatprep.subr.mxu0 0.0
    %4773 = vmatpush1.msra.mxu0 0.0
    %4774 = vmatprep.subr.mxu0 0.0
    %4775 = vmatpush1.msra.mxu0 0.0
    %4776 = vmatprep.subr.mxu0 0.0
    %4777 = vmatpush1.msra.mxu0 0.0
    %4778 = vmatprep.mubr.f32.mxu0 0.0
    %v4779 = vand.u32 %v4438, 4294901760
    %v4780 = vsub.f32 %v4438, %v4779
    %4781 = vmatmul.mubr.f32.gmra.mrb[0].mxu0 %v4780
    %v4782 = vpop.f32.mrb[0].mxu0
    %v4783 = vadd.f32 %v4679, %v4782
    %v4784 = vpop.f32.mrb[0].mxu0
    %4785 = vdwg.mxu0
    %4786 = vmatprep.subr.mxu0 0.0
    %v4787 = vand.u32 %v52, 4294901760
    %4788 = vmatpush1.msra.mxu0 %v4787
    %4789 = vmatprep.subr.mxu0 0.0
    %v4790 = vand.u32 %v53, 4294901760
    %4791 = vmatpush1.msra.mxu0 %v4790
    %4792 = vmatprep.subr.mxu0 0.0
    %v4793 = vand.u32 %v54, 4294901760
    %4794 = vmatpush1.msra.mxu0 %v4793
    %4795 = vmatprep.subr.mxu0 0.0
    %v4796 = vand.u32 %v55, 4294901760
    %4797 = vmatpush1.msra.mxu0 %v4796
    %4798 = vmatprep.subr.mxu0 0.0
    %v4799 = vand.u32 %v56, 4294901760
    %4800 = vmatpush1.msra.mxu0 %v4799
    %4801 = vmatprep.subr.mxu0 0.0
    %v4802 = vand.u32 %v57, 4294901760
    %4803 = vmatpush1.msra.mxu0 %v4802
    %4804 = vmatprep.subr.mxu0 0.0
    %v4805 = vand.u32 %v58, 4294901760
    %4806 = vmatpush1.msra.mxu0 %v4805
    %4807 = vmatprep.subr.mxu0 0.0
    %v4808 = vand.u32 %v59, 4294901760
    %4809 = vmatpush1.msra.mxu0 %v4808
    %4810 = vmatprep.subr.mxu0 0.0
    %v4811 = vand.u32 %v60, 4294901760
    %4812 = vmatpush1.msra.mxu0 %v4811
    %4813 = vmatprep.subr.mxu0 0.0
    %v4814 = vand.u32 %v61, 4294901760
    %4815 = vmatpush1.msra.mxu0 %v4814
    %4816 = vmatprep.subr.mxu0 0.0
    %v4817 = vand.u32 %v62, 4294901760
    %4818 = vmatpush1.msra.mxu0 %v4817
    %4819 = vmatprep.subr.mxu0 0.0
    %v4820 = vand.u32 %v63, 4294901760
    %4821 = vmatpush1.msra.mxu0 %v4820
    %4822 = vmatprep.subr.mxu0 0.0
    %v4823 = vand.u32 %v64, 4294901760
    %4824 = vmatpush1.msra.mxu0 %v4823
    %4825 = vmatprep.subr.mxu0 0.0
    %v4826 = vand.u32 %v65, 4294901760
    %4827 = vmatpush1.msra.mxu0 %v4826
    %4828 = vmatprep.subr.mxu0 0.0
    %v4829 = vand.u32 %v66, 4294901760
    %4830 = vmatpush1.msra.mxu0 %v4829
    %4831 = vmatprep.subr.mxu0 0.0
    %v4832 = vand.u32 %v67, 4294901760
    %4833 = vmatpush1.msra.mxu0 %v4832
    %4834 = vmatprep.subr.mxu0 0.0
    %4835 = vmatpush1.msra.mxu0 0.0
    %4836 = vmatprep.subr.mxu0 0.0
    %4837 = vmatpush1.msra.mxu0 0.0
    %4838 = vmatprep.subr.mxu0 0.0
    %4839 = vmatpush1.msra.mxu0 0.0
    %4840 = vmatprep.subr.mxu0 0.0
    %4841 = vmatpush1.msra.mxu0 0.0
    %4842 = vmatprep.subr.mxu0 0.0
    %4843 = vmatpush1.msra.mxu0 0.0
    %4844 = vmatprep.subr.mxu0 0.0
    %4845 = vmatpush1.msra.mxu0 0.0
    %4846 = vmatprep.subr.mxu0 0.0
    %4847 = vmatpush1.msra.mxu0 0.0
    %4848 = vmatprep.subr.mxu0 0.0
    %4849 = vmatpush1.msra.mxu0 0.0
    %4850 = vmatprep.subr.mxu0 0.0
    %4851 = vmatpush1.msra.mxu0 0.0
    %4852 = vmatprep.subr.mxu0 0.0
    %4853 = vmatpush1.msra.mxu0 0.0
    %4854 = vmatprep.subr.mxu0 0.0
    %4855 = vmatpush1.msra.mxu0 0.0
    %4856 = vmatprep.subr.mxu0 0.0
    %4857 = vmatpush1.msra.mxu0 0.0
    %4858 = vmatprep.subr.mxu0 0.0
    %4859 = vmatpush1.msra.mxu0 0.0
    %4860 = vmatprep.subr.mxu0 0.0
    %4861 = vmatpush1.msra.mxu0 0.0
    %4862 = vmatprep.subr.mxu0 0.0
    %4863 = vmatpush1.msra.mxu0 0.0
    %4864 = vmatprep.subr.mxu0 0.0
    %4865 = vmatpush1.msra.mxu0 0.0
    %4866 = vmatprep.mubr.f32.mxu0 0.0
    %v4867 = vand.u32 %v4438, 4294901760
    %v4868 = vsub.f32 %v4438, %v4867
    %v4869 = vand.u32 %v4868, 4294901760
    %4870 = vmatmul.mubr.f32.gmra.mrb[0].mxu0 %v4869
    %v4871 = vpop.f32.mrb[0].mxu0
    %v4872 = vadd.f32 %v4783, %v4871
    %v4873 = vpop.f32.mrb[0].mxu0
    %4874 = vdwg.mxu0
    %4875 = vmatprep.subr.mxu0 0.0
    %v4876 = vand.u32 %v52, 4294901760
    %v4877 = vsub.f32 %v52, %v4876
    %v4878 = vand.u32 %v4877, 4294901760
    %4879 = vmatpush1.msra.mxu0 %v4878
    %4880 = vmatprep.subr.mxu0 0.0
    %v4881 = vand.u32 %v53, 4294901760
    %v4882 = vsub.f32 %v53, %v4881
    %v4883 = vand.u32 %v4882, 4294901760
    %4884 = vmatpush1.msra.mxu0 %v4883
    %4885 = vmatprep.subr.mxu0 0.0
    %v4886 = vand.u32 %v54, 4294901760
    %v4887 = vsub.f32 %v54, %v4886
    %v4888 = vand.u32 %v4887, 4294901760
    %4889 = vmatpush1.msra.mxu0 %v4888
    %4890 = vmatprep.subr.mxu0 0.0
    %v4891 = vand.u32 %v55, 4294901760
    %v4892 = vsub.f32 %v55, %v4891
    %v4893 = vand.u32 %v4892, 4294901760
    %4894 = vmatpush1.msra.mxu0 %v4893
    %4895 = vmatprep.subr.mxu0 0.0
    %v4896 = vand.u32 %v56, 4294901760
    %v4897 = vsub.f32 %v56, %v4896
    %v4898 = vand.u32 %v4897, 4294901760
    %4899 = vmatpush1.msra.mxu0 %v4898
    %4900 = vmatprep.subr.mxu0 0.0
    %v4901 = vand.u32 %v57, 4294901760
    %v4902 = vsub.f32 %v57, %v4901
    %v4903 = vand.u32 %v4902, 4294901760
    %4904 = vmatpush1.msra.mxu0 %v4903
    %4905 = vmatprep.subr.mxu0 0.0
    %v4906 = vand.u32 %v58, 4294901760
    %v4907 = vsub.f32 %v58, %v4906
    %v4908 = vand.u32 %v4907, 4294901760
    %4909 = vmatpush1.msra.mxu0 %v4908
    %4910 = vmatprep.subr.mxu0 0.0
    %v4911 = vand.u32 %v59, 4294901760
    %v4912 = vsub.f32 %v59, %v4911
    %v4913 = vand.u32 %v4912, 4294901760
    %4914 = vmatpush1.msra.mxu0 %v4913
    %4915 = vmatprep.subr.mxu0 0.0
    %v4916 = vand.u32 %v60, 4294901760
    %v4917 = vsub.f32 %v60, %v4916
    %v4918 = vand.u32 %v4917, 4294901760
    %4919 = vmatpush1.msra.mxu0 %v4918
    %4920 = vmatprep.subr.mxu0 0.0
    %v4921 = vand.u32 %v61, 4294901760
    %v4922 = vsub.f32 %v61, %v4921
    %v4923 = vand.u32 %v4922, 4294901760
    %4924 = vmatpush1.msra.mxu0 %v4923
    %4925 = vmatprep.subr.mxu0 0.0
    %v4926 = vand.u32 %v62, 4294901760
    %v4927 = vsub.f32 %v62, %v4926
    %v4928 = vand.u32 %v4927, 4294901760
    %4929 = vmatpush1.msra.mxu0 %v4928
    %4930 = vmatprep.subr.mxu0 0.0
    %v4931 = vand.u32 %v63, 4294901760
    %v4932 = vsub.f32 %v63, %v4931
    %v4933 = vand.u32 %v4932, 4294901760
    %4934 = vmatpush1.msra.mxu0 %v4933
    %4935 = vmatprep.subr.mxu0 0.0
    %v4936 = vand.u32 %v64, 4294901760
    %v4937 = vsub.f32 %v64, %v4936
    %v4938 = vand.u32 %v4937, 4294901760
    %4939 = vmatpush1.msra.mxu0 %v4938
    %4940 = vmatprep.subr.mxu0 0.0
    %v4941 = vand.u32 %v65, 4294901760
    %v4942 = vsub.f32 %v65, %v4941
    %v4943 = vand.u32 %v4942, 4294901760
    %4944 = vmatpush1.msra.mxu0 %v4943
    %4945 = vmatprep.subr.mxu0 0.0
    %v4946 = vand.u32 %v66, 4294901760
    %v4947 = vsub.f32 %v66, %v4946
    %v4948 = vand.u32 %v4947, 4294901760
    %4949 = vmatpush1.msra.mxu0 %v4948
    %4950 = vmatprep.subr.mxu0 0.0
    %v4951 = vand.u32 %v67, 4294901760
    %v4952 = vsub.f32 %v67, %v4951
    %v4953 = vand.u32 %v4952, 4294901760
    %4954 = vmatpush1.msra.mxu0 %v4953
    %4955 = vmatprep.subr.mxu0 0.0
    %4956 = vmatpush1.msra.mxu0 0.0
    %4957 = vmatprep.subr.mxu0 0.0
    %4958 = vmatpush1.msra.mxu0 0.0
    %4959 = vmatprep.subr.mxu0 0.0
    %4960 = vmatpush1.msra.mxu0 0.0
    %4961 = vmatprep.subr.mxu0 0.0
    %4962 = vmatpush1.msra.mxu0 0.0
    %4963 = vmatprep.subr.mxu0 0.0
    %4964 = vmatpush1.msra.mxu0 0.0
    %4965 = vmatprep.subr.mxu0 0.0
    %4966 = vmatpush1.msra.mxu0 0.0
    %4967 = vmatprep.subr.mxu0 0.0
    %4968 = vmatpush1.msra.mxu0 0.0
    %4969 = vmatprep.subr.mxu0 0.0
    %4970 = vmatpush1.msra.mxu0 0.0
    %4971 = vmatprep.subr.mxu0 0.0
    %4972 = vmatpush1.msra.mxu0 0.0
    %4973 = vmatprep.subr.mxu0 0.0
    %4974 = vmatpush1.msra.mxu0 0.0
    %4975 = vmatprep.subr.mxu0 0.0
    %4976 = vmatpush1.msra.mxu0 0.0
    %4977 = vmatprep.subr.mxu0 0.0
    %4978 = vmatpush1.msra.mxu0 0.0
    %4979 = vmatprep.subr.mxu0 0.0
    %4980 = vmatpush1.msra.mxu0 0.0
    %4981 = vmatprep.subr.mxu0 0.0
    %4982 = vmatpush1.msra.mxu0 0.0
    %4983 = vmatprep.subr.mxu0 0.0
    %4984 = vmatpush1.msra.mxu0 0.0
    %4985 = vmatprep.subr.mxu0 0.0
    %4986 = vmatpush1.msra.mxu0 0.0
    %4987 = vmatprep.mubr.f32.mxu0 0.0
    %v4988 = vand.u32 %v4438, 4294901760
    %4989 = vmatmul.mubr.f32.gmra.mrb[0].mxu0 %v4988
    %v4990 = vpop.f32.mrb[0].mxu0
    %v4991 = vadd.f32 %v4872, %v4990
    %v4992 = vpop.f32.mrb[0].mxu0
    %4993 = vdwg.mxu0
    %4994 = vmatprep.subr.mxu0 0.0
    %v4995 = vand.u32 %v52, 4294901760
    %4996 = vmatpush1.msra.mxu0 %v4995
    %4997 = vmatprep.subr.mxu0 0.0
    %v4998 = vand.u32 %v53, 4294901760
    %4999 = vmatpush1.msra.mxu0 %v4998
    %5000 = vmatprep.subr.mxu0 0.0
    %v5001 = vand.u32 %v54, 4294901760
    %5002 = vmatpush1.msra.mxu0 %v5001
    %5003 = vmatprep.subr.mxu0 0.0
    %v5004 = vand.u32 %v55, 4294901760
    %5005 = vmatpush1.msra.mxu0 %v5004
    %5006 = vmatprep.subr.mxu0 0.0
    %v5007 = vand.u32 %v56, 4294901760
    %5008 = vmatpush1.msra.mxu0 %v5007
    %5009 = vmatprep.subr.mxu0 0.0
    %v5010 = vand.u32 %v57, 4294901760
    %5011 = vmatpush1.msra.mxu0 %v5010
    %5012 = vmatprep.subr.mxu0 0.0
    %v5013 = vand.u32 %v58, 4294901760
    %5014 = vmatpush1.msra.mxu0 %v5013
    %5015 = vmatprep.subr.mxu0 0.0
    %v5016 = vand.u32 %v59, 4294901760
    %5017 = vmatpush1.msra.mxu0 %v5016
    %5018 = vmatprep.subr.mxu0 0.0
    %v5019 = vand.u32 %v60, 4294901760
    %5020 = vmatpush1.msra.mxu0 %v5019
    %5021 = vmatprep.subr.mxu0 0.0
    %v5022 = vand.u32 %v61, 4294901760
    %5023 = vmatpush1.msra.mxu0 %v5022
    %5024 = vmatprep.subr.mxu0 0.0
    %v5025 = vand.u32 %v62, 4294901760
    %5026 = vmatpush1.msra.mxu0 %v5025
    %5027 = vmatprep.subr.mxu0 0.0
    %v5028 = vand.u32 %v63, 4294901760
    %5029 = vmatpush1.msra.mxu0 %v5028
    %5030 = vmatprep.subr.mxu0 0.0
    %v5031 = vand.u32 %v64, 4294901760
    %5032 = vmatpush1.msra.mxu0 %v5031
    %5033 = vmatprep.subr.mxu0 0.0
    %v5034 = vand.u32 %v65, 4294901760
    %5035 = vmatpush1.msra.mxu0 %v5034
    %5036 = vmatprep.subr.mxu0 0.0
    %v5037 = vand.u32 %v66, 4294901760
    %5038 = vmatpush1.msra.mxu0 %v5037
    %5039 = vmatprep.subr.mxu0 0.0
    %v5040 = vand.u32 %v67, 4294901760
    %5041 = vmatpush1.msra.mxu0 %v5040
    %5042 = vmatprep.subr.mxu0 0.0
    %5043 = vmatpush1.msra.mxu0 0.0
    %5044 = vmatprep.subr.mxu0 0.0
    %5045 = vmatpush1.msra.mxu0 0.0
    %5046 = vmatprep.subr.mxu0 0.0
    %5047 = vmatpush1.msra.mxu0 0.0
    %5048 = vmatprep.subr.mxu0 0.0
    %5049 = vmatpush1.msra.mxu0 0.0
    %5050 = vmatprep.subr.mxu0 0.0
    %5051 = vmatpush1.msra.mxu0 0.0
    %5052 = vmatprep.subr.mxu0 0.0
    %5053 = vmatpush1.msra.mxu0 0.0
    %5054 = vmatprep.subr.mxu0 0.0
    %5055 = vmatpush1.msra.mxu0 0.0
    %5056 = vmatprep.subr.mxu0 0.0
    %5057 = vmatpush1.msra.mxu0 0.0
    %5058 = vmatprep.subr.mxu0 0.0
    %5059 = vmatpush1.msra.mxu0 0.0
    %5060 = vmatprep.subr.mxu0 0.0
    %5061 = vmatpush1.msra.mxu0 0.0
    %5062 = vmatprep.subr.mxu0 0.0
    %5063 = vmatpush1.msra.mxu0 0.0
    %5064 = vmatprep.subr.mxu0 0.0
    %5065 = vmatpush1.msra.mxu0 0.0
    %5066 = vmatprep.subr.mxu0 0.0
    %5067 = vmatpush1.msra.mxu0 0.0
    %5068 = vmatprep.subr.mxu0 0.0
    %5069 = vmatpush1.msra.mxu0 0.0
    %5070 = vmatprep.subr.mxu0 0.0
    %5071 = vmatpush1.msra.mxu0 0.0
    %5072 = vmatprep.subr.mxu0 0.0
    %5073 = vmatpush1.msra.mxu0 0.0
    %5074 = vmatprep.mubr.f32.mxu0 0.0
    %v5075 = vand.u32 %v4438, 4294901760
    %5076 = vmatmul.mubr.f32.gmra.mrb[0].mxu0 %v5075
    %v5077 = vpop.f32.mrb[0].mxu0
    %v5078 = vadd.f32 %v4991, %v5077
    %v5079 = vpop.f32.mrb[0].mxu0
    %5080 = vdwg.mxu0
    %v5081 = vmul.f32 %v86, %v5078
    %v5082 = vmul.f32 %v5081, 0.125
    %v5083 = vadd.f32 %v4439, %v5082
    %5084 = vmatprep.subr.mxu0 0.0
    %v5085 = vand.u32 %v52, 4294901760
    %5086 = vmatpush1.msra.mxu0 %v5085
    %5087 = vmatprep.subr.mxu0 0.0
    %v5088 = vand.u32 %v53, 4294901760
    %5089 = vmatpush1.msra.mxu0 %v5088
    %5090 = vmatprep.subr.mxu0 0.0
    %v5091 = vand.u32 %v54, 4294901760
    %5092 = vmatpush1.msra.mxu0 %v5091
    %5093 = vmatprep.subr.mxu0 0.0
    %v5094 = vand.u32 %v55, 4294901760
    %5095 = vmatpush1.msra.mxu0 %v5094
    %5096 = vmatprep.subr.mxu0 0.0
    %v5097 = vand.u32 %v56, 4294901760
    %5098 = vmatpush1.msra.mxu0 %v5097
    %5099 = vmatprep.subr.mxu0 0.0
    %v5100 = vand.u32 %v57, 4294901760
    %5101 = vmatpush1.msra.mxu0 %v5100
    %5102 = vmatprep.subr.mxu0 0.0
    %v5103 = vand.u32 %v58, 4294901760
    %5104 = vmatpush1.msra.mxu0 %v5103
    %5105 = vmatprep.subr.mxu0 0.0
    %v5106 = vand.u32 %v59, 4294901760
    %5107 = vmatpush1.msra.mxu0 %v5106
    %5108 = vmatprep.subr.mxu0 0.0
    %v5109 = vand.u32 %v60, 4294901760
    %5110 = vmatpush1.msra.mxu0 %v5109
    %5111 = vmatprep.subr.mxu0 0.0
    %v5112 = vand.u32 %v61, 4294901760
    %5113 = vmatpush1.msra.mxu0 %v5112
    %5114 = vmatprep.subr.mxu0 0.0
    %v5115 = vand.u32 %v62, 4294901760
    %5116 = vmatpush1.msra.mxu0 %v5115
    %5117 = vmatprep.subr.mxu0 0.0
    %v5118 = vand.u32 %v63, 4294901760
    %5119 = vmatpush1.msra.mxu0 %v5118
    %5120 = vmatprep.subr.mxu0 0.0
    %v5121 = vand.u32 %v64, 4294901760
    %5122 = vmatpush1.msra.mxu0 %v5121
    %5123 = vmatprep.subr.mxu0 0.0
    %v5124 = vand.u32 %v65, 4294901760
    %5125 = vmatpush1.msra.mxu0 %v5124
    %5126 = vmatprep.subr.mxu0 0.0
    %v5127 = vand.u32 %v66, 4294901760
    %5128 = vmatpush1.msra.mxu0 %v5127
    %5129 = vmatprep.subr.mxu0 0.0
    %v5130 = vand.u32 %v67, 4294901760
    %5131 = vmatpush1.msra.mxu0 %v5130
    %5132 = vmatprep.subr.mxu0 0.0
    %5133 = vmatpush1.msra.mxu0 0.0
    %5134 = vmatprep.subr.mxu0 0.0
    %5135 = vmatpush1.msra.mxu0 0.0
    %5136 = vmatprep.subr.mxu0 0.0
    %5137 = vmatpush1.msra.mxu0 0.0
    %5138 = vmatprep.subr.mxu0 0.0
    %5139 = vmatpush1.msra.mxu0 0.0
    %5140 = vmatprep.subr.mxu0 0.0
    %5141 = vmatpush1.msra.mxu0 0.0
    %5142 = vmatprep.subr.mxu0 0.0
    %5143 = vmatpush1.msra.mxu0 0.0
    %5144 = vmatprep.subr.mxu0 0.0
    %5145 = vmatpush1.msra.mxu0 0.0
    %5146 = vmatprep.subr.mxu0 0.0
    %5147 = vmatpush1.msra.mxu0 0.0
    %5148 = vmatprep.subr.mxu0 0.0
    %5149 = vmatpush1.msra.mxu0 0.0
    %5150 = vmatprep.subr.mxu0 0.0
    %5151 = vmatpush1.msra.mxu0 0.0
    %5152 = vmatprep.subr.mxu0 0.0
    %5153 = vmatpush1.msra.mxu0 0.0
    %5154 = vmatprep.subr.mxu0 0.0
    %5155 = vmatpush1.msra.mxu0 0.0
    %5156 = vmatprep.subr.mxu0 0.0
    %5157 = vmatpush1.msra.mxu0 0.0
    %5158 = vmatprep.subr.mxu0 0.0
    %5159 = vmatpush1.msra.mxu0 0.0
    %5160 = vmatprep.subr.mxu0 0.0
    %5161 = vmatpush1.msra.mxu0 0.0
    %5162 = vmatprep.subr.mxu0 0.0
    %5163 = vmatpush1.msra.mxu0 0.0
    %5164 = vmatprep.mubr.f32.mxu0 0.0
    %v5165 = vand.u32 %v5082, 4294901760
    %v5166 = vsub.f32 %v5082, %v5165
    %v5167 = vand.u32 %v5166, 4294901760
    %v5168 = vsub.f32 %v5166, %v5167
    %v5169 = vand.u32 %v5168, 4294901760
    %5170 = vmatmul.mubr.f32.gmra.mrb[0].mxu0 %v5169
    %v5171 = vpop.f32.mrb[0].mxu0
    %v5172 = vadd.f32 0.0, %v5171
    %v5173 = vpop.f32.mrb[0].mxu0
    %5174 = vdwg.mxu0
    %5175 = vmatprep.subr.mxu0 0.0
    %v5176 = vand.u32 %v52, 4294901760
    %v5177 = vsub.f32 %v52, %v5176
    %v5178 = vand.u32 %v5177, 4294901760
    %v5179 = vsub.f32 %v5177, %v5178
    %v5180 = vand.u32 %v5179, 4294901760
    %5181 = vmatpush1.msra.mxu0 %v5180
    %5182 = vmatprep.subr.mxu0 0.0
    %v5183 = vand.u32 %v53, 4294901760
    %v5184 = vsub.f32 %v53, %v5183
    %v5185 = vand.u32 %v5184, 4294901760
    %v5186 = vsub.f32 %v5184, %v5185
    %v5187 = vand.u32 %v5186, 4294901760
    %5188 = vmatpush1.msra.mxu0 %v5187
    %5189 = vmatprep.subr.mxu0 0.0
    %v5190 = vand.u32 %v54, 4294901760
    %v5191 = vsub.f32 %v54, %v5190
    %v5192 = vand.u32 %v5191, 4294901760
    %v5193 = vsub.f32 %v5191, %v5192
    %v5194 = vand.u32 %v5193, 4294901760
    %5195 = vmatpush1.msra.mxu0 %v5194
    %5196 = vmatprep.subr.mxu0 0.0
    %v5197 = vand.u32 %v55, 4294901760
    %v5198 = vsub.f32 %v55, %v5197
    %v5199 = vand.u32 %v5198, 4294901760
    %v5200 = vsub.f32 %v5198, %v5199
    %v5201 = vand.u32 %v5200, 4294901760
    %5202 = vmatpush1.msra.mxu0 %v5201
    %5203 = vmatprep.subr.mxu0 0.0
    %v5204 = vand.u32 %v56, 4294901760
    %v5205 = vsub.f32 %v56, %v5204
    %v5206 = vand.u32 %v5205, 4294901760
    %v5207 = vsub.f32 %v5205, %v5206
    %v5208 = vand.u32 %v5207, 4294901760
    %5209 = vmatpush1.msra.mxu0 %v5208
    %5210 = vmatprep.subr.mxu0 0.0
    %v5211 = vand.u32 %v57, 4294901760
    %v5212 = vsub.f32 %v57, %v5211
    %v5213 = vand.u32 %v5212, 4294901760
    %v5214 = vsub.f32 %v5212, %v5213
    %v5215 = vand.u32 %v5214, 4294901760
    %5216 = vmatpush1.msra.mxu0 %v5215
    %5217 = vmatprep.subr.mxu0 0.0
    %v5218 = vand.u32 %v58, 4294901760
    %v5219 = vsub.f32 %v58, %v5218
    %v5220 = vand.u32 %v5219, 4294901760
    %v5221 = vsub.f32 %v5219, %v5220
    %v5222 = vand.u32 %v5221, 4294901760
    %5223 = vmatpush1.msra.mxu0 %v5222
    %5224 = vmatprep.subr.mxu0 0.0
    %v5225 = vand.u32 %v59, 4294901760
    %v5226 = vsub.f32 %v59, %v5225
    %v5227 = vand.u32 %v5226, 4294901760
    %v5228 = vsub.f32 %v5226, %v5227
    %v5229 = vand.u32 %v5228, 4294901760
    %5230 = vmatpush1.msra.mxu0 %v5229
    %5231 = vmatprep.subr.mxu0 0.0
    %v5232 = vand.u32 %v60, 4294901760
    %v5233 = vsub.f32 %v60, %v5232
    %v5234 = vand.u32 %v5233, 4294901760
    %v5235 = vsub.f32 %v5233, %v5234
    %v5236 = vand.u32 %v5235, 4294901760
    %5237 = vmatpush1.msra.mxu0 %v5236
    %5238 = vmatprep.subr.mxu0 0.0
    %v5239 = vand.u32 %v61, 4294901760
    %v5240 = vsub.f32 %v61, %v5239
    %v5241 = vand.u32 %v5240, 4294901760
    %v5242 = vsub.f32 %v5240, %v5241
    %v5243 = vand.u32 %v5242, 4294901760
    %5244 = vmatpush1.msra.mxu0 %v5243
    %5245 = vmatprep.subr.mxu0 0.0
    %v5246 = vand.u32 %v62, 4294901760
    %v5247 = vsub.f32 %v62, %v5246
    %v5248 = vand.u32 %v5247, 4294901760
    %v5249 = vsub.f32 %v5247, %v5248
    %v5250 = vand.u32 %v5249, 4294901760
    %5251 = vmatpush1.msra.mxu0 %v5250
    %5252 = vmatprep.subr.mxu0 0.0
    %v5253 = vand.u32 %v63, 4294901760
    %v5254 = vsub.f32 %v63, %v5253
    %v5255 = vand.u32 %v5254, 4294901760
    %v5256 = vsub.f32 %v5254, %v5255
    %v5257 = vand.u32 %v5256, 4294901760
    %5258 = vmatpush1.msra.mxu0 %v5257
    %5259 = vmatprep.subr.mxu0 0.0
    %v5260 = vand.u32 %v64, 4294901760
    %v5261 = vsub.f32 %v64, %v5260
    %v5262 = vand.u32 %v5261, 4294901760
    %v5263 = vsub.f32 %v5261, %v5262
    %v5264 = vand.u32 %v5263, 4294901760
    %5265 = vmatpush1.msra.mxu0 %v5264
    %5266 = vmatprep.subr.mxu0 0.0
    %v5267 = vand.u32 %v65, 4294901760
    %v5268 = vsub.f32 %v65, %v5267
    %v5269 = vand.u32 %v5268, 4294901760
    %v5270 = vsub.f32 %v5268, %v5269
    %v5271 = vand.u32 %v5270, 4294901760
    %5272 = vmatpush1.msra.mxu0 %v5271
    %5273 = vmatprep.subr.mxu0 0.0
    %v5274 = vand.u32 %v66, 4294901760
    %v5275 = vsub.f32 %v66, %v5274
    %v5276 = vand.u32 %v5275, 4294901760
    %v5277 = vsub.f32 %v5275, %v5276
    %v5278 = vand.u32 %v5277, 4294901760
    %5279 = vmatpush1.msra.mxu0 %v5278
    %5280 = vmatprep.subr.mxu0 0.0
    %v5281 = vand.u32 %v67, 4294901760
    %v5282 = vsub.f32 %v67, %v5281
    %v5283 = vand.u32 %v5282, 4294901760
    %v5284 = vsub.f32 %v5282, %v5283
    %v5285 = vand.u32 %v5284, 4294901760
    %5286 = vmatpush1.msra.mxu0 %v5285
    %5287 = vmatprep.subr.mxu0 0.0
    %5288 = vmatpush1.msra.mxu0 0.0
    %5289 = vmatprep.subr.mxu0 0.0
    %5290 = vmatpush1.msra.mxu0 0.0
    %5291 = vmatprep.subr.mxu0 0.0
    %5292 = vmatpush1.msra.mxu0 0.0
    %5293 = vmatprep.subr.mxu0 0.0
    %5294 = vmatpush1.msra.mxu0 0.0
    %5295 = vmatprep.subr.mxu0 0.0
    %5296 = vmatpush1.msra.mxu0 0.0
    %5297 = vmatprep.subr.mxu0 0.0
    %5298 = vmatpush1.msra.mxu0 0.0
    %5299 = vmatprep.subr.mxu0 0.0
    %5300 = vmatpush1.msra.mxu0 0.0
    %5301 = vmatprep.subr.mxu0 0.0
    %5302 = vmatpush1.msra.mxu0 0.0
    %5303 = vmatprep.subr.mxu0 0.0
    %5304 = vmatpush1.msra.mxu0 0.0
    %5305 = vmatprep.subr.mxu0 0.0
    %5306 = vmatpush1.msra.mxu0 0.0
    %5307 = vmatprep.subr.mxu0 0.0
    %5308 = vmatpush1.msra.mxu0 0.0
    %5309 = vmatprep.subr.mxu0 0.0
    %5310 = vmatpush1.msra.mxu0 0.0
    %5311 = vmatprep.subr.mxu0 0.0
    %5312 = vmatpush1.msra.mxu0 0.0
    %5313 = vmatprep.subr.mxu0 0.0
    %5314 = vmatpush1.msra.mxu0 0.0
    %5315 = vmatprep.subr.mxu0 0.0
    %5316 = vmatpush1.msra.mxu0 0.0
    %5317 = vmatprep.subr.mxu0 0.0
    %5318 = vmatpush1.msra.mxu0 0.0
    %5319 = vmatprep.mubr.f32.mxu0 0.0
    %v5320 = vand.u32 %v5082, 4294901760
    %5321 = vmatmul.mubr.f32.gmra.mrb[0].mxu0 %v5320
    %v5322 = vpop.f32.mrb[0].mxu0
    %v5323 = vadd.f32 %v5172, %v5322
    %v5324 = vpop.f32.mrb[0].mxu0
    %5325 = vdwg.mxu0
    %5326 = vmatprep.subr.mxu0 0.0
    %v5327 = vand.u32 %v52, 4294901760
    %v5328 = vsub.f32 %v52, %v5327
    %5329 = vmatpush1.msra.mxu0 %v5328
    %5330 = vmatprep.subr.mxu0 0.0
    %v5331 = vand.u32 %v53, 4294901760
    %v5332 = vsub.f32 %v53, %v5331
    %5333 = vmatpush1.msra.mxu0 %v5332
    %5334 = vmatprep.subr.mxu0 0.0
    %v5335 = vand.u32 %v54, 4294901760
    %v5336 = vsub.f32 %v54, %v5335
    %5337 = vmatpush1.msra.mxu0 %v5336
    %5338 = vmatprep.subr.mxu0 0.0
    %v5339 = vand.u32 %v55, 4294901760
    %v5340 = vsub.f32 %v55, %v5339
    %5341 = vmatpush1.msra.mxu0 %v5340
    %5342 = vmatprep.subr.mxu0 0.0
    %v5343 = vand.u32 %v56, 4294901760
    %v5344 = vsub.f32 %v56, %v5343
    %5345 = vmatpush1.msra.mxu0 %v5344
    %5346 = vmatprep.subr.mxu0 0.0
    %v5347 = vand.u32 %v57, 4294901760
    %v5348 = vsub.f32 %v57, %v5347
    %5349 = vmatpush1.msra.mxu0 %v5348
    %5350 = vmatprep.subr.mxu0 0.0
    %v5351 = vand.u32 %v58, 4294901760
    %v5352 = vsub.f32 %v58, %v5351
    %5353 = vmatpush1.msra.mxu0 %v5352
    %5354 = vmatprep.subr.mxu0 0.0
    %v5355 = vand.u32 %v59, 4294901760
    %v5356 = vsub.f32 %v59, %v5355
    %5357 = vmatpush1.msra.mxu0 %v5356
    %5358 = vmatprep.subr.mxu0 0.0
    %v5359 = vand.u32 %v60, 4294901760
    %v5360 = vsub.f32 %v60, %v5359
    %5361 = vmatpush1.msra.mxu0 %v5360
    %5362 = vmatprep.subr.mxu0 0.0
    %v5363 = vand.u32 %v61, 4294901760
    %v5364 = vsub.f32 %v61, %v5363
    %5365 = vmatpush1.msra.mxu0 %v5364
    %5366 = vmatprep.subr.mxu0 0.0
    %v5367 = vand.u32 %v62, 4294901760
    %v5368 = vsub.f32 %v62, %v5367
    %5369 = vmatpush1.msra.mxu0 %v5368
    %5370 = vmatprep.subr.mxu0 0.0
    %v5371 = vand.u32 %v63, 4294901760
    %v5372 = vsub.f32 %v63, %v5371
    %5373 = vmatpush1.msra.mxu0 %v5372
    %5374 = vmatprep.subr.mxu0 0.0
    %v5375 = vand.u32 %v64, 4294901760
    %v5376 = vsub.f32 %v64, %v5375
    %5377 = vmatpush1.msra.mxu0 %v5376
    %5378 = vmatprep.subr.mxu0 0.0
    %v5379 = vand.u32 %v65, 4294901760
    %v5380 = vsub.f32 %v65, %v5379
    %5381 = vmatpush1.msra.mxu0 %v5380
    %5382 = vmatprep.subr.mxu0 0.0
    %v5383 = vand.u32 %v66, 4294901760
    %v5384 = vsub.f32 %v66, %v5383
    %5385 = vmatpush1.msra.mxu0 %v5384
    %5386 = vmatprep.subr.mxu0 0.0
    %v5387 = vand.u32 %v67, 4294901760
    %v5388 = vsub.f32 %v67, %v5387
    %5389 = vmatpush1.msra.mxu0 %v5388
    %5390 = vmatprep.subr.mxu0 0.0
    %5391 = vmatpush1.msra.mxu0 0.0
    %5392 = vmatprep.subr.mxu0 0.0
    %5393 = vmatpush1.msra.mxu0 0.0
    %5394 = vmatprep.subr.mxu0 0.0
    %5395 = vmatpush1.msra.mxu0 0.0
    %5396 = vmatprep.subr.mxu0 0.0
    %5397 = vmatpush1.msra.mxu0 0.0
    %5398 = vmatprep.subr.mxu0 0.0
    %5399 = vmatpush1.msra.mxu0 0.0
    %5400 = vmatprep.subr.mxu0 0.0
    %5401 = vmatpush1.msra.mxu0 0.0
    %5402 = vmatprep.subr.mxu0 0.0
    %5403 = vmatpush1.msra.mxu0 0.0
    %5404 = vmatprep.subr.mxu0 0.0
    %5405 = vmatpush1.msra.mxu0 0.0
    %5406 = vmatprep.subr.mxu0 0.0
    %5407 = vmatpush1.msra.mxu0 0.0
    %5408 = vmatprep.subr.mxu0 0.0
    %5409 = vmatpush1.msra.mxu0 0.0
    %5410 = vmatprep.subr.mxu0 0.0
    %5411 = vmatpush1.msra.mxu0 0.0
    %5412 = vmatprep.subr.mxu0 0.0
    %5413 = vmatpush1.msra.mxu0 0.0
    %5414 = vmatprep.subr.mxu0 0.0
    %5415 = vmatpush1.msra.mxu0 0.0
    %5416 = vmatprep.subr.mxu0 0.0
    %5417 = vmatpush1.msra.mxu0 0.0
    %5418 = vmatprep.subr.mxu0 0.0
    %5419 = vmatpush1.msra.mxu0 0.0
    %5420 = vmatprep.subr.mxu0 0.0
    %5421 = vmatpush1.msra.mxu0 0.0
    %5422 = vmatprep.mubr.f32.mxu0 0.0
    %v5423 = vand.u32 %v5082, 4294901760
    %v5424 = vsub.f32 %v5082, %v5423
    %5425 = vmatmul.mubr.f32.gmra.mrb[0].mxu0 %v5424
    %v5426 = vpop.f32.mrb[0].mxu0
    %v5427 = vadd.f32 %v5323, %v5426
    %v5428 = vpop.f32.mrb[0].mxu0
    %5429 = vdwg.mxu0
    %5430 = vmatprep.subr.mxu0 0.0
    %v5431 = vand.u32 %v52, 4294901760
    %5432 = vmatpush1.msra.mxu0 %v5431
    %5433 = vmatprep.subr.mxu0 0.0
    %v5434 = vand.u32 %v53, 4294901760
    %5435 = vmatpush1.msra.mxu0 %v5434
    %5436 = vmatprep.subr.mxu0 0.0
    %v5437 = vand.u32 %v54, 4294901760
    %5438 = vmatpush1.msra.mxu0 %v5437
    %5439 = vmatprep.subr.mxu0 0.0
    %v5440 = vand.u32 %v55, 4294901760
    %5441 = vmatpush1.msra.mxu0 %v5440
    %5442 = vmatprep.subr.mxu0 0.0
    %v5443 = vand.u32 %v56, 4294901760
    %5444 = vmatpush1.msra.mxu0 %v5443
    %5445 = vmatprep.subr.mxu0 0.0
    %v5446 = vand.u32 %v57, 4294901760
    %5447 = vmatpush1.msra.mxu0 %v5446
    %5448 = vmatprep.subr.mxu0 0.0
    %v5449 = vand.u32 %v58, 4294901760
    %5450 = vmatpush1.msra.mxu0 %v5449
    %5451 = vmatprep.subr.mxu0 0.0
    %v5452 = vand.u32 %v59, 4294901760
    %5453 = vmatpush1.msra.mxu0 %v5452
    %5454 = vmatprep.subr.mxu0 0.0
    %v5455 = vand.u32 %v60, 4294901760
    %5456 = vmatpush1.msra.mxu0 %v5455
    %5457 = vmatprep.subr.mxu0 0.0
    %v5458 = vand.u32 %v61, 4294901760
    %5459 = vmatpush1.msra.mxu0 %v5458
    %5460 = vmatprep.subr.mxu0 0.0
    %v5461 = vand.u32 %v62, 4294901760
    %5462 = vmatpush1.msra.mxu0 %v5461
    %5463 = vmatprep.subr.mxu0 0.0
    %v5464 = vand.u32 %v63, 4294901760
    %5465 = vmatpush1.msra.mxu0 %v5464
    %5466 = vmatprep.subr.mxu0 0.0
    %v5467 = vand.u32 %v64, 4294901760
    %5468 = vmatpush1.msra.mxu0 %v5467
    %5469 = vmatprep.subr.mxu0 0.0
    %v5470 = vand.u32 %v65, 4294901760
    %5471 = vmatpush1.msra.mxu0 %v5470
    %5472 = vmatprep.subr.mxu0 0.0
    %v5473 = vand.u32 %v66, 4294901760
    %5474 = vmatpush1.msra.mxu0 %v5473
    %5475 = vmatprep.subr.mxu0 0.0
    %v5476 = vand.u32 %v67, 4294901760
    %5477 = vmatpush1.msra.mxu0 %v5476
    %5478 = vmatprep.subr.mxu0 0.0
    %5479 = vmatpush1.msra.mxu0 0.0
    %5480 = vmatprep.subr.mxu0 0.0
    %5481 = vmatpush1.msra.mxu0 0.0
    %5482 = vmatprep.subr.mxu0 0.0
    %5483 = vmatpush1.msra.mxu0 0.0
    %5484 = vmatprep.subr.mxu0 0.0
    %5485 = vmatpush1.msra.mxu0 0.0
    %5486 = vmatprep.subr.mxu0 0.0
    %5487 = vmatpush1.msra.mxu0 0.0
    %5488 = vmatprep.subr.mxu0 0.0
    %5489 = vmatpush1.msra.mxu0 0.0
    %5490 = vmatprep.subr.mxu0 0.0
    %5491 = vmatpush1.msra.mxu0 0.0
    %5492 = vmatprep.subr.mxu0 0.0
    %5493 = vmatpush1.msra.mxu0 0.0
    %5494 = vmatprep.subr.mxu0 0.0
    %5495 = vmatpush1.msra.mxu0 0.0
    %5496 = vmatprep.subr.mxu0 0.0
    %5497 = vmatpush1.msra.mxu0 0.0
    %5498 = vmatprep.subr.mxu0 0.0
    %5499 = vmatpush1.msra.mxu0 0.0
    %5500 = vmatprep.subr.mxu0 0.0
    %5501 = vmatpush1.msra.mxu0 0.0
    %5502 = vmatprep.subr.mxu0 0.0
    %5503 = vmatpush1.msra.mxu0 0.0
    %5504 = vmatprep.subr.mxu0 0.0
    %5505 = vmatpush1.msra.mxu0 0.0
    %5506 = vmatprep.subr.mxu0 0.0
    %5507 = vmatpush1.msra.mxu0 0.0
    %5508 = vmatprep.subr.mxu0 0.0
    %5509 = vmatpush1.msra.mxu0 0.0
    %5510 = vmatprep.mubr.f32.mxu0 0.0
    %v5511 = vand.u32 %v5082, 4294901760
    %v5512 = vsub.f32 %v5082, %v5511
    %v5513 = vand.u32 %v5512, 4294901760
    %5514 = vmatmul.mubr.f32.gmra.mrb[0].mxu0 %v5513
    %v5515 = vpop.f32.mrb[0].mxu0
    %v5516 = vadd.f32 %v5427, %v5515
    %v5517 = vpop.f32.mrb[0].mxu0
    %5518 = vdwg.mxu0
    %5519 = vmatprep.subr.mxu0 0.0
    %v5520 = vand.u32 %v52, 4294901760
    %v5521 = vsub.f32 %v52, %v5520
    %v5522 = vand.u32 %v5521, 4294901760
    %5523 = vmatpush1.msra.mxu0 %v5522
    %5524 = vmatprep.subr.mxu0 0.0
    %v5525 = vand.u32 %v53, 4294901760
    %v5526 = vsub.f32 %v53, %v5525
    %v5527 = vand.u32 %v5526, 4294901760
    %5528 = vmatpush1.msra.mxu0 %v5527
    %5529 = vmatprep.subr.mxu0 0.0
    %v5530 = vand.u32 %v54, 4294901760
    %v5531 = vsub.f32 %v54, %v5530
    %v5532 = vand.u32 %v5531, 4294901760
    %5533 = vmatpush1.msra.mxu0 %v5532
    %5534 = vmatprep.subr.mxu0 0.0
    %v5535 = vand.u32 %v55, 4294901760
    %v5536 = vsub.f32 %v55, %v5535
    %v5537 = vand.u32 %v5536, 4294901760
    %5538 = vmatpush1.msra.mxu0 %v5537
    %5539 = vmatprep.subr.mxu0 0.0
    %v5540 = vand.u32 %v56, 4294901760
    %v5541 = vsub.f32 %v56, %v5540
    %v5542 = vand.u32 %v5541, 4294901760
    %5543 = vmatpush1.msra.mxu0 %v5542
    %5544 = vmatprep.subr.mxu0 0.0
    %v5545 = vand.u32 %v57, 4294901760
    %v5546 = vsub.f32 %v57, %v5545
    %v5547 = vand.u32 %v5546, 4294901760
    %5548 = vmatpush1.msra.mxu0 %v5547
    %5549 = vmatprep.subr.mxu0 0.0
    %v5550 = vand.u32 %v58, 4294901760
    %v5551 = vsub.f32 %v58, %v5550
    %v5552 = vand.u32 %v5551, 4294901760
    %5553 = vmatpush1.msra.mxu0 %v5552
    %5554 = vmatprep.subr.mxu0 0.0
    %v5555 = vand.u32 %v59, 4294901760
    %v5556 = vsub.f32 %v59, %v5555
    %v5557 = vand.u32 %v5556, 4294901760
    %5558 = vmatpush1.msra.mxu0 %v5557
    %5559 = vmatprep.subr.mxu0 0.0
    %v5560 = vand.u32 %v60, 4294901760
    %v5561 = vsub.f32 %v60, %v5560
    %v5562 = vand.u32 %v5561, 4294901760
    %5563 = vmatpush1.msra.mxu0 %v5562
    %5564 = vmatprep.subr.mxu0 0.0
    %v5565 = vand.u32 %v61, 4294901760
    %v5566 = vsub.f32 %v61, %v5565
    %v5567 = vand.u32 %v5566, 4294901760
    %5568 = vmatpush1.msra.mxu0 %v5567
    %5569 = vmatprep.subr.mxu0 0.0
    %v5570 = vand.u32 %v62, 4294901760
    %v5571 = vsub.f32 %v62, %v5570
    %v5572 = vand.u32 %v5571, 4294901760
    %5573 = vmatpush1.msra.mxu0 %v5572
    %5574 = vmatprep.subr.mxu0 0.0
    %v5575 = vand.u32 %v63, 4294901760
    %v5576 = vsub.f32 %v63, %v5575
    %v5577 = vand.u32 %v5576, 4294901760
    %5578 = vmatpush1.msra.mxu0 %v5577
    %5579 = vmatprep.subr.mxu0 0.0
    %v5580 = vand.u32 %v64, 4294901760
    %v5581 = vsub.f32 %v64, %v5580
    %v5582 = vand.u32 %v5581, 4294901760
    %5583 = vmatpush1.msra.mxu0 %v5582
    %5584 = vmatprep.subr.mxu0 0.0
    %v5585 = vand.u32 %v65, 4294901760
    %v5586 = vsub.f32 %v65, %v5585
    %v5587 = vand.u32 %v5586, 4294901760
    %5588 = vmatpush1.msra.mxu0 %v5587
    %5589 = vmatprep.subr.mxu0 0.0
    %v5590 = vand.u32 %v66, 4294901760
    %v5591 = vsub.f32 %v66, %v5590
    %v5592 = vand.u32 %v5591, 4294901760
    %5593 = vmatpush1.msra.mxu0 %v5592
    %5594 = vmatprep.subr.mxu0 0.0
    %v5595 = vand.u32 %v67, 4294901760
    %v5596 = vsub.f32 %v67, %v5595
    %v5597 = vand.u32 %v5596, 4294901760
    %5598 = vmatpush1.msra.mxu0 %v5597
    %5599 = vmatprep.subr.mxu0 0.0
    %5600 = vmatpush1.msra.mxu0 0.0
    %5601 = vmatprep.subr.mxu0 0.0
    %5602 = vmatpush1.msra.mxu0 0.0
    %5603 = vmatprep.subr.mxu0 0.0
    %5604 = vmatpush1.msra.mxu0 0.0
    %5605 = vmatprep.subr.mxu0 0.0
    %5606 = vmatpush1.msra.mxu0 0.0
    %5607 = vmatprep.subr.mxu0 0.0
    %5608 = vmatpush1.msra.mxu0 0.0
    %5609 = vmatprep.subr.mxu0 0.0
    %5610 = vmatpush1.msra.mxu0 0.0
    %5611 = vmatprep.subr.mxu0 0.0
    %5612 = vmatpush1.msra.mxu0 0.0
    %5613 = vmatprep.subr.mxu0 0.0
    %5614 = vmatpush1.msra.mxu0 0.0
    %5615 = vmatprep.subr.mxu0 0.0
    %5616 = vmatpush1.msra.mxu0 0.0
    %5617 = vmatprep.subr.mxu0 0.0
    %5618 = vmatpush1.msra.mxu0 0.0
    %5619 = vmatprep.subr.mxu0 0.0
    %5620 = vmatpush1.msra.mxu0 0.0
    %5621 = vmatprep.subr.mxu0 0.0
    %5622 = vmatpush1.msra.mxu0 0.0
    %5623 = vmatprep.subr.mxu0 0.0
    %5624 = vmatpush1.msra.mxu0 0.0
    %5625 = vmatprep.subr.mxu0 0.0
    %5626 = vmatpush1.msra.mxu0 0.0
    %5627 = vmatprep.subr.mxu0 0.0
    %5628 = vmatpush1.msra.mxu0 0.0
    %5629 = vmatprep.subr.mxu0 0.0
    %5630 = vmatpush1.msra.mxu0 0.0
    %5631 = vmatprep.mubr.f32.mxu0 0.0
    %v5632 = vand.u32 %v5082, 4294901760
    %5633 = vmatmul.mubr.f32.gmra.mrb[0].mxu0 %v5632
    %v5634 = vpop.f32.mrb[0].mxu0
    %v5635 = vadd.f32 %v5516, %v5634
    %v5636 = vpop.f32.mrb[0].mxu0
    %5637 = vdwg.mxu0
    %5638 = vmatprep.subr.mxu0 0.0
    %v5639 = vand.u32 %v52, 4294901760
    %5640 = vmatpush1.msra.mxu0 %v5639
    %5641 = vmatprep.subr.mxu0 0.0
    %v5642 = vand.u32 %v53, 4294901760
    %5643 = vmatpush1.msra.mxu0 %v5642
    %5644 = vmatprep.subr.mxu0 0.0
    %v5645 = vand.u32 %v54, 4294901760
    %5646 = vmatpush1.msra.mxu0 %v5645
    %5647 = vmatprep.subr.mxu0 0.0
    %v5648 = vand.u32 %v55, 4294901760
    %5649 = vmatpush1.msra.mxu0 %v5648
    %5650 = vmatprep.subr.mxu0 0.0
    %v5651 = vand.u32 %v56, 4294901760
    %5652 = vmatpush1.msra.mxu0 %v5651
    %5653 = vmatprep.subr.mxu0 0.0
    %v5654 = vand.u32 %v57, 4294901760
    %5655 = vmatpush1.msra.mxu0 %v5654
    %5656 = vmatprep.subr.mxu0 0.0
    %v5657 = vand.u32 %v58, 4294901760
    %5658 = vmatpush1.msra.mxu0 %v5657
    %5659 = vmatprep.subr.mxu0 0.0
    %v5660 = vand.u32 %v59, 4294901760
    %5661 = vmatpush1.msra.mxu0 %v5660
    %5662 = vmatprep.subr.mxu0 0.0
    %v5663 = vand.u32 %v60, 4294901760
    %5664 = vmatpush1.msra.mxu0 %v5663
    %5665 = vmatprep.subr.mxu0 0.0
    %v5666 = vand.u32 %v61, 4294901760
    %5667 = vmatpush1.msra.mxu0 %v5666
    %5668 = vmatprep.subr.mxu0 0.0
    %v5669 = vand.u32 %v62, 4294901760
    %5670 = vmatpush1.msra.mxu0 %v5669
    %5671 = vmatprep.subr.mxu0 0.0
    %v5672 = vand.u32 %v63, 4294901760
    %5673 = vmatpush1.msra.mxu0 %v5672
    %5674 = vmatprep.subr.mxu0 0.0
    %v5675 = vand.u32 %v64, 4294901760
    %5676 = vmatpush1.msra.mxu0 %v5675
    %5677 = vmatprep.subr.mxu0 0.0
    %v5678 = vand.u32 %v65, 4294901760
    %5679 = vmatpush1.msra.mxu0 %v5678
    %5680 = vmatprep.subr.mxu0 0.0
    %v5681 = vand.u32 %v66, 4294901760
    %5682 = vmatpush1.msra.mxu0 %v5681
    %5683 = vmatprep.subr.mxu0 0.0
    %v5684 = vand.u32 %v67, 4294901760
    %5685 = vmatpush1.msra.mxu0 %v5684
    %5686 = vmatprep.subr.mxu0 0.0
    %5687 = vmatpush1.msra.mxu0 0.0
    %5688 = vmatprep.subr.mxu0 0.0
    %5689 = vmatpush1.msra.mxu0 0.0
    %5690 = vmatprep.subr.mxu0 0.0
    %5691 = vmatpush1.msra.mxu0 0.0
    %5692 = vmatprep.subr.mxu0 0.0
    %5693 = vmatpush1.msra.mxu0 0.0
    %5694 = vmatprep.subr.mxu0 0.0
    %5695 = vmatpush1.msra.mxu0 0.0
    %5696 = vmatprep.subr.mxu0 0.0
    %5697 = vmatpush1.msra.mxu0 0.0
    %5698 = vmatprep.subr.mxu0 0.0
    %5699 = vmatpush1.msra.mxu0 0.0
    %5700 = vmatprep.subr.mxu0 0.0
    %5701 = vmatpush1.msra.mxu0 0.0
    %5702 = vmatprep.subr.mxu0 0.0
    %5703 = vmatpush1.msra.mxu0 0.0
    %5704 = vmatprep.subr.mxu0 0.0
    %5705 = vmatpush1.msra.mxu0 0.0
    %5706 = vmatprep.subr.mxu0 0.0
    %5707 = vmatpush1.msra.mxu0 0.0
    %5708 = vmatprep.subr.mxu0 0.0
    %5709 = vmatpush1.msra.mxu0 0.0
    %5710 = vmatprep.subr.mxu0 0.0
    %5711 = vmatpush1.msra.mxu0 0.0
    %5712 = vmatprep.subr.mxu0 0.0
    %5713 = vmatpush1.msra.mxu0 0.0
    %5714 = vmatprep.subr.mxu0 0.0
    %5715 = vmatpush1.msra.mxu0 0.0
    %5716 = vmatprep.subr.mxu0 0.0
    %5717 = vmatpush1.msra.mxu0 0.0
    %5718 = vmatprep.mubr.f32.mxu0 0.0
    %v5719 = vand.u32 %v5082, 4294901760
    %5720 = vmatmul.mubr.f32.gmra.mrb[0].mxu0 %v5719
    %v5721 = vpop.f32.mrb[0].mxu0
    %v5722 = vadd.f32 %v5635, %v5721
    %v5723 = vpop.f32.mrb[0].mxu0
    %5724 = vdwg.mxu0
    %v5725 = vmul.f32 %v86, %v5722
    %v5726 = vmul.f32 %v5725, 0.11111111
    %v5727 = vadd.f32 %v5083, %v5726
    %5728 = vmatprep.subr.mxu0 0.0
    %v5729 = vand.u32 %v52, 4294901760
    %5730 = vmatpush1.msra.mxu0 %v5729
    %5731 = vmatprep.subr.mxu0 0.0
    %v5732 = vand.u32 %v53, 4294901760
    %5733 = vmatpush1.msra.mxu0 %v5732
    %5734 = vmatprep.subr.mxu0 0.0
    %v5735 = vand.u32 %v54, 4294901760
    %5736 = vmatpush1.msra.mxu0 %v5735
    %5737 = vmatprep.subr.mxu0 0.0
    %v5738 = vand.u32 %v55, 4294901760
    %5739 = vmatpush1.msra.mxu0 %v5738
    %5740 = vmatprep.subr.mxu0 0.0
    %v5741 = vand.u32 %v56, 4294901760
    %5742 = vmatpush1.msra.mxu0 %v5741
    %5743 = vmatprep.subr.mxu0 0.0
    %v5744 = vand.u32 %v57, 4294901760
    %5745 = vmatpush1.msra.mxu0 %v5744
    %5746 = vmatprep.subr.mxu0 0.0
    %v5747 = vand.u32 %v58, 4294901760
    %5748 = vmatpush1.msra.mxu0 %v5747
    %5749 = vmatprep.subr.mxu0 0.0
    %v5750 = vand.u32 %v59, 4294901760
    %5751 = vmatpush1.msra.mxu0 %v5750
    %5752 = vmatprep.subr.mxu0 0.0
    %v5753 = vand.u32 %v60, 4294901760
    %5754 = vmatpush1.msra.mxu0 %v5753
    %5755 = vmatprep.subr.mxu0 0.0
    %v5756 = vand.u32 %v61, 4294901760
    %5757 = vmatpush1.msra.mxu0 %v5756
    %5758 = vmatprep.subr.mxu0 0.0
    %v5759 = vand.u32 %v62, 4294901760
    %5760 = vmatpush1.msra.mxu0 %v5759
    %5761 = vmatprep.subr.mxu0 0.0
    %v5762 = vand.u32 %v63, 4294901760
    %5763 = vmatpush1.msra.mxu0 %v5762
    %5764 = vmatprep.subr.mxu0 0.0
    %v5765 = vand.u32 %v64, 4294901760
    %5766 = vmatpush1.msra.mxu0 %v5765
    %5767 = vmatprep.subr.mxu0 0.0
    %v5768 = vand.u32 %v65, 4294901760
    %5769 = vmatpush1.msra.mxu0 %v5768
    %5770 = vmatprep.subr.mxu0 0.0
    %v5771 = vand.u32 %v66, 4294901760
    %5772 = vmatpush1.msra.mxu0 %v5771
    %5773 = vmatprep.subr.mxu0 0.0
    %v5774 = vand.u32 %v67, 4294901760
    %5775 = vmatpush1.msra.mxu0 %v5774
    %5776 = vmatprep.subr.mxu0 0.0
    %5777 = vmatpush1.msra.mxu0 0.0
    %5778 = vmatprep.subr.mxu0 0.0
    %5779 = vmatpush1.msra.mxu0 0.0
    %5780 = vmatprep.subr.mxu0 0.0
    %5781 = vmatpush1.msra.mxu0 0.0
    %5782 = vmatprep.subr.mxu0 0.0
    %5783 = vmatpush1.msra.mxu0 0.0
    %5784 = vmatprep.subr.mxu0 0.0
    %5785 = vmatpush1.msra.mxu0 0.0
    %5786 = vmatprep.subr.mxu0 0.0
    %5787 = vmatpush1.msra.mxu0 0.0
    %5788 = vmatprep.subr.mxu0 0.0
    %5789 = vmatpush1.msra.mxu0 0.0
    %5790 = vmatprep.subr.mxu0 0.0
    %5791 = vmatpush1.msra.mxu0 0.0
    %5792 = vmatprep.subr.mxu0 0.0
    %5793 = vmatpush1.msra.mxu0 0.0
    %5794 = vmatprep.subr.mxu0 0.0
    %5795 = vmatpush1.msra.mxu0 0.0
    %5796 = vmatprep.subr.mxu0 0.0
    %5797 = vmatpush1.msra.mxu0 0.0
    %5798 = vmatprep.subr.mxu0 0.0
    %5799 = vmatpush1.msra.mxu0 0.0
    %5800 = vmatprep.subr.mxu0 0.0
    %5801 = vmatpush1.msra.mxu0 0.0
    %5802 = vmatprep.subr.mxu0 0.0
    %5803 = vmatpush1.msra.mxu0 0.0
    %5804 = vmatprep.subr.mxu0 0.0
    %5805 = vmatpush1.msra.mxu0 0.0
    %5806 = vmatprep.subr.mxu0 0.0
    %5807 = vmatpush1.msra.mxu0 0.0
    %5808 = vmatprep.mubr.f32.mxu0 0.0
    %v5809 = vand.u32 %v5726, 4294901760
    %v5810 = vsub.f32 %v5726, %v5809
    %v5811 = vand.u32 %v5810, 4294901760
    %v5812 = vsub.f32 %v5810, %v5811
    %v5813 = vand.u32 %v5812, 4294901760
    %5814 = vmatmul.mubr.f32.gmra.mrb[0].mxu0 %v5813
    %v5815 = vpop.f32.mrb[0].mxu0
    %v5816 = vadd.f32 0.0, %v5815
    %v5817 = vpop.f32.mrb[0].mxu0
    %5818 = vdwg.mxu0
    %5819 = vmatprep.subr.mxu0 0.0
    %v5820 = vand.u32 %v52, 4294901760
    %v5821 = vsub.f32 %v52, %v5820
    %v5822 = vand.u32 %v5821, 4294901760
    %v5823 = vsub.f32 %v5821, %v5822
    %v5824 = vand.u32 %v5823, 4294901760
    %5825 = vmatpush1.msra.mxu0 %v5824
    %5826 = vmatprep.subr.mxu0 0.0
    %v5827 = vand.u32 %v53, 4294901760
    %v5828 = vsub.f32 %v53, %v5827
    %v5829 = vand.u32 %v5828, 4294901760
    %v5830 = vsub.f32 %v5828, %v5829
    %v5831 = vand.u32 %v5830, 4294901760
    %5832 = vmatpush1.msra.mxu0 %v5831
    %5833 = vmatprep.subr.mxu0 0.0
    %v5834 = vand.u32 %v54, 4294901760
    %v5835 = vsub.f32 %v54, %v5834
    %v5836 = vand.u32 %v5835, 4294901760
    %v5837 = vsub.f32 %v5835, %v5836
    %v5838 = vand.u32 %v5837, 4294901760
    %5839 = vmatpush1.msra.mxu0 %v5838
    %5840 = vmatprep.subr.mxu0 0.0
    %v5841 = vand.u32 %v55, 4294901760
    %v5842 = vsub.f32 %v55, %v5841
    %v5843 = vand.u32 %v5842, 4294901760
    %v5844 = vsub.f32 %v5842, %v5843
    %v5845 = vand.u32 %v5844, 4294901760
    %5846 = vmatpush1.msra.mxu0 %v5845
    %5847 = vmatprep.subr.mxu0 0.0
    %v5848 = vand.u32 %v56, 4294901760
    %v5849 = vsub.f32 %v56, %v5848
    %v5850 = vand.u32 %v5849, 4294901760
    %v5851 = vsub.f32 %v5849, %v5850
    %v5852 = vand.u32 %v5851, 4294901760
    %5853 = vmatpush1.msra.mxu0 %v5852
    %5854 = vmatprep.subr.mxu0 0.0
    %v5855 = vand.u32 %v57, 4294901760
    %v5856 = vsub.f32 %v57, %v5855
    %v5857 = vand.u32 %v5856, 4294901760
    %v5858 = vsub.f32 %v5856, %v5857
    %v5859 = vand.u32 %v5858, 4294901760
    %5860 = vmatpush1.msra.mxu0 %v5859
    %5861 = vmatprep.subr.mxu0 0.0
    %v5862 = vand.u32 %v58, 4294901760
    %v5863 = vsub.f32 %v58, %v5862
    %v5864 = vand.u32 %v5863, 4294901760
    %v5865 = vsub.f32 %v5863, %v5864
    %v5866 = vand.u32 %v5865, 4294901760
    %5867 = vmatpush1.msra.mxu0 %v5866
    %5868 = vmatprep.subr.mxu0 0.0
    %v5869 = vand.u32 %v59, 4294901760
    %v5870 = vsub.f32 %v59, %v5869
    %v5871 = vand.u32 %v5870, 4294901760
    %v5872 = vsub.f32 %v5870, %v5871
    %v5873 = vand.u32 %v5872, 4294901760
    %5874 = vmatpush1.msra.mxu0 %v5873
    %5875 = vmatprep.subr.mxu0 0.0
    %v5876 = vand.u32 %v60, 4294901760
    %v5877 = vsub.f32 %v60, %v5876
    %v5878 = vand.u32 %v5877, 4294901760
    %v5879 = vsub.f32 %v5877, %v5878
    %v5880 = vand.u32 %v5879, 4294901760
    %5881 = vmatpush1.msra.mxu0 %v5880
    %5882 = vmatprep.subr.mxu0 0.0
    %v5883 = vand.u32 %v61, 4294901760
    %v5884 = vsub.f32 %v61, %v5883
    %v5885 = vand.u32 %v5884, 4294901760
    %v5886 = vsub.f32 %v5884, %v5885
    %v5887 = vand.u32 %v5886, 4294901760
    %5888 = vmatpush1.msra.mxu0 %v5887
    %5889 = vmatprep.subr.mxu0 0.0
    %v5890 = vand.u32 %v62, 4294901760
    %v5891 = vsub.f32 %v62, %v5890
    %v5892 = vand.u32 %v5891, 4294901760
    %v5893 = vsub.f32 %v5891, %v5892
    %v5894 = vand.u32 %v5893, 4294901760
    %5895 = vmatpush1.msra.mxu0 %v5894
    %5896 = vmatprep.subr.mxu0 0.0
    %v5897 = vand.u32 %v63, 4294901760
    %v5898 = vsub.f32 %v63, %v5897
    %v5899 = vand.u32 %v5898, 4294901760
    %v5900 = vsub.f32 %v5898, %v5899
    %v5901 = vand.u32 %v5900, 4294901760
    %5902 = vmatpush1.msra.mxu0 %v5901
    %5903 = vmatprep.subr.mxu0 0.0
    %v5904 = vand.u32 %v64, 4294901760
    %v5905 = vsub.f32 %v64, %v5904
    %v5906 = vand.u32 %v5905, 4294901760
    %v5907 = vsub.f32 %v5905, %v5906
    %v5908 = vand.u32 %v5907, 4294901760
    %5909 = vmatpush1.msra.mxu0 %v5908
    %5910 = vmatprep.subr.mxu0 0.0
    %v5911 = vand.u32 %v65, 4294901760
    %v5912 = vsub.f32 %v65, %v5911
    %v5913 = vand.u32 %v5912, 4294901760
    %v5914 = vsub.f32 %v5912, %v5913
    %v5915 = vand.u32 %v5914, 4294901760
    %5916 = vmatpush1.msra.mxu0 %v5915
    %5917 = vmatprep.subr.mxu0 0.0
    %v5918 = vand.u32 %v66, 4294901760
    %v5919 = vsub.f32 %v66, %v5918
    %v5920 = vand.u32 %v5919, 4294901760
    %v5921 = vsub.f32 %v5919, %v5920
    %v5922 = vand.u32 %v5921, 4294901760
    %5923 = vmatpush1.msra.mxu0 %v5922
    %5924 = vmatprep.subr.mxu0 0.0
    %v5925 = vand.u32 %v67, 4294901760
    %v5926 = vsub.f32 %v67, %v5925
    %v5927 = vand.u32 %v5926, 4294901760
    %v5928 = vsub.f32 %v5926, %v5927
    %v5929 = vand.u32 %v5928, 4294901760
    %5930 = vmatpush1.msra.mxu0 %v5929
    %5931 = vmatprep.subr.mxu0 0.0
    %5932 = vmatpush1.msra.mxu0 0.0
    %5933 = vmatprep.subr.mxu0 0.0
    %5934 = vmatpush1.msra.mxu0 0.0
    %5935 = vmatprep.subr.mxu0 0.0
    %5936 = vmatpush1.msra.mxu0 0.0
    %5937 = vmatprep.subr.mxu0 0.0
    %5938 = vmatpush1.msra.mxu0 0.0
    %5939 = vmatprep.subr.mxu0 0.0
    %5940 = vmatpush1.msra.mxu0 0.0
    %5941 = vmatprep.subr.mxu0 0.0
    %5942 = vmatpush1.msra.mxu0 0.0
    %5943 = vmatprep.subr.mxu0 0.0
    %5944 = vmatpush1.msra.mxu0 0.0
    %5945 = vmatprep.subr.mxu0 0.0
    %5946 = vmatpush1.msra.mxu0 0.0
    %5947 = vmatprep.subr.mxu0 0.0
    %5948 = vmatpush1.msra.mxu0 0.0
    %5949 = vmatprep.subr.mxu0 0.0
    %5950 = vmatpush1.msra.mxu0 0.0
    %5951 = vmatprep.subr.mxu0 0.0
    %5952 = vmatpush1.msra.mxu0 0.0
    %5953 = vmatprep.subr.mxu0 0.0
    %5954 = vmatpush1.msra.mxu0 0.0
    %5955 = vmatprep.subr.mxu0 0.0
    %5956 = vmatpush1.msra.mxu0 0.0
    %5957 = vmatprep.subr.mxu0 0.0
    %5958 = vmatpush1.msra.mxu0 0.0
    %5959 = vmatprep.subr.mxu0 0.0
    %5960 = vmatpush1.msra.mxu0 0.0
    %5961 = vmatprep.subr.mxu0 0.0
    %5962 = vmatpush1.msra.mxu0 0.0
    %5963 = vmatprep.mubr.f32.mxu0 0.0
    %v5964 = vand.u32 %v5726, 4294901760
    %5965 = vmatmul.mubr.f32.gmra.mrb[0].mxu0 %v5964
    %v5966 = vpop.f32.mrb[0].mxu0
    %v5967 = vadd.f32 %v5816, %v5966
    %v5968 = vpop.f32.mrb[0].mxu0
    %5969 = vdwg.mxu0
    %5970 = vmatprep.subr.mxu0 0.0
    %v5971 = vand.u32 %v52, 4294901760
    %v5972 = vsub.f32 %v52, %v5971
    %5973 = vmatpush1.msra.mxu0 %v5972
    %5974 = vmatprep.subr.mxu0 0.0
    %v5975 = vand.u32 %v53, 4294901760
    %v5976 = vsub.f32 %v53, %v5975
    %5977 = vmatpush1.msra.mxu0 %v5976
    %5978 = vmatprep.subr.mxu0 0.0
    %v5979 = vand.u32 %v54, 4294901760
    %v5980 = vsub.f32 %v54, %v5979
    %5981 = vmatpush1.msra.mxu0 %v5980
    %5982 = vmatprep.subr.mxu0 0.0
    %v5983 = vand.u32 %v55, 4294901760
    %v5984 = vsub.f32 %v55, %v5983
    %5985 = vmatpush1.msra.mxu0 %v5984
    %5986 = vmatprep.subr.mxu0 0.0
    %v5987 = vand.u32 %v56, 4294901760
    %v5988 = vsub.f32 %v56, %v5987
    %5989 = vmatpush1.msra.mxu0 %v5988
    %5990 = vmatprep.subr.mxu0 0.0
    %v5991 = vand.u32 %v57, 4294901760
    %v5992 = vsub.f32 %v57, %v5991
    %5993 = vmatpush1.msra.mxu0 %v5992
    %5994 = vmatprep.subr.mxu0 0.0
    %v5995 = vand.u32 %v58, 4294901760
    %v5996 = vsub.f32 %v58, %v5995
    %5997 = vmatpush1.msra.mxu0 %v5996
    %5998 = vmatprep.subr.mxu0 0.0
    %v5999 = vand.u32 %v59, 4294901760
    %v6000 = vsub.f32 %v59, %v5999
    %6001 = vmatpush1.msra.mxu0 %v6000
    %6002 = vmatprep.subr.mxu0 0.0
    %v6003 = vand.u32 %v60, 4294901760
    %v6004 = vsub.f32 %v60, %v6003
    %6005 = vmatpush1.msra.mxu0 %v6004
    %6006 = vmatprep.subr.mxu0 0.0
    %v6007 = vand.u32 %v61, 4294901760
    %v6008 = vsub.f32 %v61, %v6007
    %6009 = vmatpush1.msra.mxu0 %v6008
    %6010 = vmatprep.subr.mxu0 0.0
    %v6011 = vand.u32 %v62, 4294901760
    %v6012 = vsub.f32 %v62, %v6011
    %6013 = vmatpush1.msra.mxu0 %v6012
    %6014 = vmatprep.subr.mxu0 0.0
    %v6015 = vand.u32 %v63, 4294901760
    %v6016 = vsub.f32 %v63, %v6015
    %6017 = vmatpush1.msra.mxu0 %v6016
    %6018 = vmatprep.subr.mxu0 0.0
    %v6019 = vand.u32 %v64, 4294901760
    %v6020 = vsub.f32 %v64, %v6019
    %6021 = vmatpush1.msra.mxu0 %v6020
    %6022 = vmatprep.subr.mxu0 0.0
    %v6023 = vand.u32 %v65, 4294901760
    %v6024 = vsub.f32 %v65, %v6023
    %6025 = vmatpush1.msra.mxu0 %v6024
    %6026 = vmatprep.subr.mxu0 0.0
    %v6027 = vand.u32 %v66, 4294901760
    %v6028 = vsub.f32 %v66, %v6027
    %6029 = vmatpush1.msra.mxu0 %v6028
    %6030 = vmatprep.subr.mxu0 0.0
    %v6031 = vand.u32 %v67, 4294901760
    %v6032 = vsub.f32 %v67, %v6031
    %6033 = vmatpush1.msra.mxu0 %v6032
    %6034 = vmatprep.subr.mxu0 0.0
    %6035 = vmatpush1.msra.mxu0 0.0
    %6036 = vmatprep.subr.mxu0 0.0
    %6037 = vmatpush1.msra.mxu0 0.0
    %6038 = vmatprep.subr.mxu0 0.0
    %6039 = vmatpush1.msra.mxu0 0.0
    %6040 = vmatprep.subr.mxu0 0.0
    %6041 = vmatpush1.msra.mxu0 0.0
    %6042 = vmatprep.subr.mxu0 0.0
    %6043 = vmatpush1.msra.mxu0 0.0
    %6044 = vmatprep.subr.mxu0 0.0
    %6045 = vmatpush1.msra.mxu0 0.0
    %6046 = vmatprep.subr.mxu0 0.0
    %6047 = vmatpush1.msra.mxu0 0.0
    %6048 = vmatprep.subr.mxu0 0.0
    %6049 = vmatpush1.msra.mxu0 0.0
    %6050 = vmatprep.subr.mxu0 0.0
    %6051 = vmatpush1.msra.mxu0 0.0
    %6052 = vmatprep.subr.mxu0 0.0
    %6053 = vmatpush1.msra.mxu0 0.0
    %6054 = vmatprep.subr.mxu0 0.0
    %6055 = vmatpush1.msra.mxu0 0.0
    %6056 = vmatprep.subr.mxu0 0.0
    %6057 = vmatpush1.msra.mxu0 0.0
    %6058 = vmatprep.subr.mxu0 0.0
    %6059 = vmatpush1.msra.mxu0 0.0
    %6060 = vmatprep.subr.mxu0 0.0
    %6061 = vmatpush1.msra.mxu0 0.0
    %6062 = vmatprep.subr.mxu0 0.0
    %6063 = vmatpush1.msra.mxu0 0.0
    %6064 = vmatprep.subr.mxu0 0.0
    %6065 = vmatpush1.msra.mxu0 0.0
    %6066 = vmatprep.mubr.f32.mxu0 0.0
    %v6067 = vand.u32 %v5726, 4294901760
    %v6068 = vsub.f32 %v5726, %v6067
    %6069 = vmatmul.mubr.f32.gmra.mrb[0].mxu0 %v6068
    %v6070 = vpop.f32.mrb[0].mxu0
    %v6071 = vadd.f32 %v5967, %v6070
    %v6072 = vpop.f32.mrb[0].mxu0
    %6073 = vdwg.mxu0
    %6074 = vmatprep.subr.mxu0 0.0
    %v6075 = vand.u32 %v52, 4294901760
    %6076 = vmatpush1.msra.mxu0 %v6075
    %6077 = vmatprep.subr.mxu0 0.0
    %v6078 = vand.u32 %v53, 4294901760
    %6079 = vmatpush1.msra.mxu0 %v6078
    %6080 = vmatprep.subr.mxu0 0.0
    %v6081 = vand.u32 %v54, 4294901760
    %6082 = vmatpush1.msra.mxu0 %v6081
    %6083 = vmatprep.subr.mxu0 0.0
    %v6084 = vand.u32 %v55, 4294901760
    %6085 = vmatpush1.msra.mxu0 %v6084
    %6086 = vmatprep.subr.mxu0 0.0
    %v6087 = vand.u32 %v56, 4294901760
    %6088 = vmatpush1.msra.mxu0 %v6087
    %6089 = vmatprep.subr.mxu0 0.0
    %v6090 = vand.u32 %v57, 4294901760
    %6091 = vmatpush1.msra.mxu0 %v6090
    %6092 = vmatprep.subr.mxu0 0.0
    %v6093 = vand.u32 %v58, 4294901760
    %6094 = vmatpush1.msra.mxu0 %v6093
    %6095 = vmatprep.subr.mxu0 0.0
    %v6096 = vand.u32 %v59, 4294901760
    %6097 = vmatpush1.msra.mxu0 %v6096
    %6098 = vmatprep.subr.mxu0 0.0
    %v6099 = vand.u32 %v60, 4294901760
    %6100 = vmatpush1.msra.mxu0 %v6099
    %6101 = vmatprep.subr.mxu0 0.0
    %v6102 = vand.u32 %v61, 4294901760
    %6103 = vmatpush1.msra.mxu0 %v6102
    %6104 = vmatprep.subr.mxu0 0.0
    %v6105 = vand.u32 %v62, 4294901760
    %6106 = vmatpush1.msra.mxu0 %v6105
    %6107 = vmatprep.subr.mxu0 0.0
    %v6108 = vand.u32 %v63, 4294901760
    %6109 = vmatpush1.msra.mxu0 %v6108
    %6110 = vmatprep.subr.mxu0 0.0
    %v6111 = vand.u32 %v64, 4294901760
    %6112 = vmatpush1.msra.mxu0 %v6111
    %6113 = vmatprep.subr.mxu0 0.0
    %v6114 = vand.u32 %v65, 4294901760
    %6115 = vmatpush1.msra.mxu0 %v6114
    %6116 = vmatprep.subr.mxu0 0.0
    %v6117 = vand.u32 %v66, 4294901760
    %6118 = vmatpush1.msra.mxu0 %v6117
    %6119 = vmatprep.subr.mxu0 0.0
    %v6120 = vand.u32 %v67, 4294901760
    %6121 = vmatpush1.msra.mxu0 %v6120
    %6122 = vmatprep.subr.mxu0 0.0
    %6123 = vmatpush1.msra.mxu0 0.0
    %6124 = vmatprep.subr.mxu0 0.0
    %6125 = vmatpush1.msra.mxu0 0.0
    %6126 = vmatprep.subr.mxu0 0.0
    %6127 = vmatpush1.msra.mxu0 0.0
    %6128 = vmatprep.subr.mxu0 0.0
    %6129 = vmatpush1.msra.mxu0 0.0
    %6130 = vmatprep.subr.mxu0 0.0
    %6131 = vmatpush1.msra.mxu0 0.0
    %6132 = vmatprep.subr.mxu0 0.0
    %6133 = vmatpush1.msra.mxu0 0.0
    %6134 = vmatprep.subr.mxu0 0.0
    %6135 = vmatpush1.msra.mxu0 0.0
    %6136 = vmatprep.subr.mxu0 0.0
    %6137 = vmatpush1.msra.mxu0 0.0
    %6138 = vmatprep.subr.mxu0 0.0
    %6139 = vmatpush1.msra.mxu0 0.0
    %6140 = vmatprep.subr.mxu0 0.0
    %6141 = vmatpush1.msra.mxu0 0.0
    %6142 = vmatprep.subr.mxu0 0.0
    %6143 = vmatpush1.msra.mxu0 0.0
    %6144 = vmatprep.subr.mxu0 0.0
    %6145 = vmatpush1.msra.mxu0 0.0
    %6146 = vmatprep.subr.mxu0 0.0
    %6147 = vmatpush1.msra.mxu0 0.0
    %6148 = vmatprep.subr.mxu0 0.0
    %6149 = vmatpush1.msra.mxu0 0.0
    %6150 = vmatprep.subr.mxu0 0.0
    %6151 = vmatpush1.msra.mxu0 0.0
    %6152 = vmatprep.subr.mxu0 0.0
    %6153 = vmatpush1.msra.mxu0 0.0
    %6154 = vmatprep.mubr.f32.mxu0 0.0
    %v6155 = vand.u32 %v5726, 4294901760
    %v6156 = vsub.f32 %v5726, %v6155
    %v6157 = vand.u32 %v6156, 4294901760
    %6158 = vmatmul.mubr.f32.gmra.mrb[0].mxu0 %v6157
    %v6159 = vpop.f32.mrb[0].mxu0
    %v6160 = vadd.f32 %v6071, %v6159
    %v6161 = vpop.f32.mrb[0].mxu0
    %6162 = vdwg.mxu0
    %6163 = vmatprep.subr.mxu0 0.0
    %v6164 = vand.u32 %v52, 4294901760
    %v6165 = vsub.f32 %v52, %v6164
    %v6166 = vand.u32 %v6165, 4294901760
    %6167 = vmatpush1.msra.mxu0 %v6166
    %6168 = vmatprep.subr.mxu0 0.0
    %v6169 = vand.u32 %v53, 4294901760
    %v6170 = vsub.f32 %v53, %v6169
    %v6171 = vand.u32 %v6170, 4294901760
    %6172 = vmatpush1.msra.mxu0 %v6171
    %6173 = vmatprep.subr.mxu0 0.0
    %v6174 = vand.u32 %v54, 4294901760
    %v6175 = vsub.f32 %v54, %v6174
    %v6176 = vand.u32 %v6175, 4294901760
    %6177 = vmatpush1.msra.mxu0 %v6176
    %6178 = vmatprep.subr.mxu0 0.0
    %v6179 = vand.u32 %v55, 4294901760
    %v6180 = vsub.f32 %v55, %v6179
    %v6181 = vand.u32 %v6180, 4294901760
    %6182 = vmatpush1.msra.mxu0 %v6181
    %6183 = vmatprep.subr.mxu0 0.0
    %v6184 = vand.u32 %v56, 4294901760
    %v6185 = vsub.f32 %v56, %v6184
    %v6186 = vand.u32 %v6185, 4294901760
    %6187 = vmatpush1.msra.mxu0 %v6186
    %6188 = vmatprep.subr.mxu0 0.0
    %v6189 = vand.u32 %v57, 4294901760
    %v6190 = vsub.f32 %v57, %v6189
    %v6191 = vand.u32 %v6190, 4294901760
    %6192 = vmatpush1.msra.mxu0 %v6191
    %6193 = vmatprep.subr.mxu0 0.0
    %v6194 = vand.u32 %v58, 4294901760
    %v6195 = vsub.f32 %v58, %v6194
    %v6196 = vand.u32 %v6195, 4294901760
    %6197 = vmatpush1.msra.mxu0 %v6196
    %6198 = vmatprep.subr.mxu0 0.0
    %v6199 = vand.u32 %v59, 4294901760
    %v6200 = vsub.f32 %v59, %v6199
    %v6201 = vand.u32 %v6200, 4294901760
    %6202 = vmatpush1.msra.mxu0 %v6201
    %6203 = vmatprep.subr.mxu0 0.0
    %v6204 = vand.u32 %v60, 4294901760
    %v6205 = vsub.f32 %v60, %v6204
    %v6206 = vand.u32 %v6205, 4294901760
    %6207 = vmatpush1.msra.mxu0 %v6206
    %6208 = vmatprep.subr.mxu0 0.0
    %v6209 = vand.u32 %v61, 4294901760
    %v6210 = vsub.f32 %v61, %v6209
    %v6211 = vand.u32 %v6210, 4294901760
    %6212 = vmatpush1.msra.mxu0 %v6211
    %6213 = vmatprep.subr.mxu0 0.0
    %v6214 = vand.u32 %v62, 4294901760
    %v6215 = vsub.f32 %v62, %v6214
    %v6216 = vand.u32 %v6215, 4294901760
    %6217 = vmatpush1.msra.mxu0 %v6216
    %6218 = vmatprep.subr.mxu0 0.0
    %v6219 = vand.u32 %v63, 4294901760
    %v6220 = vsub.f32 %v63, %v6219
    %v6221 = vand.u32 %v6220, 4294901760
    %6222 = vmatpush1.msra.mxu0 %v6221
    %6223 = vmatprep.subr.mxu0 0.0
    %v6224 = vand.u32 %v64, 4294901760
    %v6225 = vsub.f32 %v64, %v6224
    %v6226 = vand.u32 %v6225, 4294901760
    %6227 = vmatpush1.msra.mxu0 %v6226
    %6228 = vmatprep.subr.mxu0 0.0
    %v6229 = vand.u32 %v65, 4294901760
    %v6230 = vsub.f32 %v65, %v6229
    %v6231 = vand.u32 %v6230, 4294901760
    %6232 = vmatpush1.msra.mxu0 %v6231
    %6233 = vmatprep.subr.mxu0 0.0
    %v6234 = vand.u32 %v66, 4294901760
    %v6235 = vsub.f32 %v66, %v6234
    %v6236 = vand.u32 %v6235, 4294901760
    %6237 = vmatpush1.msra.mxu0 %v6236
    %6238 = vmatprep.subr.mxu0 0.0
    %v6239 = vand.u32 %v67, 4294901760
    %v6240 = vsub.f32 %v67, %v6239
    %v6241 = vand.u32 %v6240, 4294901760
    %6242 = vmatpush1.msra.mxu0 %v6241
    %6243 = vmatprep.subr.mxu0 0.0
    %6244 = vmatpush1.msra.mxu0 0.0
    %6245 = vmatprep.subr.mxu0 0.0
    %6246 = vmatpush1.msra.mxu0 0.0
    %6247 = vmatprep.subr.mxu0 0.0
    %6248 = vmatpush1.msra.mxu0 0.0
    %6249 = vmatprep.subr.mxu0 0.0
    %6250 = vmatpush1.msra.mxu0 0.0
    %6251 = vmatprep.subr.mxu0 0.0
    %6252 = vmatpush1.msra.mxu0 0.0
    %6253 = vmatprep.subr.mxu0 0.0
    %6254 = vmatpush1.msra.mxu0 0.0
    %6255 = vmatprep.subr.mxu0 0.0
    %6256 = vmatpush1.msra.mxu0 0.0
    %6257 = vmatprep.subr.mxu0 0.0
    %6258 = vmatpush1.msra.mxu0 0.0
    %6259 = vmatprep.subr.mxu0 0.0
    %6260 = vmatpush1.msra.mxu0 0.0
    %6261 = vmatprep.subr.mxu0 0.0
    %6262 = vmatpush1.msra.mxu0 0.0
    %6263 = vmatprep.subr.mxu0 0.0
    %6264 = vmatpush1.msra.mxu0 0.0
    %6265 = vmatprep.subr.mxu0 0.0
    %6266 = vmatpush1.msra.mxu0 0.0
    %6267 = vmatprep.subr.mxu0 0.0
    %6268 = vmatpush1.msra.mxu0 0.0
    %6269 = vmatprep.subr.mxu0 0.0
    %6270 = vmatpush1.msra.mxu0 0.0
    %6271 = vmatprep.subr.mxu0 0.0
    %6272 = vmatpush1.msra.mxu0 0.0
    %6273 = vmatprep.subr.mxu0 0.0
    %6274 = vmatpush1.msra.mxu0 0.0
    %6275 = vmatprep.mubr.f32.mxu0 0.0
    %v6276 = vand.u32 %v5726, 4294901760
    %6277 = vmatmul.mubr.f32.gmra.mrb[0].mxu0 %v6276
    %v6278 = vpop.f32.mrb[0].mxu0
    %v6279 = vadd.f32 %v6160, %v6278
    %v6280 = vpop.f32.mrb[0].mxu0
    %6281 = vdwg.mxu0
    %6282 = vmatprep.subr.mxu0 0.0
    %v6283 = vand.u32 %v52, 4294901760
    %6284 = vmatpush1.msra.mxu0 %v6283
    %6285 = vmatprep.subr.mxu0 0.0
    %v6286 = vand.u32 %v53, 4294901760
    %6287 = vmatpush1.msra.mxu0 %v6286
    %6288 = vmatprep.subr.mxu0 0.0
    %v6289 = vand.u32 %v54, 4294901760
    %6290 = vmatpush1.msra.mxu0 %v6289
    %6291 = vmatprep.subr.mxu0 0.0
    %v6292 = vand.u32 %v55, 4294901760
    %6293 = vmatpush1.msra.mxu0 %v6292
    %6294 = vmatprep.subr.mxu0 0.0
    %v6295 = vand.u32 %v56, 4294901760
    %6296 = vmatpush1.msra.mxu0 %v6295
    %6297 = vmatprep.subr.mxu0 0.0
    %v6298 = vand.u32 %v57, 4294901760
    %6299 = vmatpush1.msra.mxu0 %v6298
    %6300 = vmatprep.subr.mxu0 0.0
    %v6301 = vand.u32 %v58, 4294901760
    %6302 = vmatpush1.msra.mxu0 %v6301
    %6303 = vmatprep.subr.mxu0 0.0
    %v6304 = vand.u32 %v59, 4294901760
    %6305 = vmatpush1.msra.mxu0 %v6304
    %6306 = vmatprep.subr.mxu0 0.0
    %v6307 = vand.u32 %v60, 4294901760
    %6308 = vmatpush1.msra.mxu0 %v6307
    %6309 = vmatprep.subr.mxu0 0.0
    %v6310 = vand.u32 %v61, 4294901760
    %6311 = vmatpush1.msra.mxu0 %v6310
    %6312 = vmatprep.subr.mxu0 0.0
    %v6313 = vand.u32 %v62, 4294901760
    %6314 = vmatpush1.msra.mxu0 %v6313
    %6315 = vmatprep.subr.mxu0 0.0
    %v6316 = vand.u32 %v63, 4294901760
    %6317 = vmatpush1.msra.mxu0 %v6316
    %6318 = vmatprep.subr.mxu0 0.0
    %v6319 = vand.u32 %v64, 4294901760
    %6320 = vmatpush1.msra.mxu0 %v6319
    %6321 = vmatprep.subr.mxu0 0.0
    %v6322 = vand.u32 %v65, 4294901760
    %6323 = vmatpush1.msra.mxu0 %v6322
    %6324 = vmatprep.subr.mxu0 0.0
    %v6325 = vand.u32 %v66, 4294901760
    %6326 = vmatpush1.msra.mxu0 %v6325
    %6327 = vmatprep.subr.mxu0 0.0
    %v6328 = vand.u32 %v67, 4294901760
    %6329 = vmatpush1.msra.mxu0 %v6328
    %6330 = vmatprep.subr.mxu0 0.0
    %6331 = vmatpush1.msra.mxu0 0.0
    %6332 = vmatprep.subr.mxu0 0.0
    %6333 = vmatpush1.msra.mxu0 0.0
    %6334 = vmatprep.subr.mxu0 0.0
    %6335 = vmatpush1.msra.mxu0 0.0
    %6336 = vmatprep.subr.mxu0 0.0
    %6337 = vmatpush1.msra.mxu0 0.0
    %6338 = vmatprep.subr.mxu0 0.0
    %6339 = vmatpush1.msra.mxu0 0.0
    %6340 = vmatprep.subr.mxu0 0.0
    %6341 = vmatpush1.msra.mxu0 0.0
    %6342 = vmatprep.subr.mxu0 0.0
    %6343 = vmatpush1.msra.mxu0 0.0
    %6344 = vmatprep.subr.mxu0 0.0
    %6345 = vmatpush1.msra.mxu0 0.0
    %6346 = vmatprep.subr.mxu0 0.0
    %6347 = vmatpush1.msra.mxu0 0.0
    %6348 = vmatprep.subr.mxu0 0.0
    %6349 = vmatpush1.msra.mxu0 0.0
    %6350 = vmatprep.subr.mxu0 0.0
    %6351 = vmatpush1.msra.mxu0 0.0
    %6352 = vmatprep.subr.mxu0 0.0
    %6353 = vmatpush1.msra.mxu0 0.0
    %6354 = vmatprep.subr.mxu0 0.0
    %6355 = vmatpush1.msra.mxu0 0.0
    %6356 = vmatprep.subr.mxu0 0.0
    %6357 = vmatpush1.msra.mxu0 0.0
    %6358 = vmatprep.subr.mxu0 0.0
    %6359 = vmatpush1.msra.mxu0 0.0
    %6360 = vmatprep.subr.mxu0 0.0
    %6361 = vmatpush1.msra.mxu0 0.0
    %6362 = vmatprep.mubr.f32.mxu0 0.0
    %v6363 = vand.u32 %v5726, 4294901760
    %6364 = vmatmul.mubr.f32.gmra.mrb[0].mxu0 %v6363
    %v6365 = vpop.f32.mrb[0].mxu0
    %v6366 = vadd.f32 %v6279, %v6365
    %v6367 = vpop.f32.mrb[0].mxu0
    %6368 = vdwg.mxu0
    %v6369 = vmul.f32 %v86, %v6366
    %v6370 = vmul.f32 %v6369, 0.1
    %v6371 = vadd.f32 %v5727, %v6370
    %6373 = vrot.lane.b32.xlu0 %v6371, 96
    %v6374 = vpop.permute.xlu0 %6373
    %v6376 = vadd.f32 %v6371, %v6374
    %6377 = vrot.lane.b32.xlu0 %v6371, 64
    %v6378 = vpop.permute.xlu0 %6377
    %v6380 = vadd.f32 %v6376, %v6378
    %v6381 = vadd.f32 %v46, %v6380
    %6382 = vst.msk [vmem:[#allocation7] sm:$0xff] %vm81, %v6381
    // Predicated region
    $region26: #{tpu_custom_call.1} parent=1 // pred_check
      _
    $region27: #{tpu_custom_call.1} parent=1 // pred_check_branch
      %6384 = sbr.rel (0) target = $region29
    $region28: #{tpu_custom_call.1} parent=1 // pred_region
      %s6386 = ssub.s32 128, 128
      %6387 = vsyncadd [#allocation4], %s6386
      %s6389 = sshll.u32 [#allocation7], 4
      %s6390 = int_to_ptr.vmem [resolvable:$true] %s6389
      %6392 = dma.vmem_to_hbm [thread:$0]  %s6390, 128, %s4, [#allocation4]
    $region29: #{tpu_custom_call.1} parent=1 // pred_fallthru
      _
    // Predicated region
    $region30: #{tpu_custom_call.1} parent=1 // pred_check
      _
    $region31: #{tpu_custom_call.1} parent=1 // pred_check_branch
      %6394 = sbr.rel (0) target = $region33
    $region32: #{tpu_custom_call.1} parent=1 // pred_region
      %6395 = dma.done [#allocation4], 128
    $region33: #{tpu_custom_call.1} parent=1 // pred_fallthru
      _
    %6396 = vsyncpa [#allocation3], 1
    %6397 = vsyncpa [#allocation6], 1
    %6398 = vsyncpa [#allocation4], 1

</llo_original>
